<compile_context>
chip_gen: v7x
topology: tpu7x:2x2x1
jax: 0.10.0
libtpu: 0.0.40
codegen_flags: <defaults>
</compile_context>

<pallas_src>
import functools

import jax
import jax.numpy as jnp
from jax.experimental import pallas as pl
from jax.experimental.pallas import tpu as pltpu


def _vq_kernel(x_ref, e_ref, e2_ref, q_ref, idx_ref, sse_ref, *,
               n_valid, tile_n, needs_mask):
    x = x_ref[...]                                    # (TN, D)  native dtype
    e = e_ref[...]                                    # (Kp, D)  native dtype
    kp = e.shape[0]

    e2 = e2_ref[...]                                  # (1, Kp) f32, +inf on pad rows

    # argmin distance proxy: ||E||^2 - 2 x.E  (||x||^2 dropped: per-row constant)
    # dot_general contracts on D directly -> no (Kp,D)->(D,Kp) transpose.
    xe = jax.lax.dot_general(x, e, (((1,), (1,)), ((), ())),
                             preferred_element_type=jnp.float32)   # (TN, Kp)
    d = e2 - 2.0 * xe                                               # (TN, Kp) f32

    # argmin over codebook axis with lowest-index tie-break (matches torch)
    dmin = jnp.min(d, axis=-1, keepdims=True)                       # (TN, 1)
    kiota = jax.lax.broadcasted_iota(jnp.int32, d.shape, 1)         # (TN, Kp)
    idx = jnp.min(jnp.where(d == dmin, kiota, jnp.int32(kp)), axis=-1)   # (TN,)
    # TODO(synk): an all-NaN distance row yields the sentinel index kp and q == 0;
    # torch.argmin propagates NaN differently.
    idx_ref[...] = idx[None, :].astype(jnp.int32)                   # lane-dense (1, TN)

    # codebook lookup: one-hot @ E instead of a gather (0/1 is exact in any dtype)
    onehot = (kiota == idx[:, None]).astype(e.dtype)                # (TN, Kp)
    q = jnp.dot(onehot, e, preferred_element_type=jnp.float32)      # (TN, D) f32 (MXU)
    q_ref[...] = q.astype(q_ref.dtype)
    # TODO(synk): for very small D and small K, the (TN, D) q stores use only
    # D/128 lanes; a wrapper-side packed (N*D/128, 128) layout would cut vst
    # count if the store slot ever binds.

    # exact commitment-loss partial: sum over this tile of (q - x)^2, with
    # padded (out-of-range) rows masked out. Wrapper divides by n*D.
    diff = q - x.astype(jnp.float32)
    err = diff * diff                                               # (TN, D)
    if needs_mask:
        row = (pl.program_id(0) * tile_n
               + jax.lax.broadcasted_iota(jnp.int32, (tile_n, 1), 0))
        err = jnp.where(row < n_valid, err, 0.0)
    sse_ref[...] = jnp.sum(err, keepdims=True)                      # (1, 1)


def _round_up(a, b):
    return ((a + b - 1) // b) * b


def _vmem_capacity_bytes():
    try:
        info = pltpu.get_tpu_info()
        cap = getattr(info, "vmem_capacity_bytes", None)
        if cap:
            return int(cap)
    except Exception:
        pass
    return 64 << 20   # conservative default (v7x per-TC physical VMEM)


def vector_quantize_pallas(x, codebook, *, commitment_weight=1.0):
    """Returns (quantized, embed_index, l_vq)."""
    n, d = x.shape
    k, d2 = codebook.shape
    assert d == d2, "codebook dim mismatch"

    # ---- pad the codebook along K to a multiple of 128 (full lane utilization).
    # Padded rows are zeros with ||E||^2 = +inf so they can never win the argmin.
    kp = max(128, _round_up(k, 128))
    e2 = jnp.sum(codebook.astype(jnp.float32) ** 2, axis=-1)            # (K,)
    if kp != k:
        codebook_p = jnp.concatenate(
            [codebook, jnp.zeros((kp - k, d), codebook.dtype)], axis=0)
        e2 = jnp.concatenate(
            [e2, jnp.full((kp - k,), jnp.inf, dtype=jnp.float32)], axis=0)
    else:
        codebook_p = codebook
    e2 = e2[None, :]                                                     # (1, Kp) f32

    # ---- generation-aware VMEM budget and row-tile size.
    # ~6 live (tile_n, Kp) f32 intermediates (xe, d, iota, where, onehot, mask)
    # must fit well inside the scoped VMEM limit we request.
    vmem_cap = _vmem_capacity_bytes()
    vmem_limit = min(int(vmem_cap * 0.625), 96 << 20)   # ~40 MiB v7x, ~80 MiB v5e/v6e
    inter_budget = int(vmem_limit * 0.6)                # headroom for blocks + scratch
    tile_n = inter_budget // (6 * kp * 4)
    tile_n = max(8, min(tile_n, 8192, _round_up(n, 8)))
    tile_n = (tile_n // 8) * 8
    # TODO(synk): for huge codebooks (tile_n pinned at 8) add an inner "arbitrary"
    # grid axis over K with a running (min, argmin) carried in VMEM scratch.

    # ---- ragged N: pad rows; padded rows are masked out of the loss in-kernel
    # and sliced off the q / idx outputs below.
    n_pad = _round_up(n, tile_n)
    if n_pad != n:
        x_p = jnp.concatenate([x, jnp.zeros((n_pad - n, d), x.dtype)], axis=0)
    else:
        x_p = x
    num_tiles = n_pad // tile_n

    kernel = functools.partial(_vq_kernel, n_valid=n, tile_n=tile_n,
                               needs_mask=(n_pad != n))

    q, idx, sse = pl.pallas_call(
        kernel,
        out_shape=(
            jax.ShapeDtypeStruct((n_pad, d), x.dtype),                  # quantized
            jax.ShapeDtypeStruct((num_tiles, tile_n), jnp.int32),       # indices
            jax.ShapeDtypeStruct((num_tiles, 1), jnp.float32),          # per-tile SSE
        ),
        grid_spec=pltpu.PrefetchScalarGridSpec(
            num_scalar_prefetch=0,
            grid=(num_tiles,),
            in_specs=[
                pl.BlockSpec((tile_n, d), lambda i: (i, 0)),   # x tile
                pl.BlockSpec((kp, d), lambda i: (0, 0)),       # padded codebook
                pl.BlockSpec((1, kp), lambda i: (0, 0)),       # precomputed ||E||^2
            ],
            out_specs=(
                pl.BlockSpec((tile_n, d), lambda i: (i, 0)),   # quantized
                pl.BlockSpec((1, tile_n), lambda i: (i, 0)),   # indices (lane-dense)
                pl.BlockSpec((1, 1), lambda i: (i, 0)),        # SSE partial
            ),
        ),
        # No resident accumulator -> the grid axis is independent: lets the
        # runtime shard tiles across both v7x TensorCores.
        compiler_params=pltpu.CompilerParams(
            dimension_semantics=("parallel",),
            vmem_limit_bytes=vmem_limit,
        ),
    )(x_p, codebook_p, e2)

    q = q[:n]
    idx = idx.reshape(-1)[:n]

    # F.mse_loss(quantize.detach(), x) * commitment_weight ; torch.sum over the
    # (1,)-shaped per-batch loss is a no-op.
    l_vq = (jnp.sum(sse) / jnp.float32(n * d)) * commitment_weight
    return q, idx, l_vq


class VectorQuantizerPallas:
    """Eval-mode forward of the PyTorch VectorQuantizer (num_quantizers=1, 'vector')."""

    def __init__(self, codebook, commitment_weight=1.0):
        self.codebook = codebook                      # (codebook_size, codebook_dim)
        self.commitment_weight = commitment_weight

    def __call__(self, x):
        q, embed_index, l_vq = vector_quantize_pallas(
            x, self.codebook, commitment_weight=self.commitment_weight)
        bits = self.size(embed_index)
        return q, l_vq, bits

    def size(self, embed_index):
        k, d = self.codebook.shape
        codebook_bits = k * d * jnp.finfo(self.codebook.dtype).bits
        # TODO(synk): the PyTorch module entropy-codes `embed_index` with a
        # constriction ANS coder (CPU codec) to get index_bits; there is no
        # Pallas/JAX equivalent, so only codebook_bits is reported.
        index_bits = 0
        return codebook_bits + index_bits


if __name__ == "__main__":
    key = jax.random.PRNGKey(0)
    kx, ke = jax.random.split(key)

    num_points, codebook_dim, codebook_size = 256, 4, 64
    x = jax.random.normal(kx, (num_points, codebook_dim), dtype=jnp.float32)
    # Deterministic codebook init (stands in for the module's kmeans_init).
    codebook = jax.random.normal(ke, (codebook_size, codebook_dim), dtype=jnp.float32)

    vq = VectorQuantizerPallas(codebook)
    xq, l_vq, bits = vq(x)
    jax.block_until_ready((xq, l_vq))

    # Plain-JAX reference check of the quantization + loss.
    dist_ref = (jnp.sum(x * x, -1, keepdims=True)
                - 2.0 * x @ codebook.T
                + jnp.sum(codebook * codebook, -1)[None, :])
    idx_ref = jnp.argmin(dist_ref, axis=-1)
    q_ref = codebook[idx_ref]
    l_ref = jnp.mean((q_ref - x) ** 2)

    q_k, kernel_idx, l_k = vector_quantize_pallas(x, codebook)
    jax.block_until_ready((q_k, kernel_idx, l_k))

    assert xq.shape == x.shape and kernel_idx.shape == (num_points,)
    assert jnp.allclose(xq, q_ref, atol=1e-5), "quantized mismatch"
    assert jnp.allclose(l_vq, l_ref, atol=1e-5), "loss mismatch"
    assert jnp.all(kernel_idx == idx_ref), "index mismatch"
    assert jnp.allclose(xq, codebook[kernel_idx], atol=1e-6), "idx/q inconsistency"

    print("KERNEL_OK")
</pallas_src>

<mosaic_0001>
module attributes {stable_mosaic.version = 11 : i64} {
  func.func @_vq_kernel(%arg0: i32, %arg1: memref<256x4xf32, #tpu.memory_space<vmem>>, %arg2: memref<128x4xf32, #tpu.memory_space<vmem>>, %arg3: memref<1x128xf32, #tpu.memory_space<vmem>>, %arg4: memref<256x4xf32, #tpu.memory_space<vmem>>, %arg5: memref<1x256xi32, #tpu.memory_space<vmem>>, %arg6: memref<1x1xf32, #tpu.memory_space<vmem>>) attributes {dimension_semantics = [#tpu.dimension_semantics<parallel>], iteration_bounds = array<i64: 1>, scalar_prefetch = 0 : i64, scratch_operands = 0 : i64, tpu.core_type = #tpu.core_type<tc>, window_params = [{transform_indices = @transform_0, window_bounds = array<i64: 256, 4>}, {pipeline_mode = #tpu.pipeline_mode<synchronous>, transform_indices = @transform_1, window_bounds = array<i64: 128, 4>}, {pipeline_mode = #tpu.pipeline_mode<synchronous>, transform_indices = @transform_2, window_bounds = array<i64: 1, 128>}, {transform_indices = @transform_3, window_bounds = array<i64: 256, 4>}, {transform_indices = @transform_4, window_bounds = array<i64: 1, 256>}, {transform_indices = @transform_5, window_bounds = array<i64: 1, 1>}]} {
    %c0 = arith.constant 0 : index
    %c0_0 = arith.constant 0 : index
    %0 = vector.load %arg1[%c0, %c0_0] : memref<256x4xf32, #tpu.memory_space<vmem>>, vector<256x4xf32>
    %c0_1 = arith.constant 0 : index
    %c0_2 = arith.constant 0 : index
    %1 = vector.load %arg2[%c0_1, %c0_2] : memref<128x4xf32, #tpu.memory_space<vmem>>, vector<128x4xf32>
    %c0_3 = arith.constant 0 : index
    %c0_4 = arith.constant 0 : index
    %2 = vector.load %arg3[%c0_3, %c0_4] : memref<1x128xf32, #tpu.memory_space<vmem>>, vector<1x128xf32>
    %cst = arith.constant dense<0.000000e+00> : vector<256x128xf32>
    %3 = tpu.matmul %0, %1, %cst {dimension_numbers = #tpu.dot_dimension_numbers<[1], [1], [0], [0], [0, 0, 1, 0], [], []>} : vector<256x4xf32>, vector<128x4xf32>, vector<256x128xf32> -> vector<256x128xf32>
    %cst_5 = arith.constant 2.000000e+00 : f32
    %4 = vector.broadcast %cst_5 : f32 to vector<256x128xf32>
    %5 = arith.mulf %4, %3 : vector<256x128xf32>
    %6 = vector.broadcast %2 : vector<1x128xf32> to vector<256x128xf32>
    %7 = arith.subf %6, %5 : vector<256x128xf32>
    %cst_6 = arith.constant dense<0x7F800000> : vector<256xf32>
    %8 = vector.multi_reduction <minimumf>, %7, %cst_6 [1] : vector<256x128xf32> to vector<256xf32>
    %9 = vector.shape_cast %8 : vector<256xf32> to vector<256x1xf32>
    %10 = tpu.iota {dimensions = array<i32: 1>} : vector<256x128xi32>
    %11 = vector.broadcast %9 : vector<256x1xf32> to vector<256x128xf32>
    %12 = arith.cmpf oeq, %7, %11 : vector<256x128xf32>
    %c128_i32 = arith.constant 128 : i32
    %13 = vector.broadcast %c128_i32 : i32 to vector<256x128xi32>
    %14 = arith.select %12, %10, %13 : vector<256x128xi1>, vector<256x128xi32>
    %cst_7 = arith.constant dense<2147483647> : vector<256xi32>
    %15 = vector.multi_reduction <minsi>, %14, %cst_7 [1] : vector<256x128xi32> to vector<256xi32>
    %16 = vector.shape_cast %15 : vector<256xi32> to vector<1x256xi32>
    %c0_8 = arith.constant 0 : index
    %c0_9 = arith.constant 0 : index
    %17 = vector.load %arg5[%c0_8, %c0_9] : memref<1x256xi32, #tpu.memory_space<vmem>>, vector<1x256xi32>
    tpu.vector_store %arg5[%c0_8, %c0_9], %16 {strides = array<i32>} : memref<1x256xi32, #tpu.memory_space<vmem>>, vector<1x256xi32>,
    %18 = vector.shape_cast %15 : vector<256xi32> to vector<256x1xi32>
    %19 = vector.broadcast %18 : vector<256x1xi32> to vector<256x128xi32>
    %20 = arith.cmpi eq, %10, %19 : vector<256x128xi32>
    %21 = arith.extui %20 : vector<256x128xi1> to vector<256x128xi32>
    %22 = arith.sitofp %21 : vector<256x128xi32> to vector<256x128xf32>
    %cst_10 = arith.constant dense<0.000000e+00> : vector<256x4xf32>
    %23 = tpu.matmul %22, %1, %cst_10 {dimension_numbers = #tpu.dot_dimension_numbers<[1], [0], [0], [1], [0, 0, 1, 1], [], []>} : vector<256x128xf32>, vector<128x4xf32>, vector<256x4xf32> -> vector<256x4xf32>
    %c0_11 = arith.constant 0 : index
    %c0_12 = arith.constant 0 : index
    %24 = vector.load %arg4[%c0_11, %c0_12] : memref<256x4xf32, #tpu.memory_space<vmem>>, vector<256x4xf32>
    tpu.vector_store %arg4[%c0_11, %c0_12], %23 {strides = array<i32>} : memref<256x4xf32, #tpu.memory_space<vmem>>, vector<256x4xf32>,
    %25 = arith.subf %23, %0 : vector<256x4xf32>
    %26 = arith.mulf %25, %25 : vector<256x4xf32>
    %27 = vector.shape_cast %26 : vector<256x4xf32> to vector<1x256x4xf32>
    %cst_13 = arith.constant dense<0.000000e+00> : vector<1xf32>
    %28 = vector.multi_reduction <add>, %27, %cst_13 [1, 2] : vector<1x256x4xf32> to vector<1xf32>
    %29 = vector.shape_cast %28 : vector<1xf32> to vector<1x1x1xf32>
    %30 = vector.extract %29[0, 0, 0] : f32 from vector<1x1x1xf32>
    %31 = vector.broadcast %30 : f32 to vector<1x1xf32>
    %c0_14 = arith.constant 0 : index
    %c0_15 = arith.constant 0 : index
    %32 = vector.load %arg6[%c0_14, %c0_15] : memref<1x1xf32, #tpu.memory_space<vmem>>, vector<1x1xf32>
    tpu.vector_store %arg6[%c0_14, %c0_15], %31 {strides = array<i32>} : memref<1x1xf32, #tpu.memory_space<vmem>>, vector<1x1xf32>,
    return
  }
  func.func @transform_0(%arg0: i32) -> (i32, i32) {
    %c0_i32 = arith.constant 0 : i32
    %c0_i32_0 = arith.constant 0 : i32
    return %arg0, %c0_i32 : i32, i32
  }
  func.func @transform_1(%arg0: i32) -> (i32, i32) {
    %c0_i32 = arith.constant 0 : i32
    %c0_i32_0 = arith.constant 0 : i32
    %c0_i32_1 = arith.constant 0 : i32
    return %c0_i32, %c0_i32_0 : i32, i32
  }
  func.func @transform_2(%arg0: i32) -> (i32, i32) {
    %c0_i32 = arith.constant 0 : i32
    %c0_i32_0 = arith.constant 0 : i32
    %c0_i32_1 = arith.constant 0 : i32
    return %c0_i32, %c0_i32_0 : i32, i32
  }
  func.func @transform_3(%arg0: i32) -> (i32, i32) {
    %c0_i32 = arith.constant 0 : i32
    %c0_i32_0 = arith.constant 0 : i32
    return %arg0, %c0_i32 : i32, i32
  }
  func.func @transform_4(%arg0: i32) -> (i32, i32) {
    %c0_i32 = arith.constant 0 : i32
    %c0_i32_0 = arith.constant 0 : i32
    return %arg0, %c0_i32 : i32, i32
  }
  func.func @transform_5(%arg0: i32) -> (i32, i32) {
    %c0_i32 = arith.constant 0 : i32
    %c0_i32_0 = arith.constant 0 : i32
    return %arg0, %c0_i32 : i32, i32
  }
}

</mosaic_0001>

<llo_original>
// kernel: tpu_custom_call.1
$region0: #{tpu_custom_call.1}
  #allocation0 [shape = 'u32[]', space=smem, size = 0x4, offset = 0x4, fixed_abs, tag = 'smem constant byte address 0x4 - core index']
  #allocation1 [shape = 'u32[144,128]{1,0:T(1,128)}', space=vmem, size = 0x12000, scoped, tag = 'internal scratch']
  %s0 = inlined_call_operand.vmem [shape: f32[256,4], index: 0, kind: input, shape index: {}]
  %s1 = inlined_call_operand.vmem [shape: f32[128,4], index: 1, kind: input, shape index: {}]
  %s2 = inlined_call_operand.vmem [shape: f32[1,128], index: 2, kind: input, shape index: {}]
  %s3 = inlined_call_operand.vmem [shape: f32[256,4], index: 3, kind: output, shape index: {0}]
  %s4 = inlined_call_operand.hbm [shape: s32[1,256], index: 4, kind: output, shape index: {1}]
  %s5 = inlined_call_operand.hbm [shape: f32[1,1], index: 5, kind: output, shape index: {2}]
  %6 = xla_tuple %s3, %s4, %s5
  %s7 = sld [smem:[#allocation0]]
  $region38: #{tpu_custom_call.1} parent=0
    _
  %s9 = ssub.s32 1, %s7
  %s10 = scalar_select 0, %s9, %s7
  $region1: #{tpu_custom_call.1} parent=0
    #allocation2 [shape = 'u8[1024]{0}', space=vmem, size = 0x400, scoped, tag = 'output window, operand 1, single buffered']
    #allocation3 [shape = 's32[1]{0}', space=sflag, size = 0x4, scoped, tag = 'scoped memory for tpu_custom_call.1']
    #allocation4 [shape = 'u8[512]{0}', space=vmem, size = 0x400, scoped, tag = 'output window, operand 2, single buffered']
    #allocation5 [shape = 's32[1]{0}', space=sflag, size = 0x4, scoped, tag = 'scoped memory for tpu_custom_call.1']
    %11 = vsyncpa [#allocation3], 0
    %12 = vsyncpa [#allocation5], 0
    // Predicated region
    $region2: #{tpu_custom_call.1} parent=1 // pred_check
      _
    $region3: #{tpu_custom_call.1} parent=1 // pred_check_branch
      %14 = sbr.rel (0) target = $region5
    $region4: #{tpu_custom_call.1} parent=1 // pred_region
      _
    $region5: #{tpu_custom_call.1} parent=1 // pred_fallthru
      _
    // Predicated region
    $region6: #{tpu_custom_call.1} parent=1 // pred_check
      _
    $region7: #{tpu_custom_call.1} parent=1 // pred_check_branch
      %16 = sbr.rel (0) target = $region9
    $region8: #{tpu_custom_call.1} parent=1 // pred_region
      _
    $region9: #{tpu_custom_call.1} parent=1 // pred_fallthru
      _
    // Predicated region
    $region10: #{tpu_custom_call.1} parent=1 // pred_check
      _
    $region11: #{tpu_custom_call.1} parent=1 // pred_check_branch
      %18 = sbr.rel (0) target = $region13
    $region12: #{tpu_custom_call.1} parent=1 // pred_region
      _
    $region13: #{tpu_custom_call.1} parent=1 // pred_fallthru
      _
    %v19 = vld [vmem:[%s0] sm:$0xff]
    %v20 = vld [vmem:[%s0 + $0x8] sm:$0xff]
    %v21 = vld [vmem:[%s0 + $0x10] sm:$0xff]
    %v22 = vld [vmem:[%s0 + $0x18] sm:$0xff]
    %v23 = vld [vmem:[%s0 + $0x20] sm:$0xff]
    %v24 = vld [vmem:[%s0 + $0x28] sm:$0xff]
    %v25 = vld [vmem:[%s0 + $0x30] sm:$0xff]
    %v26 = vld [vmem:[%s0 + $0x38] sm:$0xff]
    %v27 = vld [vmem:[%s0 + $0x40] sm:$0xff]
    %v28 = vld [vmem:[%s0 + $0x48] sm:$0xff]
    %v29 = vld [vmem:[%s0 + $0x50] sm:$0xff]
    %v30 = vld [vmem:[%s0 + $0x58] sm:$0xff]
    %v31 = vld [vmem:[%s0 + $0x60] sm:$0xff]
    %v32 = vld [vmem:[%s0 + $0x68] sm:$0xff]
    %v33 = vld [vmem:[%s0 + $0x70] sm:$0xff]
    %v34 = vld [vmem:[%s0 + $0x78] sm:$0xff]
    %v35 = vld [vmem:[%s0 + $0x80] sm:$0xff]
    %v36 = vld [vmem:[%s0 + $0x88] sm:$0xff]
    %v37 = vld [vmem:[%s0 + $0x90] sm:$0xff]
    %v38 = vld [vmem:[%s0 + $0x98] sm:$0xff]
    %v39 = vld [vmem:[%s0 + $0xa0] sm:$0xff]
    %v40 = vld [vmem:[%s0 + $0xa8] sm:$0xff]
    %v41 = vld [vmem:[%s0 + $0xb0] sm:$0xff]
    %v42 = vld [vmem:[%s0 + $0xb8] sm:$0xff]
    %v43 = vld [vmem:[%s0 + $0xc0] sm:$0xff]
    %v44 = vld [vmem:[%s0 + $0xc8] sm:$0xff]
    %v45 = vld [vmem:[%s0 + $0xd0] sm:$0xff]
    %v46 = vld [vmem:[%s0 + $0xd8] sm:$0xff]
    %v47 = vld [vmem:[%s0 + $0xe0] sm:$0xff]
    %v48 = vld [vmem:[%s0 + $0xe8] sm:$0xff]
    %v49 = vld [vmem:[%s0 + $0xf0] sm:$0xff]
    %v50 = vld [vmem:[%s0 + $0xf8] sm:$0xff]
    %v51 = vld [vmem:[%s1] sm:$0xff]
    %v52 = vld [vmem:[%s1 + $0x8] sm:$0xff]
    %v53 = vld [vmem:[%s1 + $0x10] sm:$0xff]
    %v54 = vld [vmem:[%s1 + $0x18] sm:$0xff]
    %v55 = vld [vmem:[%s1 + $0x20] sm:$0xff]
    %v56 = vld [vmem:[%s1 + $0x28] sm:$0xff]
    %v57 = vld [vmem:[%s1 + $0x30] sm:$0xff]
    %v58 = vld [vmem:[%s1 + $0x38] sm:$0xff]
    %v59 = vld [vmem:[%s1 + $0x40] sm:$0xff]
    %v60 = vld [vmem:[%s1 + $0x48] sm:$0xff]
    %v61 = vld [vmem:[%s1 + $0x50] sm:$0xff]
    %v62 = vld [vmem:[%s1 + $0x58] sm:$0xff]
    %v63 = vld [vmem:[%s1 + $0x60] sm:$0xff]
    %v64 = vld [vmem:[%s1 + $0x68] sm:$0xff]
    %v65 = vld [vmem:[%s1 + $0x70] sm:$0xff]
    %v66 = vld [vmem:[%s1 + $0x78] sm:$0xff]
    %v67 = vld [vmem:[%s2] sm:$0x1]
    %vm68 = vcmask 31744
    %v70 = vsel %vm68, %v19, 0
    %v73 = vsel %vm68, %v20, 0
    %v76 = vsel %vm68, %v21, 0
    %v79 = vsel %vm68, %v22, 0
    %v82 = vsel %vm68, %v23, 0
    %v85 = vsel %vm68, %v24, 0
    %v88 = vsel %vm68, %v25, 0
    %v91 = vsel %vm68, %v26, 0
    %v94 = vsel %vm68, %v27, 0
    %v97 = vsel %vm68, %v28, 0
    %v100 = vsel %vm68, %v29, 0
    %v103 = vsel %vm68, %v30, 0
    %v106 = vsel %vm68, %v31, 0
    %v109 = vsel %vm68, %v32, 0
    %v112 = vsel %vm68, %v33, 0
    %v115 = vsel %vm68, %v34, 0
    %v118 = vsel %vm68, %v35, 0
    %v121 = vsel %vm68, %v36, 0
    %v124 = vsel %vm68, %v37, 0
    %v127 = vsel %vm68, %v38, 0
    %v130 = vsel %vm68, %v39, 0
    %v133 = vsel %vm68, %v40, 0
    %v136 = vsel %vm68, %v41, 0
    %v139 = vsel %vm68, %v42, 0
    %v142 = vsel %vm68, %v43, 0
    %v145 = vsel %vm68, %v44, 0
    %v148 = vsel %vm68, %v45, 0
    %v151 = vsel %vm68, %v46, 0
    %v154 = vsel %vm68, %v47, 0
    %v157 = vsel %vm68, %v48, 0
    %v160 = vsel %vm68, %v49, 0
    %v163 = vsel %vm68, %v50, 0
    %v166 = vsel %vm68, %v51, 0
    %v169 = vsel %vm68, %v52, 0
    %v172 = vsel %vm68, %v53, 0
    %v175 = vsel %vm68, %v54, 0
    %v178 = vsel %vm68, %v55, 0
    %v181 = vsel %vm68, %v56, 0
    %v184 = vsel %vm68, %v57, 0
    %v187 = vsel %vm68, %v58, 0
    %v190 = vsel %vm68, %v59, 0
    %v193 = vsel %vm68, %v60, 0
    %v196 = vsel %vm68, %v61, 0
    %v199 = vsel %vm68, %v62, 0
    %v202 = vsel %vm68, %v63, 0
    %v205 = vsel %vm68, %v64, 0
    %v208 = vsel %vm68, %v65, 0
    %v211 = vsel %vm68, %v66, 0
    %213 = vmatprep.subr.mxu0 0.0
    %214 = vmatpush1.xpose.msra.mxu0 %v166
    %215 = vmatprep.subr.mxu0 0.0
    %216 = vmatpush1.xpose.msra.mxu0 %v169
    %217 = vmatprep.subr.mxu0 0.0
    %218 = vmatpush1.xpose.msra.mxu0 %v172
    %219 = vmatprep.subr.mxu0 0.0
    %220 = vmatpush1.xpose.msra.mxu0 %v175
    %221 = vmatprep.subr.mxu0 0.0
    %222 = vmatpush1.xpose.msra.mxu0 %v178
    %223 = vmatprep.subr.mxu0 0.0
    %224 = vmatpush1.xpose.msra.mxu0 %v181
    %225 = vmatprep.subr.mxu0 0.0
    %226 = vmatpush1.xpose.msra.mxu0 %v184
    %227 = vmatprep.subr.mxu0 0.0
    %228 = vmatpush1.xpose.msra.mxu0 %v187
    %229 = vmatprep.subr.mxu0 0.0
    %230 = vmatpush1.xpose.msra.mxu0 %v190
    %231 = vmatprep.subr.mxu0 0.0
    %232 = vmatpush1.xpose.msra.mxu0 %v193
    %233 = vmatprep.subr.mxu0 0.0
    %234 = vmatpush1.xpose.msra.mxu0 %v196
    %235 = vmatprep.subr.mxu0 0.0
    %236 = vmatpush1.xpose.msra.mxu0 %v199
    %237 = vmatprep.subr.mxu0 0.0
    %238 = vmatpush1.xpose.msra.mxu0 %v202
    %239 = vmatprep.subr.mxu0 0.0
    %240 = vmatpush1.xpose.msra.mxu0 %v205
    %241 = vmatprep.subr.mxu0 0.0
    %242 = vmatpush1.xpose.msra.mxu0 %v208
    %243 = vmatprep.subr.mxu0 0.0
    %244 = vmatpush1.xpose.msra.mxu0 %v211
    %245 = vmatprep.subr.mxu0 0.0
    %246 = vmatpush1.xpose.msra.mxu0 0.0
    %247 = vmatprep.subr.mxu0 0.0
    %248 = vmatpush1.xpose.msra.mxu0 0.0
    %249 = vmatprep.subr.mxu0 0.0
    %250 = vmatpush1.xpose.msra.mxu0 0.0
    %251 = vmatprep.subr.mxu0 0.0
    %252 = vmatpush1.xpose.msra.mxu0 0.0
    %253 = vmatprep.subr.mxu0 0.0
    %254 = vmatpush1.xpose.msra.mxu0 0.0
    %255 = vmatprep.subr.mxu0 0.0
    %256 = vmatpush1.xpose.msra.mxu0 0.0
    %257 = vmatprep.subr.mxu0 0.0
    %258 = vmatpush1.xpose.msra.mxu0 0.0
    %259 = vmatprep.subr.mxu0 0.0
    %260 = vmatpush1.xpose.msra.mxu0 0.0
    %261 = vmatprep.subr.mxu0 0.0
    %262 = vmatpush1.xpose.msra.mxu0 0.0
    %263 = vmatprep.subr.mxu0 0.0
    %264 = vmatpush1.xpose.msra.mxu0 0.0
    %265 = vmatprep.subr.mxu0 0.0
    %266 = vmatpush1.xpose.msra.mxu0 0.0
    %267 = vmatprep.subr.mxu0 0.0
    %268 = vmatpush1.xpose.msra.mxu0 0.0
    %269 = vmatprep.subr.mxu0 0.0
    %270 = vmatpush1.xpose.msra.mxu0 0.0
    %271 = vmatprep.subr.mxu0 0.0
    %272 = vmatpush1.xpose.msra.mxu0 0.0
    %273 = vmatprep.subr.mxu0 0.0
    %274 = vmatpush1.xpose.msra.mxu0 0.0
    %275 = vmatprep.subr.mxu0 0.0
    %276 = vmatpush1.xpose.msra.mxu0 0.0
    %277 = vmatprep.mubr.f32.mxu0 0.0
    %278 = vmatmul.mubr.f32.gmra.mrb[0].mxu0 %v70
    %v279 = vpop.f32.mrb[0].mxu0
    %v280 = vadd.f32 0.0, %v279
    %v281 = vpop.f32.mrb[0].mxu0
    %282 = vmatprep.mubr.f32.mxu0 0.0
    %283 = vmatmul.mubr.f32.gmra.mrb[0].mxu0 %v73
    %v284 = vpop.f32.mrb[0].mxu0
    %v285 = vadd.f32 0.0, %v284
    %v286 = vpop.f32.mrb[0].mxu0
    %287 = vmatprep.mubr.f32.mxu0 0.0
    %288 = vmatmul.mubr.f32.gmra.mrb[0].mxu0 %v76
    %v289 = vpop.f32.mrb[0].mxu0
    %v290 = vadd.f32 0.0, %v289
    %v291 = vpop.f32.mrb[0].mxu0
    %292 = vmatprep.mubr.f32.mxu0 0.0
    %293 = vmatmul.mubr.f32.gmra.mrb[0].mxu0 %v79
    %v294 = vpop.f32.mrb[0].mxu0
    %v295 = vadd.f32 0.0, %v294
    %v296 = vpop.f32.mrb[0].mxu0
    %297 = vmatprep.mubr.f32.mxu0 0.0
    %298 = vmatmul.mubr.f32.gmra.mrb[0].mxu0 %v82
    %v299 = vpop.f32.mrb[0].mxu0
    %v300 = vadd.f32 0.0, %v299
    %v301 = vpop.f32.mrb[0].mxu0
    %302 = vmatprep.mubr.f32.mxu0 0.0
    %303 = vmatmul.mubr.f32.gmra.mrb[0].mxu0 %v85
    %v304 = vpop.f32.mrb[0].mxu0
    %v305 = vadd.f32 0.0, %v304
    %v306 = vpop.f32.mrb[0].mxu0
    %307 = vmatprep.mubr.f32.mxu0 0.0
    %308 = vmatmul.mubr.f32.gmra.mrb[0].mxu0 %v88
    %v309 = vpop.f32.mrb[0].mxu0
    %v310 = vadd.f32 0.0, %v309
    %v311 = vpop.f32.mrb[0].mxu0
    %312 = vmatprep.mubr.f32.mxu0 0.0
    %313 = vmatmul.mubr.f32.gmra.mrb[0].mxu0 %v91
    %v314 = vpop.f32.mrb[0].mxu0
    %v315 = vadd.f32 0.0, %v314
    %v316 = vpop.f32.mrb[0].mxu0
    %317 = vmatprep.mubr.f32.mxu0 0.0
    %318 = vmatmul.mubr.f32.gmra.mrb[0].mxu0 %v94
    %v319 = vpop.f32.mrb[0].mxu0
    %v320 = vadd.f32 0.0, %v319
    %v321 = vpop.f32.mrb[0].mxu0
    %322 = vmatprep.mubr.f32.mxu0 0.0
    %323 = vmatmul.mubr.f32.gmra.mrb[0].mxu0 %v97
    %v324 = vpop.f32.mrb[0].mxu0
    %v325 = vadd.f32 0.0, %v324
    %v326 = vpop.f32.mrb[0].mxu0
    %327 = vmatprep.mubr.f32.mxu0 0.0
    %328 = vmatmul.mubr.f32.gmra.mrb[0].mxu0 %v100
    %v329 = vpop.f32.mrb[0].mxu0
    %v330 = vadd.f32 0.0, %v329
    %v331 = vpop.f32.mrb[0].mxu0
    %332 = vmatprep.mubr.f32.mxu0 0.0
    %333 = vmatmul.mubr.f32.gmra.mrb[0].mxu0 %v103
    %v334 = vpop.f32.mrb[0].mxu0
    %v335 = vadd.f32 0.0, %v334
    %v336 = vpop.f32.mrb[0].mxu0
    %337 = vmatprep.mubr.f32.mxu0 0.0
    %338 = vmatmul.mubr.f32.gmra.mrb[0].mxu0 %v106
    %v339 = vpop.f32.mrb[0].mxu0
    %v340 = vadd.f32 0.0, %v339
    %v341 = vpop.f32.mrb[0].mxu0
    %342 = vmatprep.mubr.f32.mxu0 0.0
    %343 = vmatmul.mubr.f32.gmra.mrb[0].mxu0 %v109
    %v344 = vpop.f32.mrb[0].mxu0
    %v345 = vadd.f32 0.0, %v344
    %v346 = vpop.f32.mrb[0].mxu0
    %347 = vmatprep.mubr.f32.mxu0 0.0
    %348 = vmatmul.mubr.f32.gmra.mrb[0].mxu0 %v112
    %v349 = vpop.f32.mrb[0].mxu0
    %v350 = vadd.f32 0.0, %v349
    %v351 = vpop.f32.mrb[0].mxu0
    %352 = vmatprep.mubr.f32.mxu0 0.0
    %353 = vmatmul.mubr.f32.gmra.mrb[0].mxu0 %v115
    %v354 = vpop.f32.mrb[0].mxu0
    %v355 = vadd.f32 0.0, %v354
    %v356 = vpop.f32.mrb[0].mxu0
    %357 = vmatprep.mubr.f32.mxu0 0.0
    %358 = vmatmul.mubr.f32.gmra.mrb[0].mxu0 %v118
    %v359 = vpop.f32.mrb[0].mxu0
    %v360 = vadd.f32 0.0, %v359
    %v361 = vpop.f32.mrb[0].mxu0
    %362 = vmatprep.mubr.f32.mxu0 0.0
    %363 = vmatmul.mubr.f32.gmra.mrb[0].mxu0 %v121
    %v364 = vpop.f32.mrb[0].mxu0
    %v365 = vadd.f32 0.0, %v364
    %v366 = vpop.f32.mrb[0].mxu0
    %367 = vmatprep.mubr.f32.mxu0 0.0
    %368 = vmatmul.mubr.f32.gmra.mrb[0].mxu0 %v124
    %v369 = vpop.f32.mrb[0].mxu0
    %v370 = vadd.f32 0.0, %v369
    %v371 = vpop.f32.mrb[0].mxu0
    %372 = vmatprep.mubr.f32.mxu0 0.0
    %373 = vmatmul.mubr.f32.gmra.mrb[0].mxu0 %v127
    %v374 = vpop.f32.mrb[0].mxu0
    %v375 = vadd.f32 0.0, %v374
    %v376 = vpop.f32.mrb[0].mxu0
    %377 = vmatprep.mubr.f32.mxu0 0.0
    %378 = vmatmul.mubr.f32.gmra.mrb[0].mxu0 %v130
    %v379 = vpop.f32.mrb[0].mxu0
    %v380 = vadd.f32 0.0, %v379
    %v381 = vpop.f32.mrb[0].mxu0
    %382 = vmatprep.mubr.f32.mxu0 0.0
    %383 = vmatmul.mubr.f32.gmra.mrb[0].mxu0 %v133
    %v384 = vpop.f32.mrb[0].mxu0
    %v385 = vadd.f32 0.0, %v384
    %v386 = vpop.f32.mrb[0].mxu0
    %387 = vmatprep.mubr.f32.mxu0 0.0
    %388 = vmatmul.mubr.f32.gmra.mrb[0].mxu0 %v136
    %v389 = vpop.f32.mrb[0].mxu0
    %v390 = vadd.f32 0.0, %v389
    %v391 = vpop.f32.mrb[0].mxu0
    %392 = vmatprep.mubr.f32.mxu0 0.0
    %393 = vmatmul.mubr.f32.gmra.mrb[0].mxu0 %v139
    %v394 = vpop.f32.mrb[0].mxu0
    %v395 = vadd.f32 0.0, %v394
    %v396 = vpop.f32.mrb[0].mxu0
    %397 = vmatprep.mubr.f32.mxu0 0.0
    %398 = vmatmul.mubr.f32.gmra.mrb[0].mxu0 %v142
    %v399 = vpop.f32.mrb[0].mxu0
    %v400 = vadd.f32 0.0, %v399
    %v401 = vpop.f32.mrb[0].mxu0
    %402 = vmatprep.mubr.f32.mxu0 0.0
    %403 = vmatmul.mubr.f32.gmra.mrb[0].mxu0 %v145
    %v404 = vpop.f32.mrb[0].mxu0
    %v405 = vadd.f32 0.0, %v404
    %v406 = vpop.f32.mrb[0].mxu0
    %407 = vmatprep.mubr.f32.mxu0 0.0
    %408 = vmatmul.mubr.f32.gmra.mrb[0].mxu0 %v148
    %v409 = vpop.f32.mrb[0].mxu0
    %v410 = vadd.f32 0.0, %v409
    %v411 = vpop.f32.mrb[0].mxu0
    %412 = vmatprep.mubr.f32.mxu0 0.0
    %413 = vmatmul.mubr.f32.gmra.mrb[0].mxu0 %v151
    %v414 = vpop.f32.mrb[0].mxu0
    %v415 = vadd.f32 0.0, %v414
    %v416 = vpop.f32.mrb[0].mxu0
    %417 = vmatprep.mubr.f32.mxu0 0.0
    %418 = vmatmul.mubr.f32.gmra.mrb[0].mxu0 %v154
    %v419 = vpop.f32.mrb[0].mxu0
    %v420 = vadd.f32 0.0, %v419
    %v421 = vpop.f32.mrb[0].mxu0
    %422 = vmatprep.mubr.f32.mxu0 0.0
    %423 = vmatmul.mubr.f32.gmra.mrb[0].mxu0 %v157
    %v424 = vpop.f32.mrb[0].mxu0
    %v425 = vadd.f32 0.0, %v424
    %v426 = vpop.f32.mrb[0].mxu0
    %427 = vmatprep.mubr.f32.mxu0 0.0
    %428 = vmatmul.mubr.f32.gmra.mrb[0].mxu0 %v160
    %v429 = vpop.f32.mrb[0].mxu0
    %v430 = vadd.f32 0.0, %v429
    %v431 = vpop.f32.mrb[0].mxu0
    %432 = vmatprep.mubr.f32.mxu0 0.0
    %433 = vmatmul.mubr.f32.gmra.mrb[0].mxu0 %v163
    %v434 = vpop.f32.mrb[0].mxu0
    %v435 = vadd.f32 0.0, %v434
    %v436 = vpop.f32.mrb[0].mxu0
    %437 = vdwg.mxu0
    %v438 = vmul.f32 %v280, 2.0
    %v439 = vmul.f32 %v285, 2.0
    %v440 = vmul.f32 %v290, 2.0
    %v441 = vmul.f32 %v295, 2.0
    %v442 = vmul.f32 %v300, 2.0
    %v443 = vmul.f32 %v305, 2.0
    %v444 = vmul.f32 %v310, 2.0
    %v445 = vmul.f32 %v315, 2.0
    %v446 = vmul.f32 %v320, 2.0
    %v447 = vmul.f32 %v325, 2.0
    %v448 = vmul.f32 %v330, 2.0
    %v449 = vmul.f32 %v335, 2.0
    %v450 = vmul.f32 %v340, 2.0
    %v451 = vmul.f32 %v345, 2.0
    %v452 = vmul.f32 %v350, 2.0
    %v453 = vmul.f32 %v355, 2.0
    %v454 = vmul.f32 %v360, 2.0
    %v455 = vmul.f32 %v365, 2.0
    %v456 = vmul.f32 %v370, 2.0
    %v457 = vmul.f32 %v375, 2.0
    %v458 = vmul.f32 %v380, 2.0
    %v459 = vmul.f32 %v385, 2.0
    %v460 = vmul.f32 %v390, 2.0
    %v461 = vmul.f32 %v395, 2.0
    %v462 = vmul.f32 %v400, 2.0
    %v463 = vmul.f32 %v405, 2.0
    %v464 = vmul.f32 %v410, 2.0
    %v465 = vmul.f32 %v415, 2.0
    %v466 = vmul.f32 %v420, 2.0
    %v467 = vmul.f32 %v425, 2.0
    %v468 = vmul.f32 %v430, 2.0
    %v469 = vmul.f32 %v435, 2.0
    %v471 = vlaneseq
    %v472 = vshrl.u32 %v471, 7
    %v473 = vsub.s32 0, %v472
    %v474 = vrot.slane %v67, %v473
    %v476 = vsub.f32 %v474, %v438
    %v477 = vsub.f32 %v474, %v439
    %v478 = vsub.f32 %v474, %v440
    %v479 = vsub.f32 %v474, %v441
    %v480 = vsub.f32 %v474, %v442
    %v481 = vsub.f32 %v474, %v443
    %v482 = vsub.f32 %v474, %v444
    %v483 = vsub.f32 %v474, %v445
    %v484 = vsub.f32 %v474, %v446
    %v485 = vsub.f32 %v474, %v447
    %v486 = vsub.f32 %v474, %v448
    %v487 = vsub.f32 %v474, %v449
    %v488 = vsub.f32 %v474, %v450
    %v489 = vsub.f32 %v474, %v451
    %v490 = vsub.f32 %v474, %v452
    %v491 = vsub.f32 %v474, %v453
    %v492 = vsub.f32 %v474, %v454
    %v493 = vsub.f32 %v474, %v455
    %v494 = vsub.f32 %v474, %v456
    %v495 = vsub.f32 %v474, %v457
    %v496 = vsub.f32 %v474, %v458
    %v497 = vsub.f32 %v474, %v459
    %v498 = vsub.f32 %v474, %v460
    %v499 = vsub.f32 %v474, %v461
    %v500 = vsub.f32 %v474, %v462
    %v501 = vsub.f32 %v474, %v463
    %v502 = vsub.f32 %v474, %v464
    %v503 = vsub.f32 %v474, %v465
    %v504 = vsub.f32 %v474, %v466
    %v505 = vsub.f32 %v474, %v467
    %v506 = vsub.f32 %v474, %v468
    %v507 = vsub.f32 %v474, %v469
    %508 = vmin.xlane.f32.xlu0 %v476
    %v509 = vpop.xlane.xlu0 %508
    %510 = vmin.xlane.f32.xlu0 %v477
    %v511 = vpop.xlane.xlu0 %510
    %512 = vmin.xlane.f32.xlu0 %v478
    %v513 = vpop.xlane.xlu0 %512
    %514 = vmin.xlane.f32.xlu0 %v479
    %v515 = vpop.xlane.xlu0 %514
    %516 = vmin.xlane.f32.xlu0 %v480
    %v517 = vpop.xlane.xlu0 %516
    %518 = vmin.xlane.f32.xlu0 %v481
    %v519 = vpop.xlane.xlu0 %518
    %520 = vmin.xlane.f32.xlu0 %v482
    %v521 = vpop.xlane.xlu0 %520
    %522 = vmin.xlane.f32.xlu0 %v483
    %v523 = vpop.xlane.xlu0 %522
    %524 = vmin.xlane.f32.xlu0 %v484
    %v525 = vpop.xlane.xlu0 %524
    %526 = vmin.xlane.f32.xlu0 %v485
    %v527 = vpop.xlane.xlu0 %526
    %528 = vmin.xlane.f32.xlu0 %v486
    %v529 = vpop.xlane.xlu0 %528
    %530 = vmin.xlane.f32.xlu0 %v487
    %v531 = vpop.xlane.xlu0 %530
    %532 = vmin.xlane.f32.xlu0 %v488
    %v533 = vpop.xlane.xlu0 %532
    %534 = vmin.xlane.f32.xlu0 %v489
    %v535 = vpop.xlane.xlu0 %534
    %536 = vmin.xlane.f32.xlu0 %v490
    %v537 = vpop.xlane.xlu0 %536
    %538 = vmin.xlane.f32.xlu0 %v491
    %v539 = vpop.xlane.xlu0 %538
    %540 = vmin.xlane.f32.xlu0 %v492
    %v541 = vpop.xlane.xlu0 %540
    %542 = vmin.xlane.f32.xlu0 %v493
    %v543 = vpop.xlane.xlu0 %542
    %544 = vmin.xlane.f32.xlu0 %v494
    %v545 = vpop.xlane.xlu0 %544
    %546 = vmin.xlane.f32.xlu0 %v495
    %v547 = vpop.xlane.xlu0 %546
    %548 = vmin.xlane.f32.xlu0 %v496
    %v549 = vpop.xlane.xlu0 %548
    %550 = vmin.xlane.f32.xlu0 %v497
    %v551 = vpop.xlane.xlu0 %550
    %552 = vmin.xlane.f32.xlu0 %v498
    %v553 = vpop.xlane.xlu0 %552
    %554 = vmin.xlane.f32.xlu0 %v499
    %v555 = vpop.xlane.xlu0 %554
    %556 = vmin.xlane.f32.xlu0 %v500
    %v557 = vpop.xlane.xlu0 %556
    %558 = vmin.xlane.f32.xlu0 %v501
    %v559 = vpop.xlane.xlu0 %558
    %560 = vmin.xlane.f32.xlu0 %v502
    %v561 = vpop.xlane.xlu0 %560
    %562 = vmin.xlane.f32.xlu0 %v503
    %v563 = vpop.xlane.xlu0 %562
    %564 = vmin.xlane.f32.xlu0 %v504
    %v565 = vpop.xlane.xlu0 %564
    %566 = vmin.xlane.f32.xlu0 %v505
    %v567 = vpop.xlane.xlu0 %566
    %568 = vmin.xlane.f32.xlu0 %v506
    %v569 = vpop.xlane.xlu0 %568
    %570 = vmin.xlane.f32.xlu0 %v507
    %v571 = vpop.xlane.xlu0 %570
    %v572 = vlaneseq
    %v573 = vand.u32 %v572, 127
    %vm574 = vcmp.eq.f32.partialorder %v476, %v509
    %vm575 = vcmp.eq.f32.partialorder %v477, %v511
    %vm576 = vcmp.eq.f32.partialorder %v478, %v513
    %vm577 = vcmp.eq.f32.partialorder %v479, %v515
    %vm578 = vcmp.eq.f32.partialorder %v480, %v517
    %vm579 = vcmp.eq.f32.partialorder %v481, %v519
    %vm580 = vcmp.eq.f32.partialorder %v482, %v521
    %vm581 = vcmp.eq.f32.partialorder %v483, %v523
    %vm582 = vcmp.eq.f32.partialorder %v484, %v525
    %vm583 = vcmp.eq.f32.partialorder %v485, %v527
    %vm584 = vcmp.eq.f32.partialorder %v486, %v529
    %vm585 = vcmp.eq.f32.partialorder %v487, %v531
    %vm586 = vcmp.eq.f32.partialorder %v488, %v533
    %vm587 = vcmp.eq.f32.partialorder %v489, %v535
    %vm588 = vcmp.eq.f32.partialorder %v490, %v537
    %vm589 = vcmp.eq.f32.partialorder %v491, %v539
    %vm590 = vcmp.eq.f32.partialorder %v492, %v541
    %vm591 = vcmp.eq.f32.partialorder %v493, %v543
    %vm592 = vcmp.eq.f32.partialorder %v494, %v545
    %vm593 = vcmp.eq.f32.partialorder %v495, %v547
    %vm594 = vcmp.eq.f32.partialorder %v496, %v549
    %vm595 = vcmp.eq.f32.partialorder %v497, %v551
    %vm596 = vcmp.eq.f32.partialorder %v498, %v553
    %vm597 = vcmp.eq.f32.partialorder %v499, %v555
    %vm598 = vcmp.eq.f32.partialorder %v500, %v557
    %vm599 = vcmp.eq.f32.partialorder %v501, %v559
    %vm600 = vcmp.eq.f32.partialorder %v502, %v561
    %vm601 = vcmp.eq.f32.partialorder %v503, %v563
    %vm602 = vcmp.eq.f32.partialorder %v504, %v565
    %vm603 = vcmp.eq.f32.partialorder %v505, %v567
    %vm604 = vcmp.eq.f32.partialorder %v506, %v569
    %vm605 = vcmp.eq.f32.partialorder %v507, %v571
    %v606 = vsel %vm574, %v573, 128
    %v607 = vsel %vm575, %v573, 128
    %v608 = vsel %vm576, %v573, 128
    %v609 = vsel %vm577, %v573, 128
    %v610 = vsel %vm578, %v573, 128
    %v611 = vsel %vm579, %v573, 128
    %v612 = vsel %vm580, %v573, 128
    %v613 = vsel %vm581, %v573, 128
    %v614 = vsel %vm582, %v573, 128
    %v615 = vsel %vm583, %v573, 128
    %v616 = vsel %vm584, %v573, 128
    %v617 = vsel %vm585, %v573, 128
    %v618 = vsel %vm586, %v573, 128
    %v619 = vsel %vm587, %v573, 128
    %v620 = vsel %vm588, %v573, 128
    %v621 = vsel %vm589, %v573, 128
    %v622 = vsel %vm590, %v573, 128
    %v623 = vsel %vm591, %v573, 128
    %v624 = vsel %vm592, %v573, 128
    %v625 = vsel %vm593, %v573, 128
    %v626 = vsel %vm594, %v573, 128
    %v627 = vsel %vm595, %v573, 128
    %v628 = vsel %vm596, %v573, 128
    %v629 = vsel %vm597, %v573, 128
    %v630 = vsel %vm598, %v573, 128
    %v631 = vsel %vm599, %v573, 128
    %v632 = vsel %vm600, %v573, 128
    %v633 = vsel %vm601, %v573, 128
    %v634 = vsel %vm602, %v573, 128
    %v635 = vsel %vm603, %v573, 128
    %v636 = vsel %vm604, %v573, 128
    %v637 = vsel %vm605, %v573, 128
    %v638 = vand.u32 %v606, 65535
    %v639 = vshra.s32 %v606, 16
    %v640 = vcvt.s32.f32 %v638
    %v641 = vcvt.s32.f32 %v639
    %642 = vmin.xlane.f32.xlu0 %v641
    %v643 = vpop.xlane.xlu0 %642
    %vm644 = vcmp.eq.f32.partialorder %v641, %v643
    %v645 = vsel %vm644, %v640, inf
    %646 = vmin.xlane.f32.xlu0 %v645
    %v647 = vpop.xlane.xlu0 %646
    %v648 = vcvt.f32.s32 %v647
    %v649 = vcvt.f32.s32 %v643
    %v650 = vshll.u32 %v649, 16
    %v651 = vadd.s32 %v650, %v648
    %v652 = vand.u32 %v607, 65535
    %v653 = vshra.s32 %v607, 16
    %v654 = vcvt.s32.f32 %v652
    %v655 = vcvt.s32.f32 %v653
    %656 = vmin.xlane.f32.xlu0 %v655
    %v657 = vpop.xlane.xlu0 %656
    %vm658 = vcmp.eq.f32.partialorder %v655, %v657
    %v659 = vsel %vm658, %v654, inf
    %660 = vmin.xlane.f32.xlu0 %v659
    %v661 = vpop.xlane.xlu0 %660
    %v662 = vcvt.f32.s32 %v661
    %v663 = vcvt.f32.s32 %v657
    %v664 = vshll.u32 %v663, 16
    %v665 = vadd.s32 %v664, %v662
    %v666 = vand.u32 %v608, 65535
    %v667 = vshra.s32 %v608, 16
    %v668 = vcvt.s32.f32 %v666
    %v669 = vcvt.s32.f32 %v667
    %670 = vmin.xlane.f32.xlu0 %v669
    %v671 = vpop.xlane.xlu0 %670
    %vm672 = vcmp.eq.f32.partialorder %v669, %v671
    %v673 = vsel %vm672, %v668, inf
    %674 = vmin.xlane.f32.xlu0 %v673
    %v675 = vpop.xlane.xlu0 %674
    %v676 = vcvt.f32.s32 %v675
    %v677 = vcvt.f32.s32 %v671
    %v678 = vshll.u32 %v677, 16
    %v679 = vadd.s32 %v678, %v676
    %v680 = vand.u32 %v609, 65535
    %v681 = vshra.s32 %v609, 16
    %v682 = vcvt.s32.f32 %v680
    %v683 = vcvt.s32.f32 %v681
    %684 = vmin.xlane.f32.xlu0 %v683
    %v685 = vpop.xlane.xlu0 %684
    %vm686 = vcmp.eq.f32.partialorder %v683, %v685
    %v687 = vsel %vm686, %v682, inf
    %688 = vmin.xlane.f32.xlu0 %v687
    %v689 = vpop.xlane.xlu0 %688
    %v690 = vcvt.f32.s32 %v689
    %v691 = vcvt.f32.s32 %v685
    %v692 = vshll.u32 %v691, 16
    %v693 = vadd.s32 %v692, %v690
    %v694 = vand.u32 %v610, 65535
    %v695 = vshra.s32 %v610, 16
    %v696 = vcvt.s32.f32 %v694
    %v697 = vcvt.s32.f32 %v695
    %698 = vmin.xlane.f32.xlu0 %v697
    %v699 = vpop.xlane.xlu0 %698
    %vm700 = vcmp.eq.f32.partialorder %v697, %v699
    %v701 = vsel %vm700, %v696, inf
    %702 = vmin.xlane.f32.xlu0 %v701
    %v703 = vpop.xlane.xlu0 %702
    %v704 = vcvt.f32.s32 %v703
    %v705 = vcvt.f32.s32 %v699
    %v706 = vshll.u32 %v705, 16
    %v707 = vadd.s32 %v706, %v704
    %v708 = vand.u32 %v611, 65535
    %v709 = vshra.s32 %v611, 16
    %v710 = vcvt.s32.f32 %v708
    %v711 = vcvt.s32.f32 %v709
    %712 = vmin.xlane.f32.xlu0 %v711
    %v713 = vpop.xlane.xlu0 %712
    %vm714 = vcmp.eq.f32.partialorder %v711, %v713
    %v715 = vsel %vm714, %v710, inf
    %716 = vmin.xlane.f32.xlu0 %v715
    %v717 = vpop.xlane.xlu0 %716
    %v718 = vcvt.f32.s32 %v717
    %v719 = vcvt.f32.s32 %v713
    %v720 = vshll.u32 %v719, 16
    %v721 = vadd.s32 %v720, %v718
    %v722 = vand.u32 %v612, 65535
    %v723 = vshra.s32 %v612, 16
    %v724 = vcvt.s32.f32 %v722
    %v725 = vcvt.s32.f32 %v723
    %726 = vmin.xlane.f32.xlu0 %v725
    %v727 = vpop.xlane.xlu0 %726
    %vm728 = vcmp.eq.f32.partialorder %v725, %v727
    %v729 = vsel %vm728, %v724, inf
    %730 = vmin.xlane.f32.xlu0 %v729
    %v731 = vpop.xlane.xlu0 %730
    %v732 = vcvt.f32.s32 %v731
    %v733 = vcvt.f32.s32 %v727
    %v734 = vshll.u32 %v733, 16
    %v735 = vadd.s32 %v734, %v732
    %v736 = vand.u32 %v613, 65535
    %v737 = vshra.s32 %v613, 16
    %v738 = vcvt.s32.f32 %v736
    %v739 = vcvt.s32.f32 %v737
    %740 = vmin.xlane.f32.xlu0 %v739
    %v741 = vpop.xlane.xlu0 %740
    %vm742 = vcmp.eq.f32.partialorder %v739, %v741
    %v743 = vsel %vm742, %v738, inf
    %744 = vmin.xlane.f32.xlu0 %v743
    %v745 = vpop.xlane.xlu0 %744
    %v746 = vcvt.f32.s32 %v745
    %v747 = vcvt.f32.s32 %v741
    %v748 = vshll.u32 %v747, 16
    %v749 = vadd.s32 %v748, %v746
    %v750 = vand.u32 %v614, 65535
    %v751 = vshra.s32 %v614, 16
    %v752 = vcvt.s32.f32 %v750
    %v753 = vcvt.s32.f32 %v751
    %754 = vmin.xlane.f32.xlu0 %v753
    %v755 = vpop.xlane.xlu0 %754
    %vm756 = vcmp.eq.f32.partialorder %v753, %v755
    %v757 = vsel %vm756, %v752, inf
    %758 = vmin.xlane.f32.xlu0 %v757
    %v759 = vpop.xlane.xlu0 %758
    %v760 = vcvt.f32.s32 %v759
    %v761 = vcvt.f32.s32 %v755
    %v762 = vshll.u32 %v761, 16
    %v763 = vadd.s32 %v762, %v760
    %v764 = vand.u32 %v615, 65535
    %v765 = vshra.s32 %v615, 16
    %v766 = vcvt.s32.f32 %v764
    %v767 = vcvt.s32.f32 %v765
    %768 = vmin.xlane.f32.xlu0 %v767
    %v769 = vpop.xlane.xlu0 %768
    %vm770 = vcmp.eq.f32.partialorder %v767, %v769
    %v771 = vsel %vm770, %v766, inf
    %772 = vmin.xlane.f32.xlu0 %v771
    %v773 = vpop.xlane.xlu0 %772
    %v774 = vcvt.f32.s32 %v773
    %v775 = vcvt.f32.s32 %v769
    %v776 = vshll.u32 %v775, 16
    %v777 = vadd.s32 %v776, %v774
    %v778 = vand.u32 %v616, 65535
    %v779 = vshra.s32 %v616, 16
    %v780 = vcvt.s32.f32 %v778
    %v781 = vcvt.s32.f32 %v779
    %782 = vmin.xlane.f32.xlu0 %v781
    %v783 = vpop.xlane.xlu0 %782
    %vm784 = vcmp.eq.f32.partialorder %v781, %v783
    %v785 = vsel %vm784, %v780, inf
    %786 = vmin.xlane.f32.xlu0 %v785
    %v787 = vpop.xlane.xlu0 %786
    %v788 = vcvt.f32.s32 %v787
    %v789 = vcvt.f32.s32 %v783
    %v790 = vshll.u32 %v789, 16
    %v791 = vadd.s32 %v790, %v788
    %v792 = vand.u32 %v617, 65535
    %v793 = vshra.s32 %v617, 16
    %v794 = vcvt.s32.f32 %v792
    %v795 = vcvt.s32.f32 %v793
    %796 = vmin.xlane.f32.xlu0 %v795
    %v797 = vpop.xlane.xlu0 %796
    %vm798 = vcmp.eq.f32.partialorder %v795, %v797
    %v799 = vsel %vm798, %v794, inf
    %800 = vmin.xlane.f32.xlu0 %v799
    %v801 = vpop.xlane.xlu0 %800
    %v802 = vcvt.f32.s32 %v801
    %v803 = vcvt.f32.s32 %v797
    %v804 = vshll.u32 %v803, 16
    %v805 = vadd.s32 %v804, %v802
    %v806 = vand.u32 %v618, 65535
    %v807 = vshra.s32 %v618, 16
    %v808 = vcvt.s32.f32 %v806
    %v809 = vcvt.s32.f32 %v807
    %810 = vmin.xlane.f32.xlu0 %v809
    %v811 = vpop.xlane.xlu0 %810
    %vm812 = vcmp.eq.f32.partialorder %v809, %v811
    %v813 = vsel %vm812, %v808, inf
    %814 = vmin.xlane.f32.xlu0 %v813
    %v815 = vpop.xlane.xlu0 %814
    %v816 = vcvt.f32.s32 %v815
    %v817 = vcvt.f32.s32 %v811
    %v818 = vshll.u32 %v817, 16
    %v819 = vadd.s32 %v818, %v816
    %v820 = vand.u32 %v619, 65535
    %v821 = vshra.s32 %v619, 16
    %v822 = vcvt.s32.f32 %v820
    %v823 = vcvt.s32.f32 %v821
    %824 = vmin.xlane.f32.xlu0 %v823
    %v825 = vpop.xlane.xlu0 %824
    %vm826 = vcmp.eq.f32.partialorder %v823, %v825
    %v827 = vsel %vm826, %v822, inf
    %828 = vmin.xlane.f32.xlu0 %v827
    %v829 = vpop.xlane.xlu0 %828
    %v830 = vcvt.f32.s32 %v829
    %v831 = vcvt.f32.s32 %v825
    %v832 = vshll.u32 %v831, 16
    %v833 = vadd.s32 %v832, %v830
    %v834 = vand.u32 %v620, 65535
    %v835 = vshra.s32 %v620, 16
    %v836 = vcvt.s32.f32 %v834
    %v837 = vcvt.s32.f32 %v835
    %838 = vmin.xlane.f32.xlu0 %v837
    %v839 = vpop.xlane.xlu0 %838
    %vm840 = vcmp.eq.f32.partialorder %v837, %v839
    %v841 = vsel %vm840, %v836, inf
    %842 = vmin.xlane.f32.xlu0 %v841
    %v843 = vpop.xlane.xlu0 %842
    %v844 = vcvt.f32.s32 %v843
    %v845 = vcvt.f32.s32 %v839
    %v846 = vshll.u32 %v845, 16
    %v847 = vadd.s32 %v846, %v844
    %v848 = vand.u32 %v621, 65535
    %v849 = vshra.s32 %v621, 16
    %v850 = vcvt.s32.f32 %v848
    %v851 = vcvt.s32.f32 %v849
    %852 = vmin.xlane.f32.xlu0 %v851
    %v853 = vpop.xlane.xlu0 %852
    %vm854 = vcmp.eq.f32.partialorder %v851, %v853
    %v855 = vsel %vm854, %v850, inf
    %856 = vmin.xlane.f32.xlu0 %v855
    %v857 = vpop.xlane.xlu0 %856
    %v858 = vcvt.f32.s32 %v857
    %v859 = vcvt.f32.s32 %v853
    %v860 = vshll.u32 %v859, 16
    %v861 = vadd.s32 %v860, %v858
    %v862 = vand.u32 %v622, 65535
    %v863 = vshra.s32 %v622, 16
    %v864 = vcvt.s32.f32 %v862
    %v865 = vcvt.s32.f32 %v863
    %866 = vmin.xlane.f32.xlu0 %v865
    %v867 = vpop.xlane.xlu0 %866
    %vm868 = vcmp.eq.f32.partialorder %v865, %v867
    %v869 = vsel %vm868, %v864, inf
    %870 = vmin.xlane.f32.xlu0 %v869
    %v871 = vpop.xlane.xlu0 %870
    %v872 = vcvt.f32.s32 %v871
    %v873 = vcvt.f32.s32 %v867
    %v874 = vshll.u32 %v873, 16
    %v875 = vadd.s32 %v874, %v872
    %v876 = vand.u32 %v623, 65535
    %v877 = vshra.s32 %v623, 16
    %v878 = vcvt.s32.f32 %v876
    %v879 = vcvt.s32.f32 %v877
    %880 = vmin.xlane.f32.xlu0 %v879
    %v881 = vpop.xlane.xlu0 %880
    %vm882 = vcmp.eq.f32.partialorder %v879, %v881
    %v883 = vsel %vm882, %v878, inf
    %884 = vmin.xlane.f32.xlu0 %v883
    %v885 = vpop.xlane.xlu0 %884
    %v886 = vcvt.f32.s32 %v885
    %v887 = vcvt.f32.s32 %v881
    %v888 = vshll.u32 %v887, 16
    %v889 = vadd.s32 %v888, %v886
    %v890 = vand.u32 %v624, 65535
    %v891 = vshra.s32 %v624, 16
    %v892 = vcvt.s32.f32 %v890
    %v893 = vcvt.s32.f32 %v891
    %894 = vmin.xlane.f32.xlu0 %v893
    %v895 = vpop.xlane.xlu0 %894
    %vm896 = vcmp.eq.f32.partialorder %v893, %v895
    %v897 = vsel %vm896, %v892, inf
    %898 = vmin.xlane.f32.xlu0 %v897
    %v899 = vpop.xlane.xlu0 %898
    %v900 = vcvt.f32.s32 %v899
    %v901 = vcvt.f32.s32 %v895
    %v902 = vshll.u32 %v901, 16
    %v903 = vadd.s32 %v902, %v900
    %v904 = vand.u32 %v625, 65535
    %v905 = vshra.s32 %v625, 16
    %v906 = vcvt.s32.f32 %v904
    %v907 = vcvt.s32.f32 %v905
    %908 = vmin.xlane.f32.xlu0 %v907
    %v909 = vpop.xlane.xlu0 %908
    %vm910 = vcmp.eq.f32.partialorder %v907, %v909
    %v911 = vsel %vm910, %v906, inf
    %912 = vmin.xlane.f32.xlu0 %v911
    %v913 = vpop.xlane.xlu0 %912
    %v914 = vcvt.f32.s32 %v913
    %v915 = vcvt.f32.s32 %v909
    %v916 = vshll.u32 %v915, 16
    %v917 = vadd.s32 %v916, %v914
    %v918 = vand.u32 %v626, 65535
    %v919 = vshra.s32 %v626, 16
    %v920 = vcvt.s32.f32 %v918
    %v921 = vcvt.s32.f32 %v919
    %922 = vmin.xlane.f32.xlu0 %v921
    %v923 = vpop.xlane.xlu0 %922
    %vm924 = vcmp.eq.f32.partialorder %v921, %v923
    %v925 = vsel %vm924, %v920, inf
    %926 = vmin.xlane.f32.xlu0 %v925
    %v927 = vpop.xlane.xlu0 %926
    %v928 = vcvt.f32.s32 %v927
    %v929 = vcvt.f32.s32 %v923
    %v930 = vshll.u32 %v929, 16
    %v931 = vadd.s32 %v930, %v928
    %v932 = vand.u32 %v627, 65535
    %v933 = vshra.s32 %v627, 16
    %v934 = vcvt.s32.f32 %v932
    %v935 = vcvt.s32.f32 %v933
    %936 = vmin.xlane.f32.xlu0 %v935
    %v937 = vpop.xlane.xlu0 %936
    %vm938 = vcmp.eq.f32.partialorder %v935, %v937
    %v939 = vsel %vm938, %v934, inf
    %940 = vmin.xlane.f32.xlu0 %v939
    %v941 = vpop.xlane.xlu0 %940
    %v942 = vcvt.f32.s32 %v941
    %v943 = vcvt.f32.s32 %v937
    %v944 = vshll.u32 %v943, 16
    %v945 = vadd.s32 %v944, %v942
    %v946 = vand.u32 %v628, 65535
    %v947 = vshra.s32 %v628, 16
    %v948 = vcvt.s32.f32 %v946
    %v949 = vcvt.s32.f32 %v947
    %950 = vmin.xlane.f32.xlu0 %v949
    %v951 = vpop.xlane.xlu0 %950
    %vm952 = vcmp.eq.f32.partialorder %v949, %v951
    %v953 = vsel %vm952, %v948, inf
    %954 = vmin.xlane.f32.xlu0 %v953
    %v955 = vpop.xlane.xlu0 %954
    %v956 = vcvt.f32.s32 %v955
    %v957 = vcvt.f32.s32 %v951
    %v958 = vshll.u32 %v957, 16
    %v959 = vadd.s32 %v958, %v956
    %v960 = vand.u32 %v629, 65535
    %v961 = vshra.s32 %v629, 16
    %v962 = vcvt.s32.f32 %v960
    %v963 = vcvt.s32.f32 %v961
    %964 = vmin.xlane.f32.xlu0 %v963
    %v965 = vpop.xlane.xlu0 %964
    %vm966 = vcmp.eq.f32.partialorder %v963, %v965
    %v967 = vsel %vm966, %v962, inf
    %968 = vmin.xlane.f32.xlu0 %v967
    %v969 = vpop.xlane.xlu0 %968
    %v970 = vcvt.f32.s32 %v969
    %v971 = vcvt.f32.s32 %v965
    %v972 = vshll.u32 %v971, 16
    %v973 = vadd.s32 %v972, %v970
    %v974 = vand.u32 %v630, 65535
    %v975 = vshra.s32 %v630, 16
    %v976 = vcvt.s32.f32 %v974
    %v977 = vcvt.s32.f32 %v975
    %978 = vmin.xlane.f32.xlu0 %v977
    %v979 = vpop.xlane.xlu0 %978
    %vm980 = vcmp.eq.f32.partialorder %v977, %v979
    %v981 = vsel %vm980, %v976, inf
    %982 = vmin.xlane.f32.xlu0 %v981
    %v983 = vpop.xlane.xlu0 %982
    %v984 = vcvt.f32.s32 %v983
    %v985 = vcvt.f32.s32 %v979
    %v986 = vshll.u32 %v985, 16
    %v987 = vadd.s32 %v986, %v984
    %v988 = vand.u32 %v631, 65535
    %v989 = vshra.s32 %v631, 16
    %v990 = vcvt.s32.f32 %v988
    %v991 = vcvt.s32.f32 %v989
    %992 = vmin.xlane.f32.xlu0 %v991
    %v993 = vpop.xlane.xlu0 %992
    %vm994 = vcmp.eq.f32.partialorder %v991, %v993
    %v995 = vsel %vm994, %v990, inf
    %996 = vmin.xlane.f32.xlu0 %v995
    %v997 = vpop.xlane.xlu0 %996
    %v998 = vcvt.f32.s32 %v997
    %v999 = vcvt.f32.s32 %v993
    %v1000 = vshll.u32 %v999, 16
    %v1001 = vadd.s32 %v1000, %v998
    %v1002 = vand.u32 %v632, 65535
    %v1003 = vshra.s32 %v632, 16
    %v1004 = vcvt.s32.f32 %v1002
    %v1005 = vcvt.s32.f32 %v1003
    %1006 = vmin.xlane.f32.xlu0 %v1005
    %v1007 = vpop.xlane.xlu0 %1006
    %vm1008 = vcmp.eq.f32.partialorder %v1005, %v1007
    %v1009 = vsel %vm1008, %v1004, inf
    %1010 = vmin.xlane.f32.xlu0 %v1009
    %v1011 = vpop.xlane.xlu0 %1010
    %v1012 = vcvt.f32.s32 %v1011
    %v1013 = vcvt.f32.s32 %v1007
    %v1014 = vshll.u32 %v1013, 16
    %v1015 = vadd.s32 %v1014, %v1012
    %v1016 = vand.u32 %v633, 65535
    %v1017 = vshra.s32 %v633, 16
    %v1018 = vcvt.s32.f32 %v1016
    %v1019 = vcvt.s32.f32 %v1017
    %1020 = vmin.xlane.f32.xlu0 %v1019
    %v1021 = vpop.xlane.xlu0 %1020
    %vm1022 = vcmp.eq.f32.partialorder %v1019, %v1021
    %v1023 = vsel %vm1022, %v1018, inf
    %1024 = vmin.xlane.f32.xlu0 %v1023
    %v1025 = vpop.xlane.xlu0 %1024
    %v1026 = vcvt.f32.s32 %v1025
    %v1027 = vcvt.f32.s32 %v1021
    %v1028 = vshll.u32 %v1027, 16
    %v1029 = vadd.s32 %v1028, %v1026
    %v1030 = vand.u32 %v634, 65535
    %v1031 = vshra.s32 %v634, 16
    %v1032 = vcvt.s32.f32 %v1030
    %v1033 = vcvt.s32.f32 %v1031
    %1034 = vmin.xlane.f32.xlu0 %v1033
    %v1035 = vpop.xlane.xlu0 %1034
    %vm1036 = vcmp.eq.f32.partialorder %v1033, %v1035
    %v1037 = vsel %vm1036, %v1032, inf
    %1038 = vmin.xlane.f32.xlu0 %v1037
    %v1039 = vpop.xlane.xlu0 %1038
    %v1040 = vcvt.f32.s32 %v1039
    %v1041 = vcvt.f32.s32 %v1035
    %v1042 = vshll.u32 %v1041, 16
    %v1043 = vadd.s32 %v1042, %v1040
    %v1044 = vand.u32 %v635, 65535
    %v1045 = vshra.s32 %v635, 16
    %v1046 = vcvt.s32.f32 %v1044
    %v1047 = vcvt.s32.f32 %v1045
    %1048 = vmin.xlane.f32.xlu0 %v1047
    %v1049 = vpop.xlane.xlu0 %1048
    %vm1050 = vcmp.eq.f32.partialorder %v1047, %v1049
    %v1051 = vsel %vm1050, %v1046, inf
    %1052 = vmin.xlane.f32.xlu0 %v1051
    %v1053 = vpop.xlane.xlu0 %1052
    %v1054 = vcvt.f32.s32 %v1053
    %v1055 = vcvt.f32.s32 %v1049
    %v1056 = vshll.u32 %v1055, 16
    %v1057 = vadd.s32 %v1056, %v1054
    %v1058 = vand.u32 %v636, 65535
    %v1059 = vshra.s32 %v636, 16
    %v1060 = vcvt.s32.f32 %v1058
    %v1061 = vcvt.s32.f32 %v1059
    %1062 = vmin.xlane.f32.xlu0 %v1061
    %v1063 = vpop.xlane.xlu0 %1062
    %vm1064 = vcmp.eq.f32.partialorder %v1061, %v1063
    %v1065 = vsel %vm1064, %v1060, inf
    %1066 = vmin.xlane.f32.xlu0 %v1065
    %v1067 = vpop.xlane.xlu0 %1066
    %v1068 = vcvt.f32.s32 %v1067
    %v1069 = vcvt.f32.s32 %v1063
    %v1070 = vshll.u32 %v1069, 16
    %v1071 = vadd.s32 %v1070, %v1068
    %v1072 = vand.u32 %v637, 65535
    %v1073 = vshra.s32 %v637, 16
    %v1074 = vcvt.s32.f32 %v1072
    %v1075 = vcvt.s32.f32 %v1073
    %1076 = vmin.xlane.f32.xlu0 %v1075
    %v1077 = vpop.xlane.xlu0 %1076
    %vm1078 = vcmp.eq.f32.partialorder %v1075, %v1077
    %v1079 = vsel %vm1078, %v1074, inf
    %1080 = vmin.xlane.f32.xlu0 %v1079
    %v1081 = vpop.xlane.xlu0 %1080
    %v1082 = vcvt.f32.s32 %v1081
    %v1083 = vcvt.f32.s32 %v1077
    %v1084 = vshll.u32 %v1083, 16
    %v1085 = vadd.s32 %v1084, %v1082
    %v1086 = vlaneseq
    %v1087 = vshrl.u32 %v1086, 7
    %v1088 = vsub.s32 0, %v1087
    %v1089 = vrot.slane %v651, %v1088
    %v1090 = vlaneseq
    %v1091 = vshrl.u32 %v1090, 7
    %v1092 = vsub.s32 1, %v1091
    %v1093 = vrot.slane %v651, %v1092
    %v1094 = vlaneseq
    %v1095 = vshrl.u32 %v1094, 7
    %v1096 = vsub.s32 2, %v1095
    %v1097 = vrot.slane %v651, %v1096
    %v1098 = vlaneseq
    %v1099 = vshrl.u32 %v1098, 7
    %v1100 = vsub.s32 3, %v1099
    %v1101 = vrot.slane %v651, %v1100
    %v1102 = vlaneseq
    %v1103 = vshrl.u32 %v1102, 7
    %v1104 = vsub.s32 4, %v1103
    %v1105 = vrot.slane %v651, %v1104
    %v1106 = vlaneseq
    %v1107 = vshrl.u32 %v1106, 7
    %v1108 = vsub.s32 5, %v1107
    %v1109 = vrot.slane %v651, %v1108
    %v1110 = vlaneseq
    %v1111 = vshrl.u32 %v1110, 7
    %v1112 = vsub.s32 6, %v1111
    %v1113 = vrot.slane %v651, %v1112
    %v1114 = vlaneseq
    %v1115 = vshrl.u32 %v1114, 7
    %v1116 = vsub.s32 7, %v1115
    %v1117 = vrot.slane %v651, %v1116
    %v1118 = vlaneseq
    %v1119 = vshrl.u32 %v1118, 7
    %v1120 = vsub.s32 0, %v1119
    %v1121 = vrot.slane %v665, %v1120
    %v1122 = vlaneseq
    %v1123 = vshrl.u32 %v1122, 7
    %v1124 = vsub.s32 1, %v1123
    %v1125 = vrot.slane %v665, %v1124
    %v1126 = vlaneseq
    %v1127 = vshrl.u32 %v1126, 7
    %v1128 = vsub.s32 2, %v1127
    %v1129 = vrot.slane %v665, %v1128
    %v1130 = vlaneseq
    %v1131 = vshrl.u32 %v1130, 7
    %v1132 = vsub.s32 3, %v1131
    %v1133 = vrot.slane %v665, %v1132
    %v1134 = vlaneseq
    %v1135 = vshrl.u32 %v1134, 7
    %v1136 = vsub.s32 4, %v1135
    %v1137 = vrot.slane %v665, %v1136
    %v1138 = vlaneseq
    %v1139 = vshrl.u32 %v1138, 7
    %v1140 = vsub.s32 5, %v1139
    %v1141 = vrot.slane %v665, %v1140
    %v1142 = vlaneseq
    %v1143 = vshrl.u32 %v1142, 7
    %v1144 = vsub.s32 6, %v1143
    %v1145 = vrot.slane %v665, %v1144
    %v1146 = vlaneseq
    %v1147 = vshrl.u32 %v1146, 7
    %v1148 = vsub.s32 7, %v1147
    %v1149 = vrot.slane %v665, %v1148
    %v1150 = vlaneseq
    %v1151 = vshrl.u32 %v1150, 7
    %v1152 = vsub.s32 0, %v1151
    %v1153 = vrot.slane %v679, %v1152
    %v1154 = vlaneseq
    %v1155 = vshrl.u32 %v1154, 7
    %v1156 = vsub.s32 1, %v1155
    %v1157 = vrot.slane %v679, %v1156
    %v1158 = vlaneseq
    %v1159 = vshrl.u32 %v1158, 7
    %v1160 = vsub.s32 2, %v1159
    %v1161 = vrot.slane %v679, %v1160
    %v1162 = vlaneseq
    %v1163 = vshrl.u32 %v1162, 7
    %v1164 = vsub.s32 3, %v1163
    %v1165 = vrot.slane %v679, %v1164
    %v1166 = vlaneseq
    %v1167 = vshrl.u32 %v1166, 7
    %v1168 = vsub.s32 4, %v1167
    %v1169 = vrot.slane %v679, %v1168
    %v1170 = vlaneseq
    %v1171 = vshrl.u32 %v1170, 7
    %v1172 = vsub.s32 5, %v1171
    %v1173 = vrot.slane %v679, %v1172
    %v1174 = vlaneseq
    %v1175 = vshrl.u32 %v1174, 7
    %v1176 = vsub.s32 6, %v1175
    %v1177 = vrot.slane %v679, %v1176
    %v1178 = vlaneseq
    %v1179 = vshrl.u32 %v1178, 7
    %v1180 = vsub.s32 7, %v1179
    %v1181 = vrot.slane %v679, %v1180
    %v1182 = vlaneseq
    %v1183 = vshrl.u32 %v1182, 7
    %v1184 = vsub.s32 0, %v1183
    %v1185 = vrot.slane %v693, %v1184
    %v1186 = vlaneseq
    %v1187 = vshrl.u32 %v1186, 7
    %v1188 = vsub.s32 1, %v1187
    %v1189 = vrot.slane %v693, %v1188
    %v1190 = vlaneseq
    %v1191 = vshrl.u32 %v1190, 7
    %v1192 = vsub.s32 2, %v1191
    %v1193 = vrot.slane %v693, %v1192
    %v1194 = vlaneseq
    %v1195 = vshrl.u32 %v1194, 7
    %v1196 = vsub.s32 3, %v1195
    %v1197 = vrot.slane %v693, %v1196
    %v1198 = vlaneseq
    %v1199 = vshrl.u32 %v1198, 7
    %v1200 = vsub.s32 4, %v1199
    %v1201 = vrot.slane %v693, %v1200
    %v1202 = vlaneseq
    %v1203 = vshrl.u32 %v1202, 7
    %v1204 = vsub.s32 5, %v1203
    %v1205 = vrot.slane %v693, %v1204
    %v1206 = vlaneseq
    %v1207 = vshrl.u32 %v1206, 7
    %v1208 = vsub.s32 6, %v1207
    %v1209 = vrot.slane %v693, %v1208
    %v1210 = vlaneseq
    %v1211 = vshrl.u32 %v1210, 7
    %v1212 = vsub.s32 7, %v1211
    %v1213 = vrot.slane %v693, %v1212
    %v1214 = vlaneseq
    %v1215 = vshrl.u32 %v1214, 7
    %v1216 = vsub.s32 0, %v1215
    %v1217 = vrot.slane %v707, %v1216
    %v1218 = vlaneseq
    %v1219 = vshrl.u32 %v1218, 7
    %v1220 = vsub.s32 1, %v1219
    %v1221 = vrot.slane %v707, %v1220
    %v1222 = vlaneseq
    %v1223 = vshrl.u32 %v1222, 7
    %v1224 = vsub.s32 2, %v1223
    %v1225 = vrot.slane %v707, %v1224
    %v1226 = vlaneseq
    %v1227 = vshrl.u32 %v1226, 7
    %v1228 = vsub.s32 3, %v1227
    %v1229 = vrot.slane %v707, %v1228
    %v1230 = vlaneseq
    %v1231 = vshrl.u32 %v1230, 7
    %v1232 = vsub.s32 4, %v1231
    %v1233 = vrot.slane %v707, %v1232
    %v1234 = vlaneseq
    %v1235 = vshrl.u32 %v1234, 7
    %v1236 = vsub.s32 5, %v1235
    %v1237 = vrot.slane %v707, %v1236
    %v1238 = vlaneseq
    %v1239 = vshrl.u32 %v1238, 7
    %v1240 = vsub.s32 6, %v1239
    %v1241 = vrot.slane %v707, %v1240
    %v1242 = vlaneseq
    %v1243 = vshrl.u32 %v1242, 7
    %v1244 = vsub.s32 7, %v1243
    %v1245 = vrot.slane %v707, %v1244
    %v1246 = vlaneseq
    %v1247 = vshrl.u32 %v1246, 7
    %v1248 = vsub.s32 0, %v1247
    %v1249 = vrot.slane %v721, %v1248
    %v1250 = vlaneseq
    %v1251 = vshrl.u32 %v1250, 7
    %v1252 = vsub.s32 1, %v1251
    %v1253 = vrot.slane %v721, %v1252
    %v1254 = vlaneseq
    %v1255 = vshrl.u32 %v1254, 7
    %v1256 = vsub.s32 2, %v1255
    %v1257 = vrot.slane %v721, %v1256
    %v1258 = vlaneseq
    %v1259 = vshrl.u32 %v1258, 7
    %v1260 = vsub.s32 3, %v1259
    %v1261 = vrot.slane %v721, %v1260
    %v1262 = vlaneseq
    %v1263 = vshrl.u32 %v1262, 7
    %v1264 = vsub.s32 4, %v1263
    %v1265 = vrot.slane %v721, %v1264
    %v1266 = vlaneseq
    %v1267 = vshrl.u32 %v1266, 7
    %v1268 = vsub.s32 5, %v1267
    %v1269 = vrot.slane %v721, %v1268
    %v1270 = vlaneseq
    %v1271 = vshrl.u32 %v1270, 7
    %v1272 = vsub.s32 6, %v1271
    %v1273 = vrot.slane %v721, %v1272
    %v1274 = vlaneseq
    %v1275 = vshrl.u32 %v1274, 7
    %v1276 = vsub.s32 7, %v1275
    %v1277 = vrot.slane %v721, %v1276
    %v1278 = vlaneseq
    %v1279 = vshrl.u32 %v1278, 7
    %v1280 = vsub.s32 0, %v1279
    %v1281 = vrot.slane %v735, %v1280
    %v1282 = vlaneseq
    %v1283 = vshrl.u32 %v1282, 7
    %v1284 = vsub.s32 1, %v1283
    %v1285 = vrot.slane %v735, %v1284
    %v1286 = vlaneseq
    %v1287 = vshrl.u32 %v1286, 7
    %v1288 = vsub.s32 2, %v1287
    %v1289 = vrot.slane %v735, %v1288
    %v1290 = vlaneseq
    %v1291 = vshrl.u32 %v1290, 7
    %v1292 = vsub.s32 3, %v1291
    %v1293 = vrot.slane %v735, %v1292
    %v1294 = vlaneseq
    %v1295 = vshrl.u32 %v1294, 7
    %v1296 = vsub.s32 4, %v1295
    %v1297 = vrot.slane %v735, %v1296
    %v1298 = vlaneseq
    %v1299 = vshrl.u32 %v1298, 7
    %v1300 = vsub.s32 5, %v1299
    %v1301 = vrot.slane %v735, %v1300
    %v1302 = vlaneseq
    %v1303 = vshrl.u32 %v1302, 7
    %v1304 = vsub.s32 6, %v1303
    %v1305 = vrot.slane %v735, %v1304
    %v1306 = vlaneseq
    %v1307 = vshrl.u32 %v1306, 7
    %v1308 = vsub.s32 7, %v1307
    %v1309 = vrot.slane %v735, %v1308
    %v1310 = vlaneseq
    %v1311 = vshrl.u32 %v1310, 7
    %v1312 = vsub.s32 0, %v1311
    %v1313 = vrot.slane %v749, %v1312
    %v1314 = vlaneseq
    %v1315 = vshrl.u32 %v1314, 7
    %v1316 = vsub.s32 1, %v1315
    %v1317 = vrot.slane %v749, %v1316
    %v1318 = vlaneseq
    %v1319 = vshrl.u32 %v1318, 7
    %v1320 = vsub.s32 2, %v1319
    %v1321 = vrot.slane %v749, %v1320
    %v1322 = vlaneseq
    %v1323 = vshrl.u32 %v1322, 7
    %v1324 = vsub.s32 3, %v1323
    %v1325 = vrot.slane %v749, %v1324
    %v1326 = vlaneseq
    %v1327 = vshrl.u32 %v1326, 7
    %v1328 = vsub.s32 4, %v1327
    %v1329 = vrot.slane %v749, %v1328
    %v1330 = vlaneseq
    %v1331 = vshrl.u32 %v1330, 7
    %v1332 = vsub.s32 5, %v1331
    %v1333 = vrot.slane %v749, %v1332
    %v1334 = vlaneseq
    %v1335 = vshrl.u32 %v1334, 7
    %v1336 = vsub.s32 6, %v1335
    %v1337 = vrot.slane %v749, %v1336
    %v1338 = vlaneseq
    %v1339 = vshrl.u32 %v1338, 7
    %v1340 = vsub.s32 7, %v1339
    %v1341 = vrot.slane %v749, %v1340
    %v1342 = vlaneseq
    %v1343 = vshrl.u32 %v1342, 7
    %v1344 = vsub.s32 0, %v1343
    %v1345 = vrot.slane %v763, %v1344
    %v1346 = vlaneseq
    %v1347 = vshrl.u32 %v1346, 7
    %v1348 = vsub.s32 1, %v1347
    %v1349 = vrot.slane %v763, %v1348
    %v1350 = vlaneseq
    %v1351 = vshrl.u32 %v1350, 7
    %v1352 = vsub.s32 2, %v1351
    %v1353 = vrot.slane %v763, %v1352
    %v1354 = vlaneseq
    %v1355 = vshrl.u32 %v1354, 7
    %v1356 = vsub.s32 3, %v1355
    %v1357 = vrot.slane %v763, %v1356
    %v1358 = vlaneseq
    %v1359 = vshrl.u32 %v1358, 7
    %v1360 = vsub.s32 4, %v1359
    %v1361 = vrot.slane %v763, %v1360
    %v1362 = vlaneseq
    %v1363 = vshrl.u32 %v1362, 7
    %v1364 = vsub.s32 5, %v1363
    %v1365 = vrot.slane %v763, %v1364
    %v1366 = vlaneseq
    %v1367 = vshrl.u32 %v1366, 7
    %v1368 = vsub.s32 6, %v1367
    %v1369 = vrot.slane %v763, %v1368
    %v1370 = vlaneseq
    %v1371 = vshrl.u32 %v1370, 7
    %v1372 = vsub.s32 7, %v1371
    %v1373 = vrot.slane %v763, %v1372
    %v1374 = vlaneseq
    %v1375 = vshrl.u32 %v1374, 7
    %v1376 = vsub.s32 0, %v1375
    %v1377 = vrot.slane %v777, %v1376
    %v1378 = vlaneseq
    %v1379 = vshrl.u32 %v1378, 7
    %v1380 = vsub.s32 1, %v1379
    %v1381 = vrot.slane %v777, %v1380
    %v1382 = vlaneseq
    %v1383 = vshrl.u32 %v1382, 7
    %v1384 = vsub.s32 2, %v1383
    %v1385 = vrot.slane %v777, %v1384
    %v1386 = vlaneseq
    %v1387 = vshrl.u32 %v1386, 7
    %v1388 = vsub.s32 3, %v1387
    %v1389 = vrot.slane %v777, %v1388
    %v1390 = vlaneseq
    %v1391 = vshrl.u32 %v1390, 7
    %v1392 = vsub.s32 4, %v1391
    %v1393 = vrot.slane %v777, %v1392
    %v1394 = vlaneseq
    %v1395 = vshrl.u32 %v1394, 7
    %v1396 = vsub.s32 5, %v1395
    %v1397 = vrot.slane %v777, %v1396
    %v1398 = vlaneseq
    %v1399 = vshrl.u32 %v1398, 7
    %v1400 = vsub.s32 6, %v1399
    %v1401 = vrot.slane %v777, %v1400
    %v1402 = vlaneseq
    %v1403 = vshrl.u32 %v1402, 7
    %v1404 = vsub.s32 7, %v1403
    %v1405 = vrot.slane %v777, %v1404
    %v1406 = vlaneseq
    %v1407 = vshrl.u32 %v1406, 7
    %v1408 = vsub.s32 0, %v1407
    %v1409 = vrot.slane %v791, %v1408
    %v1410 = vlaneseq
    %v1411 = vshrl.u32 %v1410, 7
    %v1412 = vsub.s32 1, %v1411
    %v1413 = vrot.slane %v791, %v1412
    %v1414 = vlaneseq
    %v1415 = vshrl.u32 %v1414, 7
    %v1416 = vsub.s32 2, %v1415
    %v1417 = vrot.slane %v791, %v1416
    %v1418 = vlaneseq
    %v1419 = vshrl.u32 %v1418, 7
    %v1420 = vsub.s32 3, %v1419
    %v1421 = vrot.slane %v791, %v1420
    %v1422 = vlaneseq
    %v1423 = vshrl.u32 %v1422, 7
    %v1424 = vsub.s32 4, %v1423
    %v1425 = vrot.slane %v791, %v1424
    %v1426 = vlaneseq
    %v1427 = vshrl.u32 %v1426, 7
    %v1428 = vsub.s32 5, %v1427
    %v1429 = vrot.slane %v791, %v1428
    %v1430 = vlaneseq
    %v1431 = vshrl.u32 %v1430, 7
    %v1432 = vsub.s32 6, %v1431
    %v1433 = vrot.slane %v791, %v1432
    %v1434 = vlaneseq
    %v1435 = vshrl.u32 %v1434, 7
    %v1436 = vsub.s32 7, %v1435
    %v1437 = vrot.slane %v791, %v1436
    %v1438 = vlaneseq
    %v1439 = vshrl.u32 %v1438, 7
    %v1440 = vsub.s32 0, %v1439
    %v1441 = vrot.slane %v805, %v1440
    %v1442 = vlaneseq
    %v1443 = vshrl.u32 %v1442, 7
    %v1444 = vsub.s32 1, %v1443
    %v1445 = vrot.slane %v805, %v1444
    %v1446 = vlaneseq
    %v1447 = vshrl.u32 %v1446, 7
    %v1448 = vsub.s32 2, %v1447
    %v1449 = vrot.slane %v805, %v1448
    %v1450 = vlaneseq
    %v1451 = vshrl.u32 %v1450, 7
    %v1452 = vsub.s32 3, %v1451
    %v1453 = vrot.slane %v805, %v1452
    %v1454 = vlaneseq
    %v1455 = vshrl.u32 %v1454, 7
    %v1456 = vsub.s32 4, %v1455
    %v1457 = vrot.slane %v805, %v1456
    %v1458 = vlaneseq
    %v1459 = vshrl.u32 %v1458, 7
    %v1460 = vsub.s32 5, %v1459
    %v1461 = vrot.slane %v805, %v1460
    %v1462 = vlaneseq
    %v1463 = vshrl.u32 %v1462, 7
    %v1464 = vsub.s32 6, %v1463
    %v1465 = vrot.slane %v805, %v1464
    %v1466 = vlaneseq
    %v1467 = vshrl.u32 %v1466, 7
    %v1468 = vsub.s32 7, %v1467
    %v1469 = vrot.slane %v805, %v1468
    %v1470 = vlaneseq
    %v1471 = vshrl.u32 %v1470, 7
    %v1472 = vsub.s32 0, %v1471
    %v1473 = vrot.slane %v819, %v1472
    %v1474 = vlaneseq
    %v1475 = vshrl.u32 %v1474, 7
    %v1476 = vsub.s32 1, %v1475
    %v1477 = vrot.slane %v819, %v1476
    %v1478 = vlaneseq
    %v1479 = vshrl.u32 %v1478, 7
    %v1480 = vsub.s32 2, %v1479
    %v1481 = vrot.slane %v819, %v1480
    %v1482 = vlaneseq
    %v1483 = vshrl.u32 %v1482, 7
    %v1484 = vsub.s32 3, %v1483
    %v1485 = vrot.slane %v819, %v1484
    %v1486 = vlaneseq
    %v1487 = vshrl.u32 %v1486, 7
    %v1488 = vsub.s32 4, %v1487
    %v1489 = vrot.slane %v819, %v1488
    %v1490 = vlaneseq
    %v1491 = vshrl.u32 %v1490, 7
    %v1492 = vsub.s32 5, %v1491
    %v1493 = vrot.slane %v819, %v1492
    %v1494 = vlaneseq
    %v1495 = vshrl.u32 %v1494, 7
    %v1496 = vsub.s32 6, %v1495
    %v1497 = vrot.slane %v819, %v1496
    %v1498 = vlaneseq
    %v1499 = vshrl.u32 %v1498, 7
    %v1500 = vsub.s32 7, %v1499
    %v1501 = vrot.slane %v819, %v1500
    %v1502 = vlaneseq
    %v1503 = vshrl.u32 %v1502, 7
    %v1504 = vsub.s32 0, %v1503
    %v1505 = vrot.slane %v833, %v1504
    %v1506 = vlaneseq
    %v1507 = vshrl.u32 %v1506, 7
    %v1508 = vsub.s32 1, %v1507
    %v1509 = vrot.slane %v833, %v1508
    %v1510 = vlaneseq
    %v1511 = vshrl.u32 %v1510, 7
    %v1512 = vsub.s32 2, %v1511
    %v1513 = vrot.slane %v833, %v1512
    %v1514 = vlaneseq
    %v1515 = vshrl.u32 %v1514, 7
    %v1516 = vsub.s32 3, %v1515
    %v1517 = vrot.slane %v833, %v1516
    %v1518 = vlaneseq
    %v1519 = vshrl.u32 %v1518, 7
    %v1520 = vsub.s32 4, %v1519
    %v1521 = vrot.slane %v833, %v1520
    %v1522 = vlaneseq
    %v1523 = vshrl.u32 %v1522, 7
    %v1524 = vsub.s32 5, %v1523
    %v1525 = vrot.slane %v833, %v1524
    %v1526 = vlaneseq
    %v1527 = vshrl.u32 %v1526, 7
    %v1528 = vsub.s32 6, %v1527
    %v1529 = vrot.slane %v833, %v1528
    %v1530 = vlaneseq
    %v1531 = vshrl.u32 %v1530, 7
    %v1532 = vsub.s32 7, %v1531
    %v1533 = vrot.slane %v833, %v1532
    %v1534 = vlaneseq
    %v1535 = vshrl.u32 %v1534, 7
    %v1536 = vsub.s32 0, %v1535
    %v1537 = vrot.slane %v847, %v1536
    %v1538 = vlaneseq
    %v1539 = vshrl.u32 %v1538, 7
    %v1540 = vsub.s32 1, %v1539
    %v1541 = vrot.slane %v847, %v1540
    %v1542 = vlaneseq
    %v1543 = vshrl.u32 %v1542, 7
    %v1544 = vsub.s32 2, %v1543
    %v1545 = vrot.slane %v847, %v1544
    %v1546 = vlaneseq
    %v1547 = vshrl.u32 %v1546, 7
    %v1548 = vsub.s32 3, %v1547
    %v1549 = vrot.slane %v847, %v1548
    %v1550 = vlaneseq
    %v1551 = vshrl.u32 %v1550, 7
    %v1552 = vsub.s32 4, %v1551
    %v1553 = vrot.slane %v847, %v1552
    %v1554 = vlaneseq
    %v1555 = vshrl.u32 %v1554, 7
    %v1556 = vsub.s32 5, %v1555
    %v1557 = vrot.slane %v847, %v1556
    %v1558 = vlaneseq
    %v1559 = vshrl.u32 %v1558, 7
    %v1560 = vsub.s32 6, %v1559
    %v1561 = vrot.slane %v847, %v1560
    %v1562 = vlaneseq
    %v1563 = vshrl.u32 %v1562, 7
    %v1564 = vsub.s32 7, %v1563
    %v1565 = vrot.slane %v847, %v1564
    %v1566 = vlaneseq
    %v1567 = vshrl.u32 %v1566, 7
    %v1568 = vsub.s32 0, %v1567
    %v1569 = vrot.slane %v861, %v1568
    %v1570 = vlaneseq
    %v1571 = vshrl.u32 %v1570, 7
    %v1572 = vsub.s32 1, %v1571
    %v1573 = vrot.slane %v861, %v1572
    %v1574 = vlaneseq
    %v1575 = vshrl.u32 %v1574, 7
    %v1576 = vsub.s32 2, %v1575
    %v1577 = vrot.slane %v861, %v1576
    %v1578 = vlaneseq
    %v1579 = vshrl.u32 %v1578, 7
    %v1580 = vsub.s32 3, %v1579
    %v1581 = vrot.slane %v861, %v1580
    %v1582 = vlaneseq
    %v1583 = vshrl.u32 %v1582, 7
    %v1584 = vsub.s32 4, %v1583
    %v1585 = vrot.slane %v861, %v1584
    %v1586 = vlaneseq
    %v1587 = vshrl.u32 %v1586, 7
    %v1588 = vsub.s32 5, %v1587
    %v1589 = vrot.slane %v861, %v1588
    %v1590 = vlaneseq
    %v1591 = vshrl.u32 %v1590, 7
    %v1592 = vsub.s32 6, %v1591
    %v1593 = vrot.slane %v861, %v1592
    %v1594 = vlaneseq
    %v1595 = vshrl.u32 %v1594, 7
    %v1596 = vsub.s32 7, %v1595
    %v1597 = vrot.slane %v861, %v1596
    %v1598 = vlaneseq
    %v1599 = vshrl.u32 %v1598, 7
    %v1600 = vsub.s32 0, %v1599
    %v1601 = vrot.slane %v875, %v1600
    %v1602 = vlaneseq
    %v1603 = vshrl.u32 %v1602, 7
    %v1604 = vsub.s32 1, %v1603
    %v1605 = vrot.slane %v875, %v1604
    %v1606 = vlaneseq
    %v1607 = vshrl.u32 %v1606, 7
    %v1608 = vsub.s32 2, %v1607
    %v1609 = vrot.slane %v875, %v1608
    %v1610 = vlaneseq
    %v1611 = vshrl.u32 %v1610, 7
    %v1612 = vsub.s32 3, %v1611
    %v1613 = vrot.slane %v875, %v1612
    %v1614 = vlaneseq
    %v1615 = vshrl.u32 %v1614, 7
    %v1616 = vsub.s32 4, %v1615
    %v1617 = vrot.slane %v875, %v1616
    %v1618 = vlaneseq
    %v1619 = vshrl.u32 %v1618, 7
    %v1620 = vsub.s32 5, %v1619
    %v1621 = vrot.slane %v875, %v1620
    %v1622 = vlaneseq
    %v1623 = vshrl.u32 %v1622, 7
    %v1624 = vsub.s32 6, %v1623
    %v1625 = vrot.slane %v875, %v1624
    %v1626 = vlaneseq
    %v1627 = vshrl.u32 %v1626, 7
    %v1628 = vsub.s32 7, %v1627
    %v1629 = vrot.slane %v875, %v1628
    %v1630 = vlaneseq
    %v1631 = vshrl.u32 %v1630, 7
    %v1632 = vsub.s32 0, %v1631
    %v1633 = vrot.slane %v889, %v1632
    %v1634 = vlaneseq
    %v1635 = vshrl.u32 %v1634, 7
    %v1636 = vsub.s32 1, %v1635
    %v1637 = vrot.slane %v889, %v1636
    %v1638 = vlaneseq
    %v1639 = vshrl.u32 %v1638, 7
    %v1640 = vsub.s32 2, %v1639
    %v1641 = vrot.slane %v889, %v1640
    %v1642 = vlaneseq
    %v1643 = vshrl.u32 %v1642, 7
    %v1644 = vsub.s32 3, %v1643
    %v1645 = vrot.slane %v889, %v1644
    %v1646 = vlaneseq
    %v1647 = vshrl.u32 %v1646, 7
    %v1648 = vsub.s32 4, %v1647
    %v1649 = vrot.slane %v889, %v1648
    %v1650 = vlaneseq
    %v1651 = vshrl.u32 %v1650, 7
    %v1652 = vsub.s32 5, %v1651
    %v1653 = vrot.slane %v889, %v1652
    %v1654 = vlaneseq
    %v1655 = vshrl.u32 %v1654, 7
    %v1656 = vsub.s32 6, %v1655
    %v1657 = vrot.slane %v889, %v1656
    %v1658 = vlaneseq
    %v1659 = vshrl.u32 %v1658, 7
    %v1660 = vsub.s32 7, %v1659
    %v1661 = vrot.slane %v889, %v1660
    %v1662 = vlaneseq
    %v1663 = vshrl.u32 %v1662, 7
    %v1664 = vsub.s32 0, %v1663
    %v1665 = vrot.slane %v903, %v1664
    %v1666 = vlaneseq
    %v1667 = vshrl.u32 %v1666, 7
    %v1668 = vsub.s32 1, %v1667
    %v1669 = vrot.slane %v903, %v1668
    %v1670 = vlaneseq
    %v1671 = vshrl.u32 %v1670, 7
    %v1672 = vsub.s32 2, %v1671
    %v1673 = vrot.slane %v903, %v1672
    %v1674 = vlaneseq
    %v1675 = vshrl.u32 %v1674, 7
    %v1676 = vsub.s32 3, %v1675
    %v1677 = vrot.slane %v903, %v1676
    %v1678 = vlaneseq
    %v1679 = vshrl.u32 %v1678, 7
    %v1680 = vsub.s32 4, %v1679
    %v1681 = vrot.slane %v903, %v1680
    %v1682 = vlaneseq
    %v1683 = vshrl.u32 %v1682, 7
    %v1684 = vsub.s32 5, %v1683
    %v1685 = vrot.slane %v903, %v1684
    %v1686 = vlaneseq
    %v1687 = vshrl.u32 %v1686, 7
    %v1688 = vsub.s32 6, %v1687
    %v1689 = vrot.slane %v903, %v1688
    %v1690 = vlaneseq
    %v1691 = vshrl.u32 %v1690, 7
    %v1692 = vsub.s32 7, %v1691
    %v1693 = vrot.slane %v903, %v1692
    %v1694 = vlaneseq
    %v1695 = vshrl.u32 %v1694, 7
    %v1696 = vsub.s32 0, %v1695
    %v1697 = vrot.slane %v917, %v1696
    %v1698 = vlaneseq
    %v1699 = vshrl.u32 %v1698, 7
    %v1700 = vsub.s32 1, %v1699
    %v1701 = vrot.slane %v917, %v1700
    %v1702 = vlaneseq
    %v1703 = vshrl.u32 %v1702, 7
    %v1704 = vsub.s32 2, %v1703
    %v1705 = vrot.slane %v917, %v1704
    %v1706 = vlaneseq
    %v1707 = vshrl.u32 %v1706, 7
    %v1708 = vsub.s32 3, %v1707
    %v1709 = vrot.slane %v917, %v1708
    %v1710 = vlaneseq
    %v1711 = vshrl.u32 %v1710, 7
    %v1712 = vsub.s32 4, %v1711
    %v1713 = vrot.slane %v917, %v1712
    %v1714 = vlaneseq
    %v1715 = vshrl.u32 %v1714, 7
    %v1716 = vsub.s32 5, %v1715
    %v1717 = vrot.slane %v917, %v1716
    %v1718 = vlaneseq
    %v1719 = vshrl.u32 %v1718, 7
    %v1720 = vsub.s32 6, %v1719
    %v1721 = vrot.slane %v917, %v1720
    %v1722 = vlaneseq
    %v1723 = vshrl.u32 %v1722, 7
    %v1724 = vsub.s32 7, %v1723
    %v1725 = vrot.slane %v917, %v1724
    %v1726 = vlaneseq
    %v1727 = vshrl.u32 %v1726, 7
    %v1728 = vsub.s32 0, %v1727
    %v1729 = vrot.slane %v931, %v1728
    %v1730 = vlaneseq
    %v1731 = vshrl.u32 %v1730, 7
    %v1732 = vsub.s32 1, %v1731
    %v1733 = vrot.slane %v931, %v1732
    %v1734 = vlaneseq
    %v1735 = vshrl.u32 %v1734, 7
    %v1736 = vsub.s32 2, %v1735
    %v1737 = vrot.slane %v931, %v1736
    %v1738 = vlaneseq
    %v1739 = vshrl.u32 %v1738, 7
    %v1740 = vsub.s32 3, %v1739
    %v1741 = vrot.slane %v931, %v1740
    %v1742 = vlaneseq
    %v1743 = vshrl.u32 %v1742, 7
    %v1744 = vsub.s32 4, %v1743
    %v1745 = vrot.slane %v931, %v1744
    %v1746 = vlaneseq
    %v1747 = vshrl.u32 %v1746, 7
    %v1748 = vsub.s32 5, %v1747
    %v1749 = vrot.slane %v931, %v1748
    %v1750 = vlaneseq
    %v1751 = vshrl.u32 %v1750, 7
    %v1752 = vsub.s32 6, %v1751
    %v1753 = vrot.slane %v931, %v1752
    %v1754 = vlaneseq
    %v1755 = vshrl.u32 %v1754, 7
    %v1756 = vsub.s32 7, %v1755
    %v1757 = vrot.slane %v931, %v1756
    %v1758 = vlaneseq
    %v1759 = vshrl.u32 %v1758, 7
    %v1760 = vsub.s32 0, %v1759
    %v1761 = vrot.slane %v945, %v1760
    %v1762 = vlaneseq
    %v1763 = vshrl.u32 %v1762, 7
    %v1764 = vsub.s32 1, %v1763
    %v1765 = vrot.slane %v945, %v1764
    %v1766 = vlaneseq
    %v1767 = vshrl.u32 %v1766, 7
    %v1768 = vsub.s32 2, %v1767
    %v1769 = vrot.slane %v945, %v1768
    %v1770 = vlaneseq
    %v1771 = vshrl.u32 %v1770, 7
    %v1772 = vsub.s32 3, %v1771
    %v1773 = vrot.slane %v945, %v1772
    %v1774 = vlaneseq
    %v1775 = vshrl.u32 %v1774, 7
    %v1776 = vsub.s32 4, %v1775
    %v1777 = vrot.slane %v945, %v1776
    %v1778 = vlaneseq
    %v1779 = vshrl.u32 %v1778, 7
    %v1780 = vsub.s32 5, %v1779
    %v1781 = vrot.slane %v945, %v1780
    %v1782 = vlaneseq
    %v1783 = vshrl.u32 %v1782, 7
    %v1784 = vsub.s32 6, %v1783
    %v1785 = vrot.slane %v945, %v1784
    %v1786 = vlaneseq
    %v1787 = vshrl.u32 %v1786, 7
    %v1788 = vsub.s32 7, %v1787
    %v1789 = vrot.slane %v945, %v1788
    %v1790 = vlaneseq
    %v1791 = vshrl.u32 %v1790, 7
    %v1792 = vsub.s32 0, %v1791
    %v1793 = vrot.slane %v959, %v1792
    %v1794 = vlaneseq
    %v1795 = vshrl.u32 %v1794, 7
    %v1796 = vsub.s32 1, %v1795
    %v1797 = vrot.slane %v959, %v1796
    %v1798 = vlaneseq
    %v1799 = vshrl.u32 %v1798, 7
    %v1800 = vsub.s32 2, %v1799
    %v1801 = vrot.slane %v959, %v1800
    %v1802 = vlaneseq
    %v1803 = vshrl.u32 %v1802, 7
    %v1804 = vsub.s32 3, %v1803
    %v1805 = vrot.slane %v959, %v1804
    %v1806 = vlaneseq
    %v1807 = vshrl.u32 %v1806, 7
    %v1808 = vsub.s32 4, %v1807
    %v1809 = vrot.slane %v959, %v1808
    %v1810 = vlaneseq
    %v1811 = vshrl.u32 %v1810, 7
    %v1812 = vsub.s32 5, %v1811
    %v1813 = vrot.slane %v959, %v1812
    %v1814 = vlaneseq
    %v1815 = vshrl.u32 %v1814, 7
    %v1816 = vsub.s32 6, %v1815
    %v1817 = vrot.slane %v959, %v1816
    %v1818 = vlaneseq
    %v1819 = vshrl.u32 %v1818, 7
    %v1820 = vsub.s32 7, %v1819
    %v1821 = vrot.slane %v959, %v1820
    %v1822 = vlaneseq
    %v1823 = vshrl.u32 %v1822, 7
    %v1824 = vsub.s32 0, %v1823
    %v1825 = vrot.slane %v973, %v1824
    %v1826 = vlaneseq
    %v1827 = vshrl.u32 %v1826, 7
    %v1828 = vsub.s32 1, %v1827
    %v1829 = vrot.slane %v973, %v1828
    %v1830 = vlaneseq
    %v1831 = vshrl.u32 %v1830, 7
    %v1832 = vsub.s32 2, %v1831
    %v1833 = vrot.slane %v973, %v1832
    %v1834 = vlaneseq
    %v1835 = vshrl.u32 %v1834, 7
    %v1836 = vsub.s32 3, %v1835
    %v1837 = vrot.slane %v973, %v1836
    %v1838 = vlaneseq
    %v1839 = vshrl.u32 %v1838, 7
    %v1840 = vsub.s32 4, %v1839
    %v1841 = vrot.slane %v973, %v1840
    %v1842 = vlaneseq
    %v1843 = vshrl.u32 %v1842, 7
    %v1844 = vsub.s32 5, %v1843
    %v1845 = vrot.slane %v973, %v1844
    %v1846 = vlaneseq
    %v1847 = vshrl.u32 %v1846, 7
    %v1848 = vsub.s32 6, %v1847
    %v1849 = vrot.slane %v973, %v1848
    %v1850 = vlaneseq
    %v1851 = vshrl.u32 %v1850, 7
    %v1852 = vsub.s32 7, %v1851
    %v1853 = vrot.slane %v973, %v1852
    %v1854 = vlaneseq
    %v1855 = vshrl.u32 %v1854, 7
    %v1856 = vsub.s32 0, %v1855
    %v1857 = vrot.slane %v987, %v1856
    %v1858 = vlaneseq
    %v1859 = vshrl.u32 %v1858, 7
    %v1860 = vsub.s32 1, %v1859
    %v1861 = vrot.slane %v987, %v1860
    %v1862 = vlaneseq
    %v1863 = vshrl.u32 %v1862, 7
    %v1864 = vsub.s32 2, %v1863
    %v1865 = vrot.slane %v987, %v1864
    %v1866 = vlaneseq
    %v1867 = vshrl.u32 %v1866, 7
    %v1868 = vsub.s32 3, %v1867
    %v1869 = vrot.slane %v987, %v1868
    %v1870 = vlaneseq
    %v1871 = vshrl.u32 %v1870, 7
    %v1872 = vsub.s32 4, %v1871
    %v1873 = vrot.slane %v987, %v1872
    %v1874 = vlaneseq
    %v1875 = vshrl.u32 %v1874, 7
    %v1876 = vsub.s32 5, %v1875
    %v1877 = vrot.slane %v987, %v1876
    %v1878 = vlaneseq
    %v1879 = vshrl.u32 %v1878, 7
    %v1880 = vsub.s32 6, %v1879
    %v1881 = vrot.slane %v987, %v1880
    %v1882 = vlaneseq
    %v1883 = vshrl.u32 %v1882, 7
    %v1884 = vsub.s32 7, %v1883
    %v1885 = vrot.slane %v987, %v1884
    %v1886 = vlaneseq
    %v1887 = vshrl.u32 %v1886, 7
    %v1888 = vsub.s32 0, %v1887
    %v1889 = vrot.slane %v1001, %v1888
    %v1890 = vlaneseq
    %v1891 = vshrl.u32 %v1890, 7
    %v1892 = vsub.s32 1, %v1891
    %v1893 = vrot.slane %v1001, %v1892
    %v1894 = vlaneseq
    %v1895 = vshrl.u32 %v1894, 7
    %v1896 = vsub.s32 2, %v1895
    %v1897 = vrot.slane %v1001, %v1896
    %v1898 = vlaneseq
    %v1899 = vshrl.u32 %v1898, 7
    %v1900 = vsub.s32 3, %v1899
    %v1901 = vrot.slane %v1001, %v1900
    %v1902 = vlaneseq
    %v1903 = vshrl.u32 %v1902, 7
    %v1904 = vsub.s32 4, %v1903
    %v1905 = vrot.slane %v1001, %v1904
    %v1906 = vlaneseq
    %v1907 = vshrl.u32 %v1906, 7
    %v1908 = vsub.s32 5, %v1907
    %v1909 = vrot.slane %v1001, %v1908
    %v1910 = vlaneseq
    %v1911 = vshrl.u32 %v1910, 7
    %v1912 = vsub.s32 6, %v1911
    %v1913 = vrot.slane %v1001, %v1912
    %v1914 = vlaneseq
    %v1915 = vshrl.u32 %v1914, 7
    %v1916 = vsub.s32 7, %v1915
    %v1917 = vrot.slane %v1001, %v1916
    %v1918 = vlaneseq
    %v1919 = vshrl.u32 %v1918, 7
    %v1920 = vsub.s32 0, %v1919
    %v1921 = vrot.slane %v1015, %v1920
    %v1922 = vlaneseq
    %v1923 = vshrl.u32 %v1922, 7
    %v1924 = vsub.s32 1, %v1923
    %v1925 = vrot.slane %v1015, %v1924
    %v1926 = vlaneseq
    %v1927 = vshrl.u32 %v1926, 7
    %v1928 = vsub.s32 2, %v1927
    %v1929 = vrot.slane %v1015, %v1928
    %v1930 = vlaneseq
    %v1931 = vshrl.u32 %v1930, 7
    %v1932 = vsub.s32 3, %v1931
    %v1933 = vrot.slane %v1015, %v1932
    %v1934 = vlaneseq
    %v1935 = vshrl.u32 %v1934, 7
    %v1936 = vsub.s32 4, %v1935
    %v1937 = vrot.slane %v1015, %v1936
    %v1938 = vlaneseq
    %v1939 = vshrl.u32 %v1938, 7
    %v1940 = vsub.s32 5, %v1939
    %v1941 = vrot.slane %v1015, %v1940
    %v1942 = vlaneseq
    %v1943 = vshrl.u32 %v1942, 7
    %v1944 = vsub.s32 6, %v1943
    %v1945 = vrot.slane %v1015, %v1944
    %v1946 = vlaneseq
    %v1947 = vshrl.u32 %v1946, 7
    %v1948 = vsub.s32 7, %v1947
    %v1949 = vrot.slane %v1015, %v1948
    %v1950 = vlaneseq
    %v1951 = vshrl.u32 %v1950, 7
    %v1952 = vsub.s32 0, %v1951
    %v1953 = vrot.slane %v1029, %v1952
    %v1954 = vlaneseq
    %v1955 = vshrl.u32 %v1954, 7
    %v1956 = vsub.s32 1, %v1955
    %v1957 = vrot.slane %v1029, %v1956
    %v1958 = vlaneseq
    %v1959 = vshrl.u32 %v1958, 7
    %v1960 = vsub.s32 2, %v1959
    %v1961 = vrot.slane %v1029, %v1960
    %v1962 = vlaneseq
    %v1963 = vshrl.u32 %v1962, 7
    %v1964 = vsub.s32 3, %v1963
    %v1965 = vrot.slane %v1029, %v1964
    %v1966 = vlaneseq
    %v1967 = vshrl.u32 %v1966, 7
    %v1968 = vsub.s32 4, %v1967
    %v1969 = vrot.slane %v1029, %v1968
    %v1970 = vlaneseq
    %v1971 = vshrl.u32 %v1970, 7
    %v1972 = vsub.s32 5, %v1971
    %v1973 = vrot.slane %v1029, %v1972
    %v1974 = vlaneseq
    %v1975 = vshrl.u32 %v1974, 7
    %v1976 = vsub.s32 6, %v1975
    %v1977 = vrot.slane %v1029, %v1976
    %v1978 = vlaneseq
    %v1979 = vshrl.u32 %v1978, 7
    %v1980 = vsub.s32 7, %v1979
    %v1981 = vrot.slane %v1029, %v1980
    %v1982 = vlaneseq
    %v1983 = vshrl.u32 %v1982, 7
    %v1984 = vsub.s32 0, %v1983
    %v1985 = vrot.slane %v1043, %v1984
    %v1986 = vlaneseq
    %v1987 = vshrl.u32 %v1986, 7
    %v1988 = vsub.s32 1, %v1987
    %v1989 = vrot.slane %v1043, %v1988
    %v1990 = vlaneseq
    %v1991 = vshrl.u32 %v1990, 7
    %v1992 = vsub.s32 2, %v1991
    %v1993 = vrot.slane %v1043, %v1992
    %v1994 = vlaneseq
    %v1995 = vshrl.u32 %v1994, 7
    %v1996 = vsub.s32 3, %v1995
    %v1997 = vrot.slane %v1043, %v1996
    %v1998 = vlaneseq
    %v1999 = vshrl.u32 %v1998, 7
    %v2000 = vsub.s32 4, %v1999
    %v2001 = vrot.slane %v1043, %v2000
    %v2002 = vlaneseq
    %v2003 = vshrl.u32 %v2002, 7
    %v2004 = vsub.s32 5, %v2003
    %v2005 = vrot.slane %v1043, %v2004
    %v2006 = vlaneseq
    %v2007 = vshrl.u32 %v2006, 7
    %v2008 = vsub.s32 6, %v2007
    %v2009 = vrot.slane %v1043, %v2008
    %v2010 = vlaneseq
    %v2011 = vshrl.u32 %v2010, 7
    %v2012 = vsub.s32 7, %v2011
    %v2013 = vrot.slane %v1043, %v2012
    %v2014 = vlaneseq
    %v2015 = vshrl.u32 %v2014, 7
    %v2016 = vsub.s32 0, %v2015
    %v2017 = vrot.slane %v1057, %v2016
    %v2018 = vlaneseq
    %v2019 = vshrl.u32 %v2018, 7
    %v2020 = vsub.s32 1, %v2019
    %v2021 = vrot.slane %v1057, %v2020
    %v2022 = vlaneseq
    %v2023 = vshrl.u32 %v2022, 7
    %v2024 = vsub.s32 2, %v2023
    %v2025 = vrot.slane %v1057, %v2024
    %v2026 = vlaneseq
    %v2027 = vshrl.u32 %v2026, 7
    %v2028 = vsub.s32 3, %v2027
    %v2029 = vrot.slane %v1057, %v2028
    %v2030 = vlaneseq
    %v2031 = vshrl.u32 %v2030, 7
    %v2032 = vsub.s32 4, %v2031
    %v2033 = vrot.slane %v1057, %v2032
    %v2034 = vlaneseq
    %v2035 = vshrl.u32 %v2034, 7
    %v2036 = vsub.s32 5, %v2035
    %v2037 = vrot.slane %v1057, %v2036
    %v2038 = vlaneseq
    %v2039 = vshrl.u32 %v2038, 7
    %v2040 = vsub.s32 6, %v2039
    %v2041 = vrot.slane %v1057, %v2040
    %v2042 = vlaneseq
    %v2043 = vshrl.u32 %v2042, 7
    %v2044 = vsub.s32 7, %v2043
    %v2045 = vrot.slane %v1057, %v2044
    %v2046 = vlaneseq
    %v2047 = vshrl.u32 %v2046, 7
    %v2048 = vsub.s32 0, %v2047
    %v2049 = vrot.slane %v1071, %v2048
    %v2050 = vlaneseq
    %v2051 = vshrl.u32 %v2050, 7
    %v2052 = vsub.s32 1, %v2051
    %v2053 = vrot.slane %v1071, %v2052
    %v2054 = vlaneseq
    %v2055 = vshrl.u32 %v2054, 7
    %v2056 = vsub.s32 2, %v2055
    %v2057 = vrot.slane %v1071, %v2056
    %v2058 = vlaneseq
    %v2059 = vshrl.u32 %v2058, 7
    %v2060 = vsub.s32 3, %v2059
    %v2061 = vrot.slane %v1071, %v2060
    %v2062 = vlaneseq
    %v2063 = vshrl.u32 %v2062, 7
    %v2064 = vsub.s32 4, %v2063
    %v2065 = vrot.slane %v1071, %v2064
    %v2066 = vlaneseq
    %v2067 = vshrl.u32 %v2066, 7
    %v2068 = vsub.s32 5, %v2067
    %v2069 = vrot.slane %v1071, %v2068
    %v2070 = vlaneseq
    %v2071 = vshrl.u32 %v2070, 7
    %v2072 = vsub.s32 6, %v2071
    %v2073 = vrot.slane %v1071, %v2072
    %v2074 = vlaneseq
    %v2075 = vshrl.u32 %v2074, 7
    %v2076 = vsub.s32 7, %v2075
    %v2077 = vrot.slane %v1071, %v2076
    %v2078 = vlaneseq
    %v2079 = vshrl.u32 %v2078, 7
    %v2080 = vsub.s32 0, %v2079
    %v2081 = vrot.slane %v1085, %v2080
    %v2082 = vlaneseq
    %v2083 = vshrl.u32 %v2082, 7
    %v2084 = vsub.s32 1, %v2083
    %v2085 = vrot.slane %v1085, %v2084
    %v2086 = vlaneseq
    %v2087 = vshrl.u32 %v2086, 7
    %v2088 = vsub.s32 2, %v2087
    %v2089 = vrot.slane %v1085, %v2088
    %v2090 = vlaneseq
    %v2091 = vshrl.u32 %v2090, 7
    %v2092 = vsub.s32 3, %v2091
    %v2093 = vrot.slane %v1085, %v2092
    %v2094 = vlaneseq
    %v2095 = vshrl.u32 %v2094, 7
    %v2096 = vsub.s32 4, %v2095
    %v2097 = vrot.slane %v1085, %v2096
    %v2098 = vlaneseq
    %v2099 = vshrl.u32 %v2098, 7
    %v2100 = vsub.s32 5, %v2099
    %v2101 = vrot.slane %v1085, %v2100
    %v2102 = vlaneseq
    %v2103 = vshrl.u32 %v2102, 7
    %v2104 = vsub.s32 6, %v2103
    %v2105 = vrot.slane %v1085, %v2104
    %v2106 = vlaneseq
    %v2107 = vshrl.u32 %v2106, 7
    %v2108 = vsub.s32 7, %v2107
    %v2109 = vrot.slane %v1085, %v2108
    %v2110 = vcombine.low %v1089, %v1093
    %v2111 = vcombine.low %v1097, %v1101
    %v2112 = vcombine.low %v1105, %v1109
    %v2113 = vcombine.low %v1113, %v1117
    %v2115 = vunpack.c.l.s4 1966171168
    %v2116 = vunpack.c.0.s8 %v2115
    %v2117 = vlaneseq
    %v2118 = vshrl.u32 %v2117, 7
    %v2119 = vsub.s32 %v2116, %v2118
    %v2120 = vrot.slane %v2110, %v2119
    %v2122 = vunpack.c.l.s4 1966171168
    %v2123 = vunpack.c.0.s8 %v2122
    %v2124 = vlaneseq
    %v2125 = vshrl.u32 %v2124, 7
    %v2126 = vsub.s32 %v2123, %v2125
    %v2127 = vrot.slane %v2111, %v2126
    %v2129 = vunpack.c.l.s4 1966171168
    %v2130 = vunpack.c.0.s8 %v2129
    %v2131 = vlaneseq
    %v2132 = vshrl.u32 %v2131, 7
    %v2133 = vsub.s32 %v2130, %v2132
    %v2134 = vrot.slane %v2112, %v2133
    %v2136 = vunpack.c.l.s4 1966171168
    %v2137 = vunpack.c.0.s8 %v2136
    %v2138 = vlaneseq
    %v2139 = vshrl.u32 %v2138, 7
    %v2140 = vsub.s32 %v2137, %v2139
    %v2141 = vrot.slane %v2113, %v2140
    %v2142 = vcombine.low %v2120, %v2127
    %v2143 = vcombine.low %v2134, %v2141
    %v2145 = vunpack.c.l.s4 1966171168
    %v2146 = vunpack.c.0.s8 %v2145
    %v2147 = vlaneseq
    %v2148 = vshrl.u32 %v2147, 7
    %v2149 = vsub.s32 %v2146, %v2148
    %v2150 = vrot.slane %v2142, %v2149
    %v2152 = vunpack.c.l.s4 1966171168
    %v2153 = vunpack.c.0.s8 %v2152
    %v2154 = vlaneseq
    %v2155 = vshrl.u32 %v2154, 7
    %v2156 = vsub.s32 %v2153, %v2155
    %v2157 = vrot.slane %v2143, %v2156
    %v2158 = vcombine.low %v2150, %v2157
    %v2159 = vcombine.low %v1121, %v1125
    %v2160 = vcombine.low %v1129, %v1133
    %v2161 = vcombine.low %v1137, %v1141
    %v2162 = vcombine.low %v1145, %v1149
    %v2164 = vunpack.c.l.s4 1966171168
    %v2165 = vunpack.c.0.s8 %v2164
    %v2166 = vlaneseq
    %v2167 = vshrl.u32 %v2166, 7
    %v2168 = vsub.s32 %v2165, %v2167
    %v2169 = vrot.slane %v2159, %v2168
    %v2171 = vunpack.c.l.s4 1966171168
    %v2172 = vunpack.c.0.s8 %v2171
    %v2173 = vlaneseq
    %v2174 = vshrl.u32 %v2173, 7
    %v2175 = vsub.s32 %v2172, %v2174
    %v2176 = vrot.slane %v2160, %v2175
    %v2178 = vunpack.c.l.s4 1966171168
    %v2179 = vunpack.c.0.s8 %v2178
    %v2180 = vlaneseq
    %v2181 = vshrl.u32 %v2180, 7
    %v2182 = vsub.s32 %v2179, %v2181
    %v2183 = vrot.slane %v2161, %v2182
    %v2185 = vunpack.c.l.s4 1966171168
    %v2186 = vunpack.c.0.s8 %v2185
    %v2187 = vlaneseq
    %v2188 = vshrl.u32 %v2187, 7
    %v2189 = vsub.s32 %v2186, %v2188
    %v2190 = vrot.slane %v2162, %v2189
    %v2191 = vcombine.low %v2169, %v2176
    %v2192 = vcombine.low %v2183, %v2190
    %v2194 = vunpack.c.l.s4 1966171168
    %v2195 = vunpack.c.0.s8 %v2194
    %v2196 = vlaneseq
    %v2197 = vshrl.u32 %v2196, 7
    %v2198 = vsub.s32 %v2195, %v2197
    %v2199 = vrot.slane %v2191, %v2198
    %v2201 = vunpack.c.l.s4 1966171168
    %v2202 = vunpack.c.0.s8 %v2201
    %v2203 = vlaneseq
    %v2204 = vshrl.u32 %v2203, 7
    %v2205 = vsub.s32 %v2202, %v2204
    %v2206 = vrot.slane %v2192, %v2205
    %v2207 = vcombine.low %v2199, %v2206
    %v2208 = vcombine.low %v1153, %v1157
    %v2209 = vcombine.low %v1161, %v1165
    %v2210 = vcombine.low %v1169, %v1173
    %v2211 = vcombine.low %v1177, %v1181
    %v2213 = vunpack.c.l.s4 1966171168
    %v2214 = vunpack.c.0.s8 %v2213
    %v2215 = vlaneseq
    %v2216 = vshrl.u32 %v2215, 7
    %v2217 = vsub.s32 %v2214, %v2216
    %v2218 = vrot.slane %v2208, %v2217
    %v2220 = vunpack.c.l.s4 1966171168
    %v2221 = vunpack.c.0.s8 %v2220
    %v2222 = vlaneseq
    %v2223 = vshrl.u32 %v2222, 7
    %v2224 = vsub.s32 %v2221, %v2223
    %v2225 = vrot.slane %v2209, %v2224
    %v2227 = vunpack.c.l.s4 1966171168
    %v2228 = vunpack.c.0.s8 %v2227
    %v2229 = vlaneseq
    %v2230 = vshrl.u32 %v2229, 7
    %v2231 = vsub.s32 %v2228, %v2230
    %v2232 = vrot.slane %v2210, %v2231
    %v2234 = vunpack.c.l.s4 1966171168
    %v2235 = vunpack.c.0.s8 %v2234
    %v2236 = vlaneseq
    %v2237 = vshrl.u32 %v2236, 7
    %v2238 = vsub.s32 %v2235, %v2237
    %v2239 = vrot.slane %v2211, %v2238
    %v2240 = vcombine.low %v2218, %v2225
    %v2241 = vcombine.low %v2232, %v2239
    %v2243 = vunpack.c.l.s4 1966171168
    %v2244 = vunpack.c.0.s8 %v2243
    %v2245 = vlaneseq
    %v2246 = vshrl.u32 %v2245, 7
    %v2247 = vsub.s32 %v2244, %v2246
    %v2248 = vrot.slane %v2240, %v2247
    %v2250 = vunpack.c.l.s4 1966171168
    %v2251 = vunpack.c.0.s8 %v2250
    %v2252 = vlaneseq
    %v2253 = vshrl.u32 %v2252, 7
    %v2254 = vsub.s32 %v2251, %v2253
    %v2255 = vrot.slane %v2241, %v2254
    %v2256 = vcombine.low %v2248, %v2255
    %v2257 = vcombine.low %v1185, %v1189
    %v2258 = vcombine.low %v1193, %v1197
    %v2259 = vcombine.low %v1201, %v1205
    %v2260 = vcombine.low %v1209, %v1213
    %v2262 = vunpack.c.l.s4 1966171168
    %v2263 = vunpack.c.0.s8 %v2262
    %v2264 = vlaneseq
    %v2265 = vshrl.u32 %v2264, 7
    %v2266 = vsub.s32 %v2263, %v2265
    %v2267 = vrot.slane %v2257, %v2266
    %v2269 = vunpack.c.l.s4 1966171168
    %v2270 = vunpack.c.0.s8 %v2269
    %v2271 = vlaneseq
    %v2272 = vshrl.u32 %v2271, 7
    %v2273 = vsub.s32 %v2270, %v2272
    %v2274 = vrot.slane %v2258, %v2273
    %v2276 = vunpack.c.l.s4 1966171168
    %v2277 = vunpack.c.0.s8 %v2276
    %v2278 = vlaneseq
    %v2279 = vshrl.u32 %v2278, 7
    %v2280 = vsub.s32 %v2277, %v2279
    %v2281 = vrot.slane %v2259, %v2280
    %v2283 = vunpack.c.l.s4 1966171168
    %v2284 = vunpack.c.0.s8 %v2283
    %v2285 = vlaneseq
    %v2286 = vshrl.u32 %v2285, 7
    %v2287 = vsub.s32 %v2284, %v2286
    %v2288 = vrot.slane %v2260, %v2287
    %v2289 = vcombine.low %v2267, %v2274
    %v2290 = vcombine.low %v2281, %v2288
    %v2292 = vunpack.c.l.s4 1966171168
    %v2293 = vunpack.c.0.s8 %v2292
    %v2294 = vlaneseq
    %v2295 = vshrl.u32 %v2294, 7
    %v2296 = vsub.s32 %v2293, %v2295
    %v2297 = vrot.slane %v2289, %v2296
    %v2299 = vunpack.c.l.s4 1966171168
    %v2300 = vunpack.c.0.s8 %v2299
    %v2301 = vlaneseq
    %v2302 = vshrl.u32 %v2301, 7
    %v2303 = vsub.s32 %v2300, %v2302
    %v2304 = vrot.slane %v2290, %v2303
    %v2305 = vcombine.low %v2297, %v2304
    %v2306 = vcombine.low %v1217, %v1221
    %v2307 = vcombine.low %v1225, %v1229
    %v2308 = vcombine.low %v1233, %v1237
    %v2309 = vcombine.low %v1241, %v1245
    %v2311 = vunpack.c.l.s4 1966171168
    %v2312 = vunpack.c.0.s8 %v2311
    %v2313 = vlaneseq
    %v2314 = vshrl.u32 %v2313, 7
    %v2315 = vsub.s32 %v2312, %v2314
    %v2316 = vrot.slane %v2306, %v2315
    %v2318 = vunpack.c.l.s4 1966171168
    %v2319 = vunpack.c.0.s8 %v2318
    %v2320 = vlaneseq
    %v2321 = vshrl.u32 %v2320, 7
    %v2322 = vsub.s32 %v2319, %v2321
    %v2323 = vrot.slane %v2307, %v2322
    %v2325 = vunpack.c.l.s4 1966171168
    %v2326 = vunpack.c.0.s8 %v2325
    %v2327 = vlaneseq
    %v2328 = vshrl.u32 %v2327, 7
    %v2329 = vsub.s32 %v2326, %v2328
    %v2330 = vrot.slane %v2308, %v2329
    %v2332 = vunpack.c.l.s4 1966171168
    %v2333 = vunpack.c.0.s8 %v2332
    %v2334 = vlaneseq
    %v2335 = vshrl.u32 %v2334, 7
    %v2336 = vsub.s32 %v2333, %v2335
    %v2337 = vrot.slane %v2309, %v2336
    %v2338 = vcombine.low %v2316, %v2323
    %v2339 = vcombine.low %v2330, %v2337
    %v2341 = vunpack.c.l.s4 1966171168
    %v2342 = vunpack.c.0.s8 %v2341
    %v2343 = vlaneseq
    %v2344 = vshrl.u32 %v2343, 7
    %v2345 = vsub.s32 %v2342, %v2344
    %v2346 = vrot.slane %v2338, %v2345
    %v2348 = vunpack.c.l.s4 1966171168
    %v2349 = vunpack.c.0.s8 %v2348
    %v2350 = vlaneseq
    %v2351 = vshrl.u32 %v2350, 7
    %v2352 = vsub.s32 %v2349, %v2351
    %v2353 = vrot.slane %v2339, %v2352
    %v2354 = vcombine.low %v2346, %v2353
    %v2355 = vcombine.low %v1249, %v1253
    %v2356 = vcombine.low %v1257, %v1261
    %v2357 = vcombine.low %v1265, %v1269
    %v2358 = vcombine.low %v1273, %v1277
    %v2360 = vunpack.c.l.s4 1966171168
    %v2361 = vunpack.c.0.s8 %v2360
    %v2362 = vlaneseq
    %v2363 = vshrl.u32 %v2362, 7
    %v2364 = vsub.s32 %v2361, %v2363
    %v2365 = vrot.slane %v2355, %v2364
    %v2367 = vunpack.c.l.s4 1966171168
    %v2368 = vunpack.c.0.s8 %v2367
    %v2369 = vlaneseq
    %v2370 = vshrl.u32 %v2369, 7
    %v2371 = vsub.s32 %v2368, %v2370
    %v2372 = vrot.slane %v2356, %v2371
    %v2374 = vunpack.c.l.s4 1966171168
    %v2375 = vunpack.c.0.s8 %v2374
    %v2376 = vlaneseq
    %v2377 = vshrl.u32 %v2376, 7
    %v2378 = vsub.s32 %v2375, %v2377
    %v2379 = vrot.slane %v2357, %v2378
    %v2381 = vunpack.c.l.s4 1966171168
    %v2382 = vunpack.c.0.s8 %v2381
    %v2383 = vlaneseq
    %v2384 = vshrl.u32 %v2383, 7
    %v2385 = vsub.s32 %v2382, %v2384
    %v2386 = vrot.slane %v2358, %v2385
    %v2387 = vcombine.low %v2365, %v2372
    %v2388 = vcombine.low %v2379, %v2386
    %v2390 = vunpack.c.l.s4 1966171168
    %v2391 = vunpack.c.0.s8 %v2390
    %v2392 = vlaneseq
    %v2393 = vshrl.u32 %v2392, 7
    %v2394 = vsub.s32 %v2391, %v2393
    %v2395 = vrot.slane %v2387, %v2394
    %v2397 = vunpack.c.l.s4 1966171168
    %v2398 = vunpack.c.0.s8 %v2397
    %v2399 = vlaneseq
    %v2400 = vshrl.u32 %v2399, 7
    %v2401 = vsub.s32 %v2398, %v2400
    %v2402 = vrot.slane %v2388, %v2401
    %v2403 = vcombine.low %v2395, %v2402
    %v2404 = vcombine.low %v1281, %v1285
    %v2405 = vcombine.low %v1289, %v1293
    %v2406 = vcombine.low %v1297, %v1301
    %v2407 = vcombine.low %v1305, %v1309
    %v2409 = vunpack.c.l.s4 1966171168
    %v2410 = vunpack.c.0.s8 %v2409
    %v2411 = vlaneseq
    %v2412 = vshrl.u32 %v2411, 7
    %v2413 = vsub.s32 %v2410, %v2412
    %v2414 = vrot.slane %v2404, %v2413
    %v2416 = vunpack.c.l.s4 1966171168
    %v2417 = vunpack.c.0.s8 %v2416
    %v2418 = vlaneseq
    %v2419 = vshrl.u32 %v2418, 7
    %v2420 = vsub.s32 %v2417, %v2419
    %v2421 = vrot.slane %v2405, %v2420
    %v2423 = vunpack.c.l.s4 1966171168
    %v2424 = vunpack.c.0.s8 %v2423
    %v2425 = vlaneseq
    %v2426 = vshrl.u32 %v2425, 7
    %v2427 = vsub.s32 %v2424, %v2426
    %v2428 = vrot.slane %v2406, %v2427
    %v2430 = vunpack.c.l.s4 1966171168
    %v2431 = vunpack.c.0.s8 %v2430
    %v2432 = vlaneseq
    %v2433 = vshrl.u32 %v2432, 7
    %v2434 = vsub.s32 %v2431, %v2433
    %v2435 = vrot.slane %v2407, %v2434
    %v2436 = vcombine.low %v2414, %v2421
    %v2437 = vcombine.low %v2428, %v2435
    %v2439 = vunpack.c.l.s4 1966171168
    %v2440 = vunpack.c.0.s8 %v2439
    %v2441 = vlaneseq
    %v2442 = vshrl.u32 %v2441, 7
    %v2443 = vsub.s32 %v2440, %v2442
    %v2444 = vrot.slane %v2436, %v2443
    %v2446 = vunpack.c.l.s4 1966171168
    %v2447 = vunpack.c.0.s8 %v2446
    %v2448 = vlaneseq
    %v2449 = vshrl.u32 %v2448, 7
    %v2450 = vsub.s32 %v2447, %v2449
    %v2451 = vrot.slane %v2437, %v2450
    %v2452 = vcombine.low %v2444, %v2451
    %v2453 = vcombine.low %v1313, %v1317
    %v2454 = vcombine.low %v1321, %v1325
    %v2455 = vcombine.low %v1329, %v1333
    %v2456 = vcombine.low %v1337, %v1341
    %v2458 = vunpack.c.l.s4 1966171168
    %v2459 = vunpack.c.0.s8 %v2458
    %v2460 = vlaneseq
    %v2461 = vshrl.u32 %v2460, 7
    %v2462 = vsub.s32 %v2459, %v2461
    %v2463 = vrot.slane %v2453, %v2462
    %v2465 = vunpack.c.l.s4 1966171168
    %v2466 = vunpack.c.0.s8 %v2465
    %v2467 = vlaneseq
    %v2468 = vshrl.u32 %v2467, 7
    %v2469 = vsub.s32 %v2466, %v2468
    %v2470 = vrot.slane %v2454, %v2469
    %v2472 = vunpack.c.l.s4 1966171168
    %v2473 = vunpack.c.0.s8 %v2472
    %v2474 = vlaneseq
    %v2475 = vshrl.u32 %v2474, 7
    %v2476 = vsub.s32 %v2473, %v2475
    %v2477 = vrot.slane %v2455, %v2476
    %v2479 = vunpack.c.l.s4 1966171168
    %v2480 = vunpack.c.0.s8 %v2479
    %v2481 = vlaneseq
    %v2482 = vshrl.u32 %v2481, 7
    %v2483 = vsub.s32 %v2480, %v2482
    %v2484 = vrot.slane %v2456, %v2483
    %v2485 = vcombine.low %v2463, %v2470
    %v2486 = vcombine.low %v2477, %v2484
    %v2488 = vunpack.c.l.s4 1966171168
    %v2489 = vunpack.c.0.s8 %v2488
    %v2490 = vlaneseq
    %v2491 = vshrl.u32 %v2490, 7
    %v2492 = vsub.s32 %v2489, %v2491
    %v2493 = vrot.slane %v2485, %v2492
    %v2495 = vunpack.c.l.s4 1966171168
    %v2496 = vunpack.c.0.s8 %v2495
    %v2497 = vlaneseq
    %v2498 = vshrl.u32 %v2497, 7
    %v2499 = vsub.s32 %v2496, %v2498
    %v2500 = vrot.slane %v2486, %v2499
    %v2501 = vcombine.low %v2493, %v2500
    %v2502 = vcombine.low %v1345, %v1349
    %v2503 = vcombine.low %v1353, %v1357
    %v2504 = vcombine.low %v1361, %v1365
    %v2505 = vcombine.low %v1369, %v1373
    %v2507 = vunpack.c.l.s4 1966171168
    %v2508 = vunpack.c.0.s8 %v2507
    %v2509 = vlaneseq
    %v2510 = vshrl.u32 %v2509, 7
    %v2511 = vsub.s32 %v2508, %v2510
    %v2512 = vrot.slane %v2502, %v2511
    %v2514 = vunpack.c.l.s4 1966171168
    %v2515 = vunpack.c.0.s8 %v2514
    %v2516 = vlaneseq
    %v2517 = vshrl.u32 %v2516, 7
    %v2518 = vsub.s32 %v2515, %v2517
    %v2519 = vrot.slane %v2503, %v2518
    %v2521 = vunpack.c.l.s4 1966171168
    %v2522 = vunpack.c.0.s8 %v2521
    %v2523 = vlaneseq
    %v2524 = vshrl.u32 %v2523, 7
    %v2525 = vsub.s32 %v2522, %v2524
    %v2526 = vrot.slane %v2504, %v2525
    %v2528 = vunpack.c.l.s4 1966171168
    %v2529 = vunpack.c.0.s8 %v2528
    %v2530 = vlaneseq
    %v2531 = vshrl.u32 %v2530, 7
    %v2532 = vsub.s32 %v2529, %v2531
    %v2533 = vrot.slane %v2505, %v2532
    %v2534 = vcombine.low %v2512, %v2519
    %v2535 = vcombine.low %v2526, %v2533
    %v2537 = vunpack.c.l.s4 1966171168
    %v2538 = vunpack.c.0.s8 %v2537
    %v2539 = vlaneseq
    %v2540 = vshrl.u32 %v2539, 7
    %v2541 = vsub.s32 %v2538, %v2540
    %v2542 = vrot.slane %v2534, %v2541
    %v2544 = vunpack.c.l.s4 1966171168
    %v2545 = vunpack.c.0.s8 %v2544
    %v2546 = vlaneseq
    %v2547 = vshrl.u32 %v2546, 7
    %v2548 = vsub.s32 %v2545, %v2547
    %v2549 = vrot.slane %v2535, %v2548
    %v2550 = vcombine.low %v2542, %v2549
    %v2551 = vcombine.low %v1377, %v1381
    %v2552 = vcombine.low %v1385, %v1389
    %v2553 = vcombine.low %v1393, %v1397
    %v2554 = vcombine.low %v1401, %v1405
    %v2556 = vunpack.c.l.s4 1966171168
    %v2557 = vunpack.c.0.s8 %v2556
    %v2558 = vlaneseq
    %v2559 = vshrl.u32 %v2558, 7
    %v2560 = vsub.s32 %v2557, %v2559
    %v2561 = vrot.slane %v2551, %v2560
    %v2563 = vunpack.c.l.s4 1966171168
    %v2564 = vunpack.c.0.s8 %v2563
    %v2565 = vlaneseq
    %v2566 = vshrl.u32 %v2565, 7
    %v2567 = vsub.s32 %v2564, %v2566
    %v2568 = vrot.slane %v2552, %v2567
    %v2570 = vunpack.c.l.s4 1966171168
    %v2571 = vunpack.c.0.s8 %v2570
    %v2572 = vlaneseq
    %v2573 = vshrl.u32 %v2572, 7
    %v2574 = vsub.s32 %v2571, %v2573
    %v2575 = vrot.slane %v2553, %v2574
    %v2577 = vunpack.c.l.s4 1966171168
    %v2578 = vunpack.c.0.s8 %v2577
    %v2579 = vlaneseq
    %v2580 = vshrl.u32 %v2579, 7
    %v2581 = vsub.s32 %v2578, %v2580
    %v2582 = vrot.slane %v2554, %v2581
    %v2583 = vcombine.low %v2561, %v2568
    %v2584 = vcombine.low %v2575, %v2582
    %v2586 = vunpack.c.l.s4 1966171168
    %v2587 = vunpack.c.0.s8 %v2586
    %v2588 = vlaneseq
    %v2589 = vshrl.u32 %v2588, 7
    %v2590 = vsub.s32 %v2587, %v2589
    %v2591 = vrot.slane %v2583, %v2590
    %v2593 = vunpack.c.l.s4 1966171168
    %v2594 = vunpack.c.0.s8 %v2593
    %v2595 = vlaneseq
    %v2596 = vshrl.u32 %v2595, 7
    %v2597 = vsub.s32 %v2594, %v2596
    %v2598 = vrot.slane %v2584, %v2597
    %v2599 = vcombine.low %v2591, %v2598
    %v2600 = vcombine.low %v1409, %v1413
    %v2601 = vcombine.low %v1417, %v1421
    %v2602 = vcombine.low %v1425, %v1429
    %v2603 = vcombine.low %v1433, %v1437
    %v2605 = vunpack.c.l.s4 1966171168
    %v2606 = vunpack.c.0.s8 %v2605
    %v2607 = vlaneseq
    %v2608 = vshrl.u32 %v2607, 7
    %v2609 = vsub.s32 %v2606, %v2608
    %v2610 = vrot.slane %v2600, %v2609
    %v2612 = vunpack.c.l.s4 1966171168
    %v2613 = vunpack.c.0.s8 %v2612
    %v2614 = vlaneseq
    %v2615 = vshrl.u32 %v2614, 7
    %v2616 = vsub.s32 %v2613, %v2615
    %v2617 = vrot.slane %v2601, %v2616
    %v2619 = vunpack.c.l.s4 1966171168
    %v2620 = vunpack.c.0.s8 %v2619
    %v2621 = vlaneseq
    %v2622 = vshrl.u32 %v2621, 7
    %v2623 = vsub.s32 %v2620, %v2622
    %v2624 = vrot.slane %v2602, %v2623
    %v2626 = vunpack.c.l.s4 1966171168
    %v2627 = vunpack.c.0.s8 %v2626
    %v2628 = vlaneseq
    %v2629 = vshrl.u32 %v2628, 7
    %v2630 = vsub.s32 %v2627, %v2629
    %v2631 = vrot.slane %v2603, %v2630
    %v2632 = vcombine.low %v2610, %v2617
    %v2633 = vcombine.low %v2624, %v2631
    %v2635 = vunpack.c.l.s4 1966171168
    %v2636 = vunpack.c.0.s8 %v2635
    %v2637 = vlaneseq
    %v2638 = vshrl.u32 %v2637, 7
    %v2639 = vsub.s32 %v2636, %v2638
    %v2640 = vrot.slane %v2632, %v2639
    %v2642 = vunpack.c.l.s4 1966171168
    %v2643 = vunpack.c.0.s8 %v2642
    %v2644 = vlaneseq
    %v2645 = vshrl.u32 %v2644, 7
    %v2646 = vsub.s32 %v2643, %v2645
    %v2647 = vrot.slane %v2633, %v2646
    %v2648 = vcombine.low %v2640, %v2647
    %v2649 = vcombine.low %v1441, %v1445
    %v2650 = vcombine.low %v1449, %v1453
    %v2651 = vcombine.low %v1457, %v1461
    %v2652 = vcombine.low %v1465, %v1469
    %v2654 = vunpack.c.l.s4 1966171168
    %v2655 = vunpack.c.0.s8 %v2654
    %v2656 = vlaneseq
    %v2657 = vshrl.u32 %v2656, 7
    %v2658 = vsub.s32 %v2655, %v2657
    %v2659 = vrot.slane %v2649, %v2658
    %v2661 = vunpack.c.l.s4 1966171168
    %v2662 = vunpack.c.0.s8 %v2661
    %v2663 = vlaneseq
    %v2664 = vshrl.u32 %v2663, 7
    %v2665 = vsub.s32 %v2662, %v2664
    %v2666 = vrot.slane %v2650, %v2665
    %v2668 = vunpack.c.l.s4 1966171168
    %v2669 = vunpack.c.0.s8 %v2668
    %v2670 = vlaneseq
    %v2671 = vshrl.u32 %v2670, 7
    %v2672 = vsub.s32 %v2669, %v2671
    %v2673 = vrot.slane %v2651, %v2672
    %v2675 = vunpack.c.l.s4 1966171168
    %v2676 = vunpack.c.0.s8 %v2675
    %v2677 = vlaneseq
    %v2678 = vshrl.u32 %v2677, 7
    %v2679 = vsub.s32 %v2676, %v2678
    %v2680 = vrot.slane %v2652, %v2679
    %v2681 = vcombine.low %v2659, %v2666
    %v2682 = vcombine.low %v2673, %v2680
    %v2684 = vunpack.c.l.s4 1966171168
    %v2685 = vunpack.c.0.s8 %v2684
    %v2686 = vlaneseq
    %v2687 = vshrl.u32 %v2686, 7
    %v2688 = vsub.s32 %v2685, %v2687
    %v2689 = vrot.slane %v2681, %v2688
    %v2691 = vunpack.c.l.s4 1966171168
    %v2692 = vunpack.c.0.s8 %v2691
    %v2693 = vlaneseq
    %v2694 = vshrl.u32 %v2693, 7
    %v2695 = vsub.s32 %v2692, %v2694
    %v2696 = vrot.slane %v2682, %v2695
    %v2697 = vcombine.low %v2689, %v2696
    %v2698 = vcombine.low %v1473, %v1477
    %v2699 = vcombine.low %v1481, %v1485
    %v2700 = vcombine.low %v1489, %v1493
    %v2701 = vcombine.low %v1497, %v1501
    %v2703 = vunpack.c.l.s4 1966171168
    %v2704 = vunpack.c.0.s8 %v2703
    %v2705 = vlaneseq
    %v2706 = vshrl.u32 %v2705, 7
    %v2707 = vsub.s32 %v2704, %v2706
    %v2708 = vrot.slane %v2698, %v2707
    %v2710 = vunpack.c.l.s4 1966171168
    %v2711 = vunpack.c.0.s8 %v2710
    %v2712 = vlaneseq
    %v2713 = vshrl.u32 %v2712, 7
    %v2714 = vsub.s32 %v2711, %v2713
    %v2715 = vrot.slane %v2699, %v2714
    %v2717 = vunpack.c.l.s4 1966171168
    %v2718 = vunpack.c.0.s8 %v2717
    %v2719 = vlaneseq
    %v2720 = vshrl.u32 %v2719, 7
    %v2721 = vsub.s32 %v2718, %v2720
    %v2722 = vrot.slane %v2700, %v2721
    %v2724 = vunpack.c.l.s4 1966171168
    %v2725 = vunpack.c.0.s8 %v2724
    %v2726 = vlaneseq
    %v2727 = vshrl.u32 %v2726, 7
    %v2728 = vsub.s32 %v2725, %v2727
    %v2729 = vrot.slane %v2701, %v2728
    %v2730 = vcombine.low %v2708, %v2715
    %v2731 = vcombine.low %v2722, %v2729
    %v2733 = vunpack.c.l.s4 1966171168
    %v2734 = vunpack.c.0.s8 %v2733
    %v2735 = vlaneseq
    %v2736 = vshrl.u32 %v2735, 7
    %v2737 = vsub.s32 %v2734, %v2736
    %v2738 = vrot.slane %v2730, %v2737
    %v2740 = vunpack.c.l.s4 1966171168
    %v2741 = vunpack.c.0.s8 %v2740
    %v2742 = vlaneseq
    %v2743 = vshrl.u32 %v2742, 7
    %v2744 = vsub.s32 %v2741, %v2743
    %v2745 = vrot.slane %v2731, %v2744
    %v2746 = vcombine.low %v2738, %v2745
    %v2747 = vcombine.low %v1505, %v1509
    %v2748 = vcombine.low %v1513, %v1517
    %v2749 = vcombine.low %v1521, %v1525
    %v2750 = vcombine.low %v1529, %v1533
    %v2752 = vunpack.c.l.s4 1966171168
    %v2753 = vunpack.c.0.s8 %v2752
    %v2754 = vlaneseq
    %v2755 = vshrl.u32 %v2754, 7
    %v2756 = vsub.s32 %v2753, %v2755
    %v2757 = vrot.slane %v2747, %v2756
    %v2759 = vunpack.c.l.s4 1966171168
    %v2760 = vunpack.c.0.s8 %v2759
    %v2761 = vlaneseq
    %v2762 = vshrl.u32 %v2761, 7
    %v2763 = vsub.s32 %v2760, %v2762
    %v2764 = vrot.slane %v2748, %v2763
    %v2766 = vunpack.c.l.s4 1966171168
    %v2767 = vunpack.c.0.s8 %v2766
    %v2768 = vlaneseq
    %v2769 = vshrl.u32 %v2768, 7
    %v2770 = vsub.s32 %v2767, %v2769
    %v2771 = vrot.slane %v2749, %v2770
    %v2773 = vunpack.c.l.s4 1966171168
    %v2774 = vunpack.c.0.s8 %v2773
    %v2775 = vlaneseq
    %v2776 = vshrl.u32 %v2775, 7
    %v2777 = vsub.s32 %v2774, %v2776
    %v2778 = vrot.slane %v2750, %v2777
    %v2779 = vcombine.low %v2757, %v2764
    %v2780 = vcombine.low %v2771, %v2778
    %v2782 = vunpack.c.l.s4 1966171168
    %v2783 = vunpack.c.0.s8 %v2782
    %v2784 = vlaneseq
    %v2785 = vshrl.u32 %v2784, 7
    %v2786 = vsub.s32 %v2783, %v2785
    %v2787 = vrot.slane %v2779, %v2786
    %v2789 = vunpack.c.l.s4 1966171168
    %v2790 = vunpack.c.0.s8 %v2789
    %v2791 = vlaneseq
    %v2792 = vshrl.u32 %v2791, 7
    %v2793 = vsub.s32 %v2790, %v2792
    %v2794 = vrot.slane %v2780, %v2793
    %v2795 = vcombine.low %v2787, %v2794
    %v2796 = vcombine.low %v1537, %v1541
    %v2797 = vcombine.low %v1545, %v1549
    %v2798 = vcombine.low %v1553, %v1557
    %v2799 = vcombine.low %v1561, %v1565
    %v2801 = vunpack.c.l.s4 1966171168
    %v2802 = vunpack.c.0.s8 %v2801
    %v2803 = vlaneseq
    %v2804 = vshrl.u32 %v2803, 7
    %v2805 = vsub.s32 %v2802, %v2804
    %v2806 = vrot.slane %v2796, %v2805
    %v2808 = vunpack.c.l.s4 1966171168
    %v2809 = vunpack.c.0.s8 %v2808
    %v2810 = vlaneseq
    %v2811 = vshrl.u32 %v2810, 7
    %v2812 = vsub.s32 %v2809, %v2811
    %v2813 = vrot.slane %v2797, %v2812
    %v2815 = vunpack.c.l.s4 1966171168
    %v2816 = vunpack.c.0.s8 %v2815
    %v2817 = vlaneseq
    %v2818 = vshrl.u32 %v2817, 7
    %v2819 = vsub.s32 %v2816, %v2818
    %v2820 = vrot.slane %v2798, %v2819
    %v2822 = vunpack.c.l.s4 1966171168
    %v2823 = vunpack.c.0.s8 %v2822
    %v2824 = vlaneseq
    %v2825 = vshrl.u32 %v2824, 7
    %v2826 = vsub.s32 %v2823, %v2825
    %v2827 = vrot.slane %v2799, %v2826
    %v2828 = vcombine.low %v2806, %v2813
    %v2829 = vcombine.low %v2820, %v2827
    %v2831 = vunpack.c.l.s4 1966171168
    %v2832 = vunpack.c.0.s8 %v2831
    %v2833 = vlaneseq
    %v2834 = vshrl.u32 %v2833, 7
    %v2835 = vsub.s32 %v2832, %v2834
    %v2836 = vrot.slane %v2828, %v2835
    %v2838 = vunpack.c.l.s4 1966171168
    %v2839 = vunpack.c.0.s8 %v2838
    %v2840 = vlaneseq
    %v2841 = vshrl.u32 %v2840, 7
    %v2842 = vsub.s32 %v2839, %v2841
    %v2843 = vrot.slane %v2829, %v2842
    %v2844 = vcombine.low %v2836, %v2843
    %v2845 = vcombine.low %v1569, %v1573
    %v2846 = vcombine.low %v1577, %v1581
    %v2847 = vcombine.low %v1585, %v1589
    %v2848 = vcombine.low %v1593, %v1597
    %v2850 = vunpack.c.l.s4 1966171168
    %v2851 = vunpack.c.0.s8 %v2850
    %v2852 = vlaneseq
    %v2853 = vshrl.u32 %v2852, 7
    %v2854 = vsub.s32 %v2851, %v2853
    %v2855 = vrot.slane %v2845, %v2854
    %v2857 = vunpack.c.l.s4 1966171168
    %v2858 = vunpack.c.0.s8 %v2857
    %v2859 = vlaneseq
    %v2860 = vshrl.u32 %v2859, 7
    %v2861 = vsub.s32 %v2858, %v2860
    %v2862 = vrot.slane %v2846, %v2861
    %v2864 = vunpack.c.l.s4 1966171168
    %v2865 = vunpack.c.0.s8 %v2864
    %v2866 = vlaneseq
    %v2867 = vshrl.u32 %v2866, 7
    %v2868 = vsub.s32 %v2865, %v2867
    %v2869 = vrot.slane %v2847, %v2868
    %v2871 = vunpack.c.l.s4 1966171168
    %v2872 = vunpack.c.0.s8 %v2871
    %v2873 = vlaneseq
    %v2874 = vshrl.u32 %v2873, 7
    %v2875 = vsub.s32 %v2872, %v2874
    %v2876 = vrot.slane %v2848, %v2875
    %v2877 = vcombine.low %v2855, %v2862
    %v2878 = vcombine.low %v2869, %v2876
    %v2880 = vunpack.c.l.s4 1966171168
    %v2881 = vunpack.c.0.s8 %v2880
    %v2882 = vlaneseq
    %v2883 = vshrl.u32 %v2882, 7
    %v2884 = vsub.s32 %v2881, %v2883
    %v2885 = vrot.slane %v2877, %v2884
    %v2887 = vunpack.c.l.s4 1966171168
    %v2888 = vunpack.c.0.s8 %v2887
    %v2889 = vlaneseq
    %v2890 = vshrl.u32 %v2889, 7
    %v2891 = vsub.s32 %v2888, %v2890
    %v2892 = vrot.slane %v2878, %v2891
    %v2893 = vcombine.low %v2885, %v2892
    %v2894 = vcombine.low %v1601, %v1605
    %v2895 = vcombine.low %v1609, %v1613
    %v2896 = vcombine.low %v1617, %v1621
    %v2897 = vcombine.low %v1625, %v1629
    %v2899 = vunpack.c.l.s4 1966171168
    %v2900 = vunpack.c.0.s8 %v2899
    %v2901 = vlaneseq
    %v2902 = vshrl.u32 %v2901, 7
    %v2903 = vsub.s32 %v2900, %v2902
    %v2904 = vrot.slane %v2894, %v2903
    %v2906 = vunpack.c.l.s4 1966171168
    %v2907 = vunpack.c.0.s8 %v2906
    %v2908 = vlaneseq
    %v2909 = vshrl.u32 %v2908, 7
    %v2910 = vsub.s32 %v2907, %v2909
    %v2911 = vrot.slane %v2895, %v2910
    %v2913 = vunpack.c.l.s4 1966171168
    %v2914 = vunpack.c.0.s8 %v2913
    %v2915 = vlaneseq
    %v2916 = vshrl.u32 %v2915, 7
    %v2917 = vsub.s32 %v2914, %v2916
    %v2918 = vrot.slane %v2896, %v2917
    %v2920 = vunpack.c.l.s4 1966171168
    %v2921 = vunpack.c.0.s8 %v2920
    %v2922 = vlaneseq
    %v2923 = vshrl.u32 %v2922, 7
    %v2924 = vsub.s32 %v2921, %v2923
    %v2925 = vrot.slane %v2897, %v2924
    %v2926 = vcombine.low %v2904, %v2911
    %v2927 = vcombine.low %v2918, %v2925
    %v2929 = vunpack.c.l.s4 1966171168
    %v2930 = vunpack.c.0.s8 %v2929
    %v2931 = vlaneseq
    %v2932 = vshrl.u32 %v2931, 7
    %v2933 = vsub.s32 %v2930, %v2932
    %v2934 = vrot.slane %v2926, %v2933
    %v2936 = vunpack.c.l.s4 1966171168
    %v2937 = vunpack.c.0.s8 %v2936
    %v2938 = vlaneseq
    %v2939 = vshrl.u32 %v2938, 7
    %v2940 = vsub.s32 %v2937, %v2939
    %v2941 = vrot.slane %v2927, %v2940
    %v2942 = vcombine.low %v2934, %v2941
    %v2943 = vcombine.low %v1633, %v1637
    %v2944 = vcombine.low %v1641, %v1645
    %v2945 = vcombine.low %v1649, %v1653
    %v2946 = vcombine.low %v1657, %v1661
    %v2948 = vunpack.c.l.s4 1966171168
    %v2949 = vunpack.c.0.s8 %v2948
    %v2950 = vlaneseq
    %v2951 = vshrl.u32 %v2950, 7
    %v2952 = vsub.s32 %v2949, %v2951
    %v2953 = vrot.slane %v2943, %v2952
    %v2955 = vunpack.c.l.s4 1966171168
    %v2956 = vunpack.c.0.s8 %v2955
    %v2957 = vlaneseq
    %v2958 = vshrl.u32 %v2957, 7
    %v2959 = vsub.s32 %v2956, %v2958
    %v2960 = vrot.slane %v2944, %v2959
    %v2962 = vunpack.c.l.s4 1966171168
    %v2963 = vunpack.c.0.s8 %v2962
    %v2964 = vlaneseq
    %v2965 = vshrl.u32 %v2964, 7
    %v2966 = vsub.s32 %v2963, %v2965
    %v2967 = vrot.slane %v2945, %v2966
    %v2969 = vunpack.c.l.s4 1966171168
    %v2970 = vunpack.c.0.s8 %v2969
    %v2971 = vlaneseq
    %v2972 = vshrl.u32 %v2971, 7
    %v2973 = vsub.s32 %v2970, %v2972
    %v2974 = vrot.slane %v2946, %v2973
    %v2975 = vcombine.low %v2953, %v2960
    %v2976 = vcombine.low %v2967, %v2974
    %v2978 = vunpack.c.l.s4 1966171168
    %v2979 = vunpack.c.0.s8 %v2978
    %v2980 = vlaneseq
    %v2981 = vshrl.u32 %v2980, 7
    %v2982 = vsub.s32 %v2979, %v2981
    %v2983 = vrot.slane %v2975, %v2982
    %v2985 = vunpack.c.l.s4 1966171168
    %v2986 = vunpack.c.0.s8 %v2985
    %v2987 = vlaneseq
    %v2988 = vshrl.u32 %v2987, 7
    %v2989 = vsub.s32 %v2986, %v2988
    %v2990 = vrot.slane %v2976, %v2989
    %v2991 = vcombine.low %v2983, %v2990
    %v2992 = vcombine.low %v1665, %v1669
    %v2993 = vcombine.low %v1673, %v1677
    %v2994 = vcombine.low %v1681, %v1685
    %v2995 = vcombine.low %v1689, %v1693
    %v2997 = vunpack.c.l.s4 1966171168
    %v2998 = vunpack.c.0.s8 %v2997
    %v2999 = vlaneseq
    %v3000 = vshrl.u32 %v2999, 7
    %v3001 = vsub.s32 %v2998, %v3000
    %v3002 = vrot.slane %v2992, %v3001
    %v3004 = vunpack.c.l.s4 1966171168
    %v3005 = vunpack.c.0.s8 %v3004
    %v3006 = vlaneseq
    %v3007 = vshrl.u32 %v3006, 7
    %v3008 = vsub.s32 %v3005, %v3007
    %v3009 = vrot.slane %v2993, %v3008
    %v3011 = vunpack.c.l.s4 1966171168
    %v3012 = vunpack.c.0.s8 %v3011
    %v3013 = vlaneseq
    %v3014 = vshrl.u32 %v3013, 7
    %v3015 = vsub.s32 %v3012, %v3014
    %v3016 = vrot.slane %v2994, %v3015
    %v3018 = vunpack.c.l.s4 1966171168
    %v3019 = vunpack.c.0.s8 %v3018
    %v3020 = vlaneseq
    %v3021 = vshrl.u32 %v3020, 7
    %v3022 = vsub.s32 %v3019, %v3021
    %v3023 = vrot.slane %v2995, %v3022
    %v3024 = vcombine.low %v3002, %v3009
    %v3025 = vcombine.low %v3016, %v3023
    %v3027 = vunpack.c.l.s4 1966171168
    %v3028 = vunpack.c.0.s8 %v3027
    %v3029 = vlaneseq
    %v3030 = vshrl.u32 %v3029, 7
    %v3031 = vsub.s32 %v3028, %v3030
    %v3032 = vrot.slane %v3024, %v3031
    %v3034 = vunpack.c.l.s4 1966171168
    %v3035 = vunpack.c.0.s8 %v3034
    %v3036 = vlaneseq
    %v3037 = vshrl.u32 %v3036, 7
    %v3038 = vsub.s32 %v3035, %v3037
    %v3039 = vrot.slane %v3025, %v3038
    %v3040 = vcombine.low %v3032, %v3039
    %v3041 = vcombine.low %v1697, %v1701
    %v3042 = vcombine.low %v1705, %v1709
    %v3043 = vcombine.low %v1713, %v1717
    %v3044 = vcombine.low %v1721, %v1725
    %v3046 = vunpack.c.l.s4 1966171168
    %v3047 = vunpack.c.0.s8 %v3046
    %v3048 = vlaneseq
    %v3049 = vshrl.u32 %v3048, 7
    %v3050 = vsub.s32 %v3047, %v3049
    %v3051 = vrot.slane %v3041, %v3050
    %v3053 = vunpack.c.l.s4 1966171168
    %v3054 = vunpack.c.0.s8 %v3053
    %v3055 = vlaneseq
    %v3056 = vshrl.u32 %v3055, 7
    %v3057 = vsub.s32 %v3054, %v3056
    %v3058 = vrot.slane %v3042, %v3057
    %v3060 = vunpack.c.l.s4 1966171168
    %v3061 = vunpack.c.0.s8 %v3060
    %v3062 = vlaneseq
    %v3063 = vshrl.u32 %v3062, 7
    %v3064 = vsub.s32 %v3061, %v3063
    %v3065 = vrot.slane %v3043, %v3064
    %v3067 = vunpack.c.l.s4 1966171168
    %v3068 = vunpack.c.0.s8 %v3067
    %v3069 = vlaneseq
    %v3070 = vshrl.u32 %v3069, 7
    %v3071 = vsub.s32 %v3068, %v3070
    %v3072 = vrot.slane %v3044, %v3071
    %v3073 = vcombine.low %v3051, %v3058
    %v3074 = vcombine.low %v3065, %v3072
    %v3076 = vunpack.c.l.s4 1966171168
    %v3077 = vunpack.c.0.s8 %v3076
    %v3078 = vlaneseq
    %v3079 = vshrl.u32 %v3078, 7
    %v3080 = vsub.s32 %v3077, %v3079
    %v3081 = vrot.slane %v3073, %v3080
    %v3083 = vunpack.c.l.s4 1966171168
    %v3084 = vunpack.c.0.s8 %v3083
    %v3085 = vlaneseq
    %v3086 = vshrl.u32 %v3085, 7
    %v3087 = vsub.s32 %v3084, %v3086
    %v3088 = vrot.slane %v3074, %v3087
    %v3089 = vcombine.low %v3081, %v3088
    %v3090 = vcombine.low %v1729, %v1733
    %v3091 = vcombine.low %v1737, %v1741
    %v3092 = vcombine.low %v1745, %v1749
    %v3093 = vcombine.low %v1753, %v1757
    %v3095 = vunpack.c.l.s4 1966171168
    %v3096 = vunpack.c.0.s8 %v3095
    %v3097 = vlaneseq
    %v3098 = vshrl.u32 %v3097, 7
    %v3099 = vsub.s32 %v3096, %v3098
    %v3100 = vrot.slane %v3090, %v3099
    %v3102 = vunpack.c.l.s4 1966171168
    %v3103 = vunpack.c.0.s8 %v3102
    %v3104 = vlaneseq
    %v3105 = vshrl.u32 %v3104, 7
    %v3106 = vsub.s32 %v3103, %v3105
    %v3107 = vrot.slane %v3091, %v3106
    %v3109 = vunpack.c.l.s4 1966171168
    %v3110 = vunpack.c.0.s8 %v3109
    %v3111 = vlaneseq
    %v3112 = vshrl.u32 %v3111, 7
    %v3113 = vsub.s32 %v3110, %v3112
    %v3114 = vrot.slane %v3092, %v3113
    %v3116 = vunpack.c.l.s4 1966171168
    %v3117 = vunpack.c.0.s8 %v3116
    %v3118 = vlaneseq
    %v3119 = vshrl.u32 %v3118, 7
    %v3120 = vsub.s32 %v3117, %v3119
    %v3121 = vrot.slane %v3093, %v3120
    %v3122 = vcombine.low %v3100, %v3107
    %v3123 = vcombine.low %v3114, %v3121
    %v3125 = vunpack.c.l.s4 1966171168
    %v3126 = vunpack.c.0.s8 %v3125
    %v3127 = vlaneseq
    %v3128 = vshrl.u32 %v3127, 7
    %v3129 = vsub.s32 %v3126, %v3128
    %v3130 = vrot.slane %v3122, %v3129
    %v3132 = vunpack.c.l.s4 1966171168
    %v3133 = vunpack.c.0.s8 %v3132
    %v3134 = vlaneseq
    %v3135 = vshrl.u32 %v3134, 7
    %v3136 = vsub.s32 %v3133, %v3135
    %v3137 = vrot.slane %v3123, %v3136
    %v3138 = vcombine.low %v3130, %v3137
    %v3139 = vcombine.low %v1761, %v1765
    %v3140 = vcombine.low %v1769, %v1773
    %v3141 = vcombine.low %v1777, %v1781
    %v3142 = vcombine.low %v1785, %v1789
    %v3144 = vunpack.c.l.s4 1966171168
    %v3145 = vunpack.c.0.s8 %v3144
    %v3146 = vlaneseq
    %v3147 = vshrl.u32 %v3146, 7
    %v3148 = vsub.s32 %v3145, %v3147
    %v3149 = vrot.slane %v3139, %v3148
    %v3151 = vunpack.c.l.s4 1966171168
    %v3152 = vunpack.c.0.s8 %v3151
    %v3153 = vlaneseq
    %v3154 = vshrl.u32 %v3153, 7
    %v3155 = vsub.s32 %v3152, %v3154
    %v3156 = vrot.slane %v3140, %v3155
    %v3158 = vunpack.c.l.s4 1966171168
    %v3159 = vunpack.c.0.s8 %v3158
    %v3160 = vlaneseq
    %v3161 = vshrl.u32 %v3160, 7
    %v3162 = vsub.s32 %v3159, %v3161
    %v3163 = vrot.slane %v3141, %v3162
    %v3165 = vunpack.c.l.s4 1966171168
    %v3166 = vunpack.c.0.s8 %v3165
    %v3167 = vlaneseq
    %v3168 = vshrl.u32 %v3167, 7
    %v3169 = vsub.s32 %v3166, %v3168
    %v3170 = vrot.slane %v3142, %v3169
    %v3171 = vcombine.low %v3149, %v3156
    %v3172 = vcombine.low %v3163, %v3170
    %v3174 = vunpack.c.l.s4 1966171168
    %v3175 = vunpack.c.0.s8 %v3174
    %v3176 = vlaneseq
    %v3177 = vshrl.u32 %v3176, 7
    %v3178 = vsub.s32 %v3175, %v3177
    %v3179 = vrot.slane %v3171, %v3178
    %v3181 = vunpack.c.l.s4 1966171168
    %v3182 = vunpack.c.0.s8 %v3181
    %v3183 = vlaneseq
    %v3184 = vshrl.u32 %v3183, 7
    %v3185 = vsub.s32 %v3182, %v3184
    %v3186 = vrot.slane %v3172, %v3185
    %v3187 = vcombine.low %v3179, %v3186
    %v3188 = vcombine.low %v1793, %v1797
    %v3189 = vcombine.low %v1801, %v1805
    %v3190 = vcombine.low %v1809, %v1813
    %v3191 = vcombine.low %v1817, %v1821
    %v3193 = vunpack.c.l.s4 1966171168
    %v3194 = vunpack.c.0.s8 %v3193
    %v3195 = vlaneseq
    %v3196 = vshrl.u32 %v3195, 7
    %v3197 = vsub.s32 %v3194, %v3196
    %v3198 = vrot.slane %v3188, %v3197
    %v3200 = vunpack.c.l.s4 1966171168
    %v3201 = vunpack.c.0.s8 %v3200
    %v3202 = vlaneseq
    %v3203 = vshrl.u32 %v3202, 7
    %v3204 = vsub.s32 %v3201, %v3203
    %v3205 = vrot.slane %v3189, %v3204
    %v3207 = vunpack.c.l.s4 1966171168
    %v3208 = vunpack.c.0.s8 %v3207
    %v3209 = vlaneseq
    %v3210 = vshrl.u32 %v3209, 7
    %v3211 = vsub.s32 %v3208, %v3210
    %v3212 = vrot.slane %v3190, %v3211
    %v3214 = vunpack.c.l.s4 1966171168
    %v3215 = vunpack.c.0.s8 %v3214
    %v3216 = vlaneseq
    %v3217 = vshrl.u32 %v3216, 7
    %v3218 = vsub.s32 %v3215, %v3217
    %v3219 = vrot.slane %v3191, %v3218
    %v3220 = vcombine.low %v3198, %v3205
    %v3221 = vcombine.low %v3212, %v3219
    %v3223 = vunpack.c.l.s4 1966171168
    %v3224 = vunpack.c.0.s8 %v3223
    %v3225 = vlaneseq
    %v3226 = vshrl.u32 %v3225, 7
    %v3227 = vsub.s32 %v3224, %v3226
    %v3228 = vrot.slane %v3220, %v3227
    %v3230 = vunpack.c.l.s4 1966171168
    %v3231 = vunpack.c.0.s8 %v3230
    %v3232 = vlaneseq
    %v3233 = vshrl.u32 %v3232, 7
    %v3234 = vsub.s32 %v3231, %v3233
    %v3235 = vrot.slane %v3221, %v3234
    %v3236 = vcombine.low %v3228, %v3235
    %v3237 = vcombine.low %v1825, %v1829
    %v3238 = vcombine.low %v1833, %v1837
    %v3239 = vcombine.low %v1841, %v1845
    %v3240 = vcombine.low %v1849, %v1853
    %v3242 = vunpack.c.l.s4 1966171168
    %v3243 = vunpack.c.0.s8 %v3242
    %v3244 = vlaneseq
    %v3245 = vshrl.u32 %v3244, 7
    %v3246 = vsub.s32 %v3243, %v3245
    %v3247 = vrot.slane %v3237, %v3246
    %v3249 = vunpack.c.l.s4 1966171168
    %v3250 = vunpack.c.0.s8 %v3249
    %v3251 = vlaneseq
    %v3252 = vshrl.u32 %v3251, 7
    %v3253 = vsub.s32 %v3250, %v3252
    %v3254 = vrot.slane %v3238, %v3253
    %v3256 = vunpack.c.l.s4 1966171168
    %v3257 = vunpack.c.0.s8 %v3256
    %v3258 = vlaneseq
    %v3259 = vshrl.u32 %v3258, 7
    %v3260 = vsub.s32 %v3257, %v3259
    %v3261 = vrot.slane %v3239, %v3260
    %v3263 = vunpack.c.l.s4 1966171168
    %v3264 = vunpack.c.0.s8 %v3263
    %v3265 = vlaneseq
    %v3266 = vshrl.u32 %v3265, 7
    %v3267 = vsub.s32 %v3264, %v3266
    %v3268 = vrot.slane %v3240, %v3267
    %v3269 = vcombine.low %v3247, %v3254
    %v3270 = vcombine.low %v3261, %v3268
    %v3272 = vunpack.c.l.s4 1966171168
    %v3273 = vunpack.c.0.s8 %v3272
    %v3274 = vlaneseq
    %v3275 = vshrl.u32 %v3274, 7
    %v3276 = vsub.s32 %v3273, %v3275
    %v3277 = vrot.slane %v3269, %v3276
    %v3279 = vunpack.c.l.s4 1966171168
    %v3280 = vunpack.c.0.s8 %v3279
    %v3281 = vlaneseq
    %v3282 = vshrl.u32 %v3281, 7
    %v3283 = vsub.s32 %v3280, %v3282
    %v3284 = vrot.slane %v3270, %v3283
    %v3285 = vcombine.low %v3277, %v3284
    %v3286 = vcombine.low %v1857, %v1861
    %v3287 = vcombine.low %v1865, %v1869
    %v3288 = vcombine.low %v1873, %v1877
    %v3289 = vcombine.low %v1881, %v1885
    %v3291 = vunpack.c.l.s4 1966171168
    %v3292 = vunpack.c.0.s8 %v3291
    %v3293 = vlaneseq
    %v3294 = vshrl.u32 %v3293, 7
    %v3295 = vsub.s32 %v3292, %v3294
    %v3296 = vrot.slane %v3286, %v3295
    %v3298 = vunpack.c.l.s4 1966171168
    %v3299 = vunpack.c.0.s8 %v3298
    %v3300 = vlaneseq
    %v3301 = vshrl.u32 %v3300, 7
    %v3302 = vsub.s32 %v3299, %v3301
    %v3303 = vrot.slane %v3287, %v3302
    %v3305 = vunpack.c.l.s4 1966171168
    %v3306 = vunpack.c.0.s8 %v3305
    %v3307 = vlaneseq
    %v3308 = vshrl.u32 %v3307, 7
    %v3309 = vsub.s32 %v3306, %v3308
    %v3310 = vrot.slane %v3288, %v3309
    %v3312 = vunpack.c.l.s4 1966171168
    %v3313 = vunpack.c.0.s8 %v3312
    %v3314 = vlaneseq
    %v3315 = vshrl.u32 %v3314, 7
    %v3316 = vsub.s32 %v3313, %v3315
    %v3317 = vrot.slane %v3289, %v3316
    %v3318 = vcombine.low %v3296, %v3303
    %v3319 = vcombine.low %v3310, %v3317
    %v3321 = vunpack.c.l.s4 1966171168
    %v3322 = vunpack.c.0.s8 %v3321
    %v3323 = vlaneseq
    %v3324 = vshrl.u32 %v3323, 7
    %v3325 = vsub.s32 %v3322, %v3324
    %v3326 = vrot.slane %v3318, %v3325
    %v3328 = vunpack.c.l.s4 1966171168
    %v3329 = vunpack.c.0.s8 %v3328
    %v3330 = vlaneseq
    %v3331 = vshrl.u32 %v3330, 7
    %v3332 = vsub.s32 %v3329, %v3331
    %v3333 = vrot.slane %v3319, %v3332
    %v3334 = vcombine.low %v3326, %v3333
    %v3335 = vcombine.low %v1889, %v1893
    %v3336 = vcombine.low %v1897, %v1901
    %v3337 = vcombine.low %v1905, %v1909
    %v3338 = vcombine.low %v1913, %v1917
    %v3340 = vunpack.c.l.s4 1966171168
    %v3341 = vunpack.c.0.s8 %v3340
    %v3342 = vlaneseq
    %v3343 = vshrl.u32 %v3342, 7
    %v3344 = vsub.s32 %v3341, %v3343
    %v3345 = vrot.slane %v3335, %v3344
    %v3347 = vunpack.c.l.s4 1966171168
    %v3348 = vunpack.c.0.s8 %v3347
    %v3349 = vlaneseq
    %v3350 = vshrl.u32 %v3349, 7
    %v3351 = vsub.s32 %v3348, %v3350
    %v3352 = vrot.slane %v3336, %v3351
    %v3354 = vunpack.c.l.s4 1966171168
    %v3355 = vunpack.c.0.s8 %v3354
    %v3356 = vlaneseq
    %v3357 = vshrl.u32 %v3356, 7
    %v3358 = vsub.s32 %v3355, %v3357
    %v3359 = vrot.slane %v3337, %v3358
    %v3361 = vunpack.c.l.s4 1966171168
    %v3362 = vunpack.c.0.s8 %v3361
    %v3363 = vlaneseq
    %v3364 = vshrl.u32 %v3363, 7
    %v3365 = vsub.s32 %v3362, %v3364
    %v3366 = vrot.slane %v3338, %v3365
    %v3367 = vcombine.low %v3345, %v3352
    %v3368 = vcombine.low %v3359, %v3366
    %v3370 = vunpack.c.l.s4 1966171168
    %v3371 = vunpack.c.0.s8 %v3370
    %v3372 = vlaneseq
    %v3373 = vshrl.u32 %v3372, 7
    %v3374 = vsub.s32 %v3371, %v3373
    %v3375 = vrot.slane %v3367, %v3374
    %v3377 = vunpack.c.l.s4 1966171168
    %v3378 = vunpack.c.0.s8 %v3377
    %v3379 = vlaneseq
    %v3380 = vshrl.u32 %v3379, 7
    %v3381 = vsub.s32 %v3378, %v3380
    %v3382 = vrot.slane %v3368, %v3381
    %v3383 = vcombine.low %v3375, %v3382
    %v3384 = vcombine.low %v1921, %v1925
    %v3385 = vcombine.low %v1929, %v1933
    %v3386 = vcombine.low %v1937, %v1941
    %v3387 = vcombine.low %v1945, %v1949
    %v3389 = vunpack.c.l.s4 1966171168
    %v3390 = vunpack.c.0.s8 %v3389
    %v3391 = vlaneseq
    %v3392 = vshrl.u32 %v3391, 7
    %v3393 = vsub.s32 %v3390, %v3392
    %v3394 = vrot.slane %v3384, %v3393
    %v3396 = vunpack.c.l.s4 1966171168
    %v3397 = vunpack.c.0.s8 %v3396
    %v3398 = vlaneseq
    %v3399 = vshrl.u32 %v3398, 7
    %v3400 = vsub.s32 %v3397, %v3399
    %v3401 = vrot.slane %v3385, %v3400
    %v3403 = vunpack.c.l.s4 1966171168
    %v3404 = vunpack.c.0.s8 %v3403
    %v3405 = vlaneseq
    %v3406 = vshrl.u32 %v3405, 7
    %v3407 = vsub.s32 %v3404, %v3406
    %v3408 = vrot.slane %v3386, %v3407
    %v3410 = vunpack.c.l.s4 1966171168
    %v3411 = vunpack.c.0.s8 %v3410
    %v3412 = vlaneseq
    %v3413 = vshrl.u32 %v3412, 7
    %v3414 = vsub.s32 %v3411, %v3413
    %v3415 = vrot.slane %v3387, %v3414
    %v3416 = vcombine.low %v3394, %v3401
    %v3417 = vcombine.low %v3408, %v3415
    %v3419 = vunpack.c.l.s4 1966171168
    %v3420 = vunpack.c.0.s8 %v3419
    %v3421 = vlaneseq
    %v3422 = vshrl.u32 %v3421, 7
    %v3423 = vsub.s32 %v3420, %v3422
    %v3424 = vrot.slane %v3416, %v3423
    %v3426 = vunpack.c.l.s4 1966171168
    %v3427 = vunpack.c.0.s8 %v3426
    %v3428 = vlaneseq
    %v3429 = vshrl.u32 %v3428, 7
    %v3430 = vsub.s32 %v3427, %v3429
    %v3431 = vrot.slane %v3417, %v3430
    %v3432 = vcombine.low %v3424, %v3431
    %v3433 = vcombine.low %v1953, %v1957
    %v3434 = vcombine.low %v1961, %v1965
    %v3435 = vcombine.low %v1969, %v1973
    %v3436 = vcombine.low %v1977, %v1981
    %v3438 = vunpack.c.l.s4 1966171168
    %v3439 = vunpack.c.0.s8 %v3438
    %v3440 = vlaneseq
    %v3441 = vshrl.u32 %v3440, 7
    %v3442 = vsub.s32 %v3439, %v3441
    %v3443 = vrot.slane %v3433, %v3442
    %v3445 = vunpack.c.l.s4 1966171168
    %v3446 = vunpack.c.0.s8 %v3445
    %v3447 = vlaneseq
    %v3448 = vshrl.u32 %v3447, 7
    %v3449 = vsub.s32 %v3446, %v3448
    %v3450 = vrot.slane %v3434, %v3449
    %v3452 = vunpack.c.l.s4 1966171168
    %v3453 = vunpack.c.0.s8 %v3452
    %v3454 = vlaneseq
    %v3455 = vshrl.u32 %v3454, 7
    %v3456 = vsub.s32 %v3453, %v3455
    %v3457 = vrot.slane %v3435, %v3456
    %v3459 = vunpack.c.l.s4 1966171168
    %v3460 = vunpack.c.0.s8 %v3459
    %v3461 = vlaneseq
    %v3462 = vshrl.u32 %v3461, 7
    %v3463 = vsub.s32 %v3460, %v3462
    %v3464 = vrot.slane %v3436, %v3463
    %v3465 = vcombine.low %v3443, %v3450
    %v3466 = vcombine.low %v3457, %v3464
    %v3468 = vunpack.c.l.s4 1966171168
    %v3469 = vunpack.c.0.s8 %v3468
    %v3470 = vlaneseq
    %v3471 = vshrl.u32 %v3470, 7
    %v3472 = vsub.s32 %v3469, %v3471
    %v3473 = vrot.slane %v3465, %v3472
    %v3475 = vunpack.c.l.s4 1966171168
    %v3476 = vunpack.c.0.s8 %v3475
    %v3477 = vlaneseq
    %v3478 = vshrl.u32 %v3477, 7
    %v3479 = vsub.s32 %v3476, %v3478
    %v3480 = vrot.slane %v3466, %v3479
    %v3481 = vcombine.low %v3473, %v3480
    %v3482 = vcombine.low %v1985, %v1989
    %v3483 = vcombine.low %v1993, %v1997
    %v3484 = vcombine.low %v2001, %v2005
    %v3485 = vcombine.low %v2009, %v2013
    %v3487 = vunpack.c.l.s4 1966171168
    %v3488 = vunpack.c.0.s8 %v3487
    %v3489 = vlaneseq
    %v3490 = vshrl.u32 %v3489, 7
    %v3491 = vsub.s32 %v3488, %v3490
    %v3492 = vrot.slane %v3482, %v3491
    %v3494 = vunpack.c.l.s4 1966171168
    %v3495 = vunpack.c.0.s8 %v3494
    %v3496 = vlaneseq
    %v3497 = vshrl.u32 %v3496, 7
    %v3498 = vsub.s32 %v3495, %v3497
    %v3499 = vrot.slane %v3483, %v3498
    %v3501 = vunpack.c.l.s4 1966171168
    %v3502 = vunpack.c.0.s8 %v3501
    %v3503 = vlaneseq
    %v3504 = vshrl.u32 %v3503, 7
    %v3505 = vsub.s32 %v3502, %v3504
    %v3506 = vrot.slane %v3484, %v3505
    %v3508 = vunpack.c.l.s4 1966171168
    %v3509 = vunpack.c.0.s8 %v3508
    %v3510 = vlaneseq
    %v3511 = vshrl.u32 %v3510, 7
    %v3512 = vsub.s32 %v3509, %v3511
    %v3513 = vrot.slane %v3485, %v3512
    %v3514 = vcombine.low %v3492, %v3499
    %v3515 = vcombine.low %v3506, %v3513
    %v3517 = vunpack.c.l.s4 1966171168
    %v3518 = vunpack.c.0.s8 %v3517
    %v3519 = vlaneseq
    %v3520 = vshrl.u32 %v3519, 7
    %v3521 = vsub.s32 %v3518, %v3520
    %v3522 = vrot.slane %v3514, %v3521
    %v3524 = vunpack.c.l.s4 1966171168
    %v3525 = vunpack.c.0.s8 %v3524
    %v3526 = vlaneseq
    %v3527 = vshrl.u32 %v3526, 7
    %v3528 = vsub.s32 %v3525, %v3527
    %v3529 = vrot.slane %v3515, %v3528
    %v3530 = vcombine.low %v3522, %v3529
    %v3531 = vcombine.low %v2017, %v2021
    %v3532 = vcombine.low %v2025, %v2029
    %v3533 = vcombine.low %v2033, %v2037
    %v3534 = vcombine.low %v2041, %v2045
    %v3536 = vunpack.c.l.s4 1966171168
    %v3537 = vunpack.c.0.s8 %v3536
    %v3538 = vlaneseq
    %v3539 = vshrl.u32 %v3538, 7
    %v3540 = vsub.s32 %v3537, %v3539
    %v3541 = vrot.slane %v3531, %v3540
    %v3543 = vunpack.c.l.s4 1966171168
    %v3544 = vunpack.c.0.s8 %v3543
    %v3545 = vlaneseq
    %v3546 = vshrl.u32 %v3545, 7
    %v3547 = vsub.s32 %v3544, %v3546
    %v3548 = vrot.slane %v3532, %v3547
    %v3550 = vunpack.c.l.s4 1966171168
    %v3551 = vunpack.c.0.s8 %v3550
    %v3552 = vlaneseq
    %v3553 = vshrl.u32 %v3552, 7
    %v3554 = vsub.s32 %v3551, %v3553
    %v3555 = vrot.slane %v3533, %v3554
    %v3557 = vunpack.c.l.s4 1966171168
    %v3558 = vunpack.c.0.s8 %v3557
    %v3559 = vlaneseq
    %v3560 = vshrl.u32 %v3559, 7
    %v3561 = vsub.s32 %v3558, %v3560
    %v3562 = vrot.slane %v3534, %v3561
    %v3563 = vcombine.low %v3541, %v3548
    %v3564 = vcombine.low %v3555, %v3562
    %v3566 = vunpack.c.l.s4 1966171168
    %v3567 = vunpack.c.0.s8 %v3566
    %v3568 = vlaneseq
    %v3569 = vshrl.u32 %v3568, 7
    %v3570 = vsub.s32 %v3567, %v3569
    %v3571 = vrot.slane %v3563, %v3570
    %v3573 = vunpack.c.l.s4 1966171168
    %v3574 = vunpack.c.0.s8 %v3573
    %v3575 = vlaneseq
    %v3576 = vshrl.u32 %v3575, 7
    %v3577 = vsub.s32 %v3574, %v3576
    %v3578 = vrot.slane %v3564, %v3577
    %v3579 = vcombine.low %v3571, %v3578
    %v3580 = vcombine.low %v2049, %v2053
    %v3581 = vcombine.low %v2057, %v2061
    %v3582 = vcombine.low %v2065, %v2069
    %v3583 = vcombine.low %v2073, %v2077
    %v3585 = vunpack.c.l.s4 1966171168
    %v3586 = vunpack.c.0.s8 %v3585
    %v3587 = vlaneseq
    %v3588 = vshrl.u32 %v3587, 7
    %v3589 = vsub.s32 %v3586, %v3588
    %v3590 = vrot.slane %v3580, %v3589
    %v3592 = vunpack.c.l.s4 1966171168
    %v3593 = vunpack.c.0.s8 %v3592
    %v3594 = vlaneseq
    %v3595 = vshrl.u32 %v3594, 7
    %v3596 = vsub.s32 %v3593, %v3595
    %v3597 = vrot.slane %v3581, %v3596
    %v3599 = vunpack.c.l.s4 1966171168
    %v3600 = vunpack.c.0.s8 %v3599
    %v3601 = vlaneseq
    %v3602 = vshrl.u32 %v3601, 7
    %v3603 = vsub.s32 %v3600, %v3602
    %v3604 = vrot.slane %v3582, %v3603
    %v3606 = vunpack.c.l.s4 1966171168
    %v3607 = vunpack.c.0.s8 %v3606
    %v3608 = vlaneseq
    %v3609 = vshrl.u32 %v3608, 7
    %v3610 = vsub.s32 %v3607, %v3609
    %v3611 = vrot.slane %v3583, %v3610
    %v3612 = vcombine.low %v3590, %v3597
    %v3613 = vcombine.low %v3604, %v3611
    %v3615 = vunpack.c.l.s4 1966171168
    %v3616 = vunpack.c.0.s8 %v3615
    %v3617 = vlaneseq
    %v3618 = vshrl.u32 %v3617, 7
    %v3619 = vsub.s32 %v3616, %v3618
    %v3620 = vrot.slane %v3612, %v3619
    %v3622 = vunpack.c.l.s4 1966171168
    %v3623 = vunpack.c.0.s8 %v3622
    %v3624 = vlaneseq
    %v3625 = vshrl.u32 %v3624, 7
    %v3626 = vsub.s32 %v3623, %v3625
    %v3627 = vrot.slane %v3613, %v3626
    %v3628 = vcombine.low %v3620, %v3627
    %v3629 = vcombine.low %v2081, %v2085
    %v3630 = vcombine.low %v2089, %v2093
    %v3631 = vcombine.low %v2097, %v2101
    %v3632 = vcombine.low %v2105, %v2109
    %v3634 = vunpack.c.l.s4 1966171168
    %v3635 = vunpack.c.0.s8 %v3634
    %v3636 = vlaneseq
    %v3637 = vshrl.u32 %v3636, 7
    %v3638 = vsub.s32 %v3635, %v3637
    %v3639 = vrot.slane %v3629, %v3638
    %v3641 = vunpack.c.l.s4 1966171168
    %v3642 = vunpack.c.0.s8 %v3641
    %v3643 = vlaneseq
    %v3644 = vshrl.u32 %v3643, 7
    %v3645 = vsub.s32 %v3642, %v3644
    %v3646 = vrot.slane %v3630, %v3645
    %v3648 = vunpack.c.l.s4 1966171168
    %v3649 = vunpack.c.0.s8 %v3648
    %v3650 = vlaneseq
    %v3651 = vshrl.u32 %v3650, 7
    %v3652 = vsub.s32 %v3649, %v3651
    %v3653 = vrot.slane %v3631, %v3652
    %v3655 = vunpack.c.l.s4 1966171168
    %v3656 = vunpack.c.0.s8 %v3655
    %v3657 = vlaneseq
    %v3658 = vshrl.u32 %v3657, 7
    %v3659 = vsub.s32 %v3656, %v3658
    %v3660 = vrot.slane %v3632, %v3659
    %v3661 = vcombine.low %v3639, %v3646
    %v3662 = vcombine.low %v3653, %v3660
    %v3664 = vunpack.c.l.s4 1966171168
    %v3665 = vunpack.c.0.s8 %v3664
    %v3666 = vlaneseq
    %v3667 = vshrl.u32 %v3666, 7
    %v3668 = vsub.s32 %v3665, %v3667
    %v3669 = vrot.slane %v3661, %v3668
    %v3671 = vunpack.c.l.s4 1966171168
    %v3672 = vunpack.c.0.s8 %v3671
    %v3673 = vlaneseq
    %v3674 = vshrl.u32 %v3673, 7
    %v3675 = vsub.s32 %v3672, %v3674
    %v3676 = vrot.slane %v3662, %v3675
    %v3677 = vcombine.low %v3669, %v3676
    %3678 = vset.pattern.permute.xlu0 0
    %3679 = vperm.xlu0 %3678, %v2158
    %v3680 = vpop.permute.xlu0 %3679
    %3681 = vset.pattern.permute.xlu0 0
    %3682 = vperm.xlu0 %3681, %v2207
    %v3683 = vpop.permute.xlu0 %3682
    %3684 = vset.pattern.permute.xlu0 0
    %3685 = vperm.xlu0 %3684, %v2256
    %v3686 = vpop.permute.xlu0 %3685
    %3687 = vset.pattern.permute.xlu0 0
    %3688 = vperm.xlu0 %3687, %v2305
    %v3689 = vpop.permute.xlu0 %3688
    %3690 = vset.pattern.permute.xlu0 0
    %3691 = vperm.xlu0 %3690, %v2354
    %v3692 = vpop.permute.xlu0 %3691
    %3693 = vset.pattern.permute.xlu0 0
    %3694 = vperm.xlu0 %3693, %v2403
    %v3695 = vpop.permute.xlu0 %3694
    %3696 = vset.pattern.permute.xlu0 0
    %3697 = vperm.xlu0 %3696, %v2452
    %v3698 = vpop.permute.xlu0 %3697
    %3699 = vset.pattern.permute.xlu0 0
    %3700 = vperm.xlu0 %3699, %v2501
    %v3701 = vpop.permute.xlu0 %3700
    %3702 = vset.pattern.permute.xlu0 0
    %3703 = vperm.xlu0 %3702, %v2550
    %v3704 = vpop.permute.xlu0 %3703
    %3705 = vset.pattern.permute.xlu0 0
    %3706 = vperm.xlu0 %3705, %v2599
    %v3707 = vpop.permute.xlu0 %3706
    %3708 = vset.pattern.permute.xlu0 0
    %3709 = vperm.xlu0 %3708, %v2648
    %v3710 = vpop.permute.xlu0 %3709
    %3711 = vset.pattern.permute.xlu0 0
    %3712 = vperm.xlu0 %3711, %v2697
    %v3713 = vpop.permute.xlu0 %3712
    %3714 = vset.pattern.permute.xlu0 0
    %3715 = vperm.xlu0 %3714, %v2746
    %v3716 = vpop.permute.xlu0 %3715
    %3717 = vset.pattern.permute.xlu0 0
    %3718 = vperm.xlu0 %3717, %v2795
    %v3719 = vpop.permute.xlu0 %3718
    %3720 = vset.pattern.permute.xlu0 0
    %3721 = vperm.xlu0 %3720, %v2844
    %v3722 = vpop.permute.xlu0 %3721
    %3723 = vset.pattern.permute.xlu0 0
    %3724 = vperm.xlu0 %3723, %v2893
    %v3725 = vpop.permute.xlu0 %3724
    %3726 = vset.pattern.permute.xlu0 0
    %3727 = vperm.xlu0 %3726, %v2942
    %v3728 = vpop.permute.xlu0 %3727
    %3729 = vset.pattern.permute.xlu0 0
    %3730 = vperm.xlu0 %3729, %v2991
    %v3731 = vpop.permute.xlu0 %3730
    %3732 = vset.pattern.permute.xlu0 0
    %3733 = vperm.xlu0 %3732, %v3040
    %v3734 = vpop.permute.xlu0 %3733
    %3735 = vset.pattern.permute.xlu0 0
    %3736 = vperm.xlu0 %3735, %v3089
    %v3737 = vpop.permute.xlu0 %3736
    %3738 = vset.pattern.permute.xlu0 0
    %3739 = vperm.xlu0 %3738, %v3138
    %v3740 = vpop.permute.xlu0 %3739
    %3741 = vset.pattern.permute.xlu0 0
    %3742 = vperm.xlu0 %3741, %v3187
    %v3743 = vpop.permute.xlu0 %3742
    %3744 = vset.pattern.permute.xlu0 0
    %3745 = vperm.xlu0 %3744, %v3236
    %v3746 = vpop.permute.xlu0 %3745
    %3747 = vset.pattern.permute.xlu0 0
    %3748 = vperm.xlu0 %3747, %v3285
    %v3749 = vpop.permute.xlu0 %3748
    %3750 = vset.pattern.permute.xlu0 0
    %3751 = vperm.xlu0 %3750, %v3334
    %v3752 = vpop.permute.xlu0 %3751
    %3753 = vset.pattern.permute.xlu0 0
    %3754 = vperm.xlu0 %3753, %v3383
    %v3755 = vpop.permute.xlu0 %3754
    %3756 = vset.pattern.permute.xlu0 0
    %3757 = vperm.xlu0 %3756, %v3432
    %v3758 = vpop.permute.xlu0 %3757
    %3759 = vset.pattern.permute.xlu0 0
    %3760 = vperm.xlu0 %3759, %v3481
    %v3761 = vpop.permute.xlu0 %3760
    %3762 = vset.pattern.permute.xlu0 0
    %3763 = vperm.xlu0 %3762, %v3530
    %v3764 = vpop.permute.xlu0 %3763
    %3765 = vset.pattern.permute.xlu0 0
    %3766 = vperm.xlu0 %3765, %v3579
    %v3767 = vpop.permute.xlu0 %3766
    %3768 = vset.pattern.permute.xlu0 0
    %3769 = vperm.xlu0 %3768, %v3628
    %v3770 = vpop.permute.xlu0 %3769
    %3771 = vset.pattern.permute.xlu0 0
    %3772 = vperm.xlu0 %3771, %v3677
    %v3773 = vpop.permute.xlu0 %3772
    %v3774 = vlaneseq
    %v3775 = vshrl.u32 %v3774, 7
    %v3776 = vsub.s32 %v573, %v3775
    %v3777 = vrot.slane %v3680, %v3776
    %v3778 = vadd.s32 %v573, 4294967288
    %v3779 = vlaneseq
    %v3780 = vshrl.u32 %v3779, 7
    %v3781 = vsub.s32 %v3778, %v3780
    %v3782 = vrot.slane %v3683, %v3781
    %vm3783 = vcmask 130112
    %v3784 = vsel %vm3783, %v3782, %v3777
    %v3785 = vadd.s32 %v573, 4294967280
    %v3786 = vlaneseq
    %v3787 = vshrl.u32 %v3786, 7
    %v3788 = vsub.s32 %v3785, %v3787
    %v3789 = vrot.slane %v3686, %v3788
    %vm3790 = vcmask 195712
    %v3791 = vsel %vm3790, %v3789, %v3784
    %v3792 = vadd.s32 %v573, 4294967272
    %v3793 = vlaneseq
    %v3794 = vshrl.u32 %v3793, 7
    %v3795 = vsub.s32 %v3792, %v3794
    %v3796 = vrot.slane %v3689, %v3795
    %vm3797 = vcmask 261312
    %v3798 = vsel %vm3797, %v3796, %v3791
    %v3799 = vadd.s32 %v573, 4294967264
    %v3800 = vlaneseq
    %v3801 = vshrl.u32 %v3800, 7
    %v3802 = vsub.s32 %v3799, %v3801
    %v3803 = vrot.slane %v3692, %v3802
    %vm3804 = vcmask 326912
    %v3805 = vsel %vm3804, %v3803, %v3798
    %v3806 = vadd.s32 %v573, 4294967256
    %v3807 = vlaneseq
    %v3808 = vshrl.u32 %v3807, 7
    %v3809 = vsub.s32 %v3806, %v3808
    %v3810 = vrot.slane %v3695, %v3809
    %vm3811 = vcmask 392512
    %v3812 = vsel %vm3811, %v3810, %v3805
    %v3813 = vadd.s32 %v573, 4294967248
    %v3814 = vlaneseq
    %v3815 = vshrl.u32 %v3814, 7
    %v3816 = vsub.s32 %v3813, %v3815
    %v3817 = vrot.slane %v3698, %v3816
    %vm3818 = vcmask 458112
    %v3819 = vsel %vm3818, %v3817, %v3812
    %v3820 = vadd.s32 %v573, 4294967240
    %v3821 = vlaneseq
    %v3822 = vshrl.u32 %v3821, 7
    %v3823 = vsub.s32 %v3820, %v3822
    %v3824 = vrot.slane %v3701, %v3823
    %vm3825 = vcmask 523712
    %v3826 = vsel %vm3825, %v3824, %v3819
    %v3827 = vadd.s32 %v573, 4294967232
    %v3828 = vlaneseq
    %v3829 = vshrl.u32 %v3828, 7
    %v3830 = vsub.s32 %v3827, %v3829
    %v3831 = vrot.slane %v3704, %v3830
    %vm3832 = vcmask 589312
    %v3833 = vsel %vm3832, %v3831, %v3826
    %v3834 = vadd.s32 %v573, 4294967224
    %v3835 = vlaneseq
    %v3836 = vshrl.u32 %v3835, 7
    %v3837 = vsub.s32 %v3834, %v3836
    %v3838 = vrot.slane %v3707, %v3837
    %vm3839 = vcmask 654912
    %v3840 = vsel %vm3839, %v3838, %v3833
    %v3841 = vadd.s32 %v573, 4294967216
    %v3842 = vlaneseq
    %v3843 = vshrl.u32 %v3842, 7
    %v3844 = vsub.s32 %v3841, %v3843
    %v3845 = vrot.slane %v3710, %v3844
    %vm3846 = vcmask 720512
    %v3847 = vsel %vm3846, %v3845, %v3840
    %v3848 = vadd.s32 %v573, 4294967208
    %v3849 = vlaneseq
    %v3850 = vshrl.u32 %v3849, 7
    %v3851 = vsub.s32 %v3848, %v3850
    %v3852 = vrot.slane %v3713, %v3851
    %vm3853 = vcmask 786112
    %v3854 = vsel %vm3853, %v3852, %v3847
    %v3855 = vadd.s32 %v573, 4294967200
    %v3856 = vlaneseq
    %v3857 = vshrl.u32 %v3856, 7
    %v3858 = vsub.s32 %v3855, %v3857
    %v3859 = vrot.slane %v3716, %v3858
    %vm3860 = vcmask 851712
    %v3861 = vsel %vm3860, %v3859, %v3854
    %v3862 = vadd.s32 %v573, 4294967192
    %v3863 = vlaneseq
    %v3864 = vshrl.u32 %v3863, 7
    %v3865 = vsub.s32 %v3862, %v3864
    %v3866 = vrot.slane %v3719, %v3865
    %vm3867 = vcmask 917312
    %v3868 = vsel %vm3867, %v3866, %v3861
    %v3869 = vadd.s32 %v573, 4294967184
    %v3870 = vlaneseq
    %v3871 = vshrl.u32 %v3870, 7
    %v3872 = vsub.s32 %v3869, %v3871
    %v3873 = vrot.slane %v3722, %v3872
    %vm3874 = vcmask 982912
    %v3875 = vsel %vm3874, %v3873, %v3868
    %v3876 = vadd.s32 %v573, 4294967176
    %v3877 = vlaneseq
    %v3878 = vshrl.u32 %v3877, 7
    %v3879 = vsub.s32 %v3876, %v3878
    %v3880 = vrot.slane %v3725, %v3879
    %vm3881 = vcmask 1048512
    %v3882 = vsel %vm3881, %v3880, %v3875
    %v3883 = vlaneseq
    %v3884 = vshrl.u32 %v3883, 7
    %v3885 = vsub.s32 %v573, %v3884
    %v3886 = vrot.slane %v3728, %v3885
    %v3887 = vlaneseq
    %v3888 = vshrl.u32 %v3887, 7
    %v3889 = vsub.s32 %v3778, %v3888
    %v3890 = vrot.slane %v3731, %v3889
    %v3891 = vsel %vm3783, %v3890, %v3886
    %v3892 = vlaneseq
    %v3893 = vshrl.u32 %v3892, 7
    %v3894 = vsub.s32 %v3785, %v3893
    %v3895 = vrot.slane %v3734, %v3894
    %v3896 = vsel %vm3790, %v3895, %v3891
    %v3897 = vlaneseq
    %v3898 = vshrl.u32 %v3897, 7
    %v3899 = vsub.s32 %v3792, %v3898
    %v3900 = vrot.slane %v3737, %v3899
    %v3901 = vsel %vm3797, %v3900, %v3896
    %v3902 = vlaneseq
    %v3903 = vshrl.u32 %v3902, 7
    %v3904 = vsub.s32 %v3799, %v3903
    %v3905 = vrot.slane %v3740, %v3904
    %v3906 = vsel %vm3804, %v3905, %v3901
    %v3907 = vlaneseq
    %v3908 = vshrl.u32 %v3907, 7
    %v3909 = vsub.s32 %v3806, %v3908
    %v3910 = vrot.slane %v3743, %v3909
    %v3911 = vsel %vm3811, %v3910, %v3906
    %v3912 = vlaneseq
    %v3913 = vshrl.u32 %v3912, 7
    %v3914 = vsub.s32 %v3813, %v3913
    %v3915 = vrot.slane %v3746, %v3914
    %v3916 = vsel %vm3818, %v3915, %v3911
    %v3917 = vlaneseq
    %v3918 = vshrl.u32 %v3917, 7
    %v3919 = vsub.s32 %v3820, %v3918
    %v3920 = vrot.slane %v3749, %v3919
    %v3921 = vsel %vm3825, %v3920, %v3916
    %v3922 = vlaneseq
    %v3923 = vshrl.u32 %v3922, 7
    %v3924 = vsub.s32 %v3827, %v3923
    %v3925 = vrot.slane %v3752, %v3924
    %v3926 = vsel %vm3832, %v3925, %v3921
    %v3927 = vlaneseq
    %v3928 = vshrl.u32 %v3927, 7
    %v3929 = vsub.s32 %v3834, %v3928
    %v3930 = vrot.slane %v3755, %v3929
    %v3931 = vsel %vm3839, %v3930, %v3926
    %v3932 = vlaneseq
    %v3933 = vshrl.u32 %v3932, 7
    %v3934 = vsub.s32 %v3841, %v3933
    %v3935 = vrot.slane %v3758, %v3934
    %v3936 = vsel %vm3846, %v3935, %v3931
    %v3937 = vlaneseq
    %v3938 = vshrl.u32 %v3937, 7
    %v3939 = vsub.s32 %v3848, %v3938
    %v3940 = vrot.slane %v3761, %v3939
    %v3941 = vsel %vm3853, %v3940, %v3936
    %v3942 = vlaneseq
    %v3943 = vshrl.u32 %v3942, 7
    %v3944 = vsub.s32 %v3855, %v3943
    %v3945 = vrot.slane %v3764, %v3944
    %v3946 = vsel %vm3860, %v3945, %v3941
    %v3947 = vlaneseq
    %v3948 = vshrl.u32 %v3947, 7
    %v3949 = vsub.s32 %v3862, %v3948
    %v3950 = vrot.slane %v3767, %v3949
    %v3951 = vsel %vm3867, %v3950, %v3946
    %v3952 = vlaneseq
    %v3953 = vshrl.u32 %v3952, 7
    %v3954 = vsub.s32 %v3869, %v3953
    %v3955 = vrot.slane %v3770, %v3954
    %v3956 = vsel %vm3874, %v3955, %v3951
    %v3957 = vlaneseq
    %v3958 = vshrl.u32 %v3957, 7
    %v3959 = vsub.s32 %v3876, %v3958
    %v3960 = vrot.slane %v3773, %v3959
    %v3961 = vsel %vm3881, %v3960, %v3956
    %v3962 = vcombine.low %v3882, %v3961
    %v3964 = vunpack.c.l.s4 1966171168
    %v3965 = vunpack.c.0.s8 %v3964
    %v3966 = vlaneseq
    %v3967 = vshrl.u32 %v3966, 7
    %v3968 = vsub.s32 %v3965, %v3967
    %v3969 = vrot.slane %v3962, %v3968
    %v3971 = vunpack.c.l.s4 1966171168
    %v3972 = vunpack.c.0.s8 %v3971
    %v3973 = vlaneseq
    %v3974 = vshrl.u32 %v3973, 7
    %v3975 = vsub.s32 %v3972, %v3974
    %v3976 = vrot.slane %v3969, %v3975
    %v3977 = vlaneseq
    %vm3978 = vcmp.ge.s32.totalorder %v3977, 0
    %vm3979 = vcmp.lt.s32.totalorder %v3977, 256
    %vm3980 = vmand %vm3978, %vm3979
    %3981 = vst.msk [vmem:[#allocation2] sm:$0x3] %vm3980, %v3976
    %vm3982 = vcmp.eq.s32.totalorder %v573, %v651
    %vm3983 = vcmp.eq.s32.totalorder %v573, %v665
    %vm3984 = vcmp.eq.s32.totalorder %v573, %v679
    %vm3985 = vcmp.eq.s32.totalorder %v573, %v693
    %vm3986 = vcmp.eq.s32.totalorder %v573, %v707
    %vm3987 = vcmp.eq.s32.totalorder %v573, %v721
    %vm3988 = vcmp.eq.s32.totalorder %v573, %v735
    %vm3989 = vcmp.eq.s32.totalorder %v573, %v749
    %vm3990 = vcmp.eq.s32.totalorder %v573, %v763
    %vm3991 = vcmp.eq.s32.totalorder %v573, %v777
    %vm3992 = vcmp.eq.s32.totalorder %v573, %v791
    %vm3993 = vcmp.eq.s32.totalorder %v573, %v805
    %vm3994 = vcmp.eq.s32.totalorder %v573, %v819
    %vm3995 = vcmp.eq.s32.totalorder %v573, %v833
    %vm3996 = vcmp.eq.s32.totalorder %v573, %v847
    %vm3997 = vcmp.eq.s32.totalorder %v573, %v861
    %vm3998 = vcmp.eq.s32.totalorder %v573, %v875
    %vm3999 = vcmp.eq.s32.totalorder %v573, %v889
    %vm4000 = vcmp.eq.s32.totalorder %v573, %v903
    %vm4001 = vcmp.eq.s32.totalorder %v573, %v917
    %vm4002 = vcmp.eq.s32.totalorder %v573, %v931
    %vm4003 = vcmp.eq.s32.totalorder %v573, %v945
    %vm4004 = vcmp.eq.s32.totalorder %v573, %v959
    %vm4005 = vcmp.eq.s32.totalorder %v573, %v973
    %vm4006 = vcmp.eq.s32.totalorder %v573, %v987
    %vm4007 = vcmp.eq.s32.totalorder %v573, %v1001
    %vm4008 = vcmp.eq.s32.totalorder %v573, %v1015
    %vm4009 = vcmp.eq.s32.totalorder %v573, %v1029
    %vm4010 = vcmp.eq.s32.totalorder %v573, %v1043
    %vm4011 = vcmp.eq.s32.totalorder %v573, %v1057
    %vm4012 = vcmp.eq.s32.totalorder %v573, %v1071
    %vm4013 = vcmp.eq.s32.totalorder %v573, %v1085
    %v4014 = vsel %vm3982, 1, 0
    %v4015 = vsel %vm3983, 1, 0
    %v4016 = vsel %vm3984, 1, 0
    %v4017 = vsel %vm3985, 1, 0
    %v4018 = vsel %vm3986, 1, 0
    %v4019 = vsel %vm3987, 1, 0
    %v4020 = vsel %vm3988, 1, 0
    %v4021 = vsel %vm3989, 1, 0
    %v4022 = vsel %vm3990, 1, 0
    %v4023 = vsel %vm3991, 1, 0
    %v4024 = vsel %vm3992, 1, 0
    %v4025 = vsel %vm3993, 1, 0
    %v4026 = vsel %vm3994, 1, 0
    %v4027 = vsel %vm3995, 1, 0
    %v4028 = vsel %vm3996, 1, 0
    %v4029 = vsel %vm3997, 1, 0
    %v4030 = vsel %vm3998, 1, 0
    %v4031 = vsel %vm3999, 1, 0
    %v4032 = vsel %vm4000, 1, 0
    %v4033 = vsel %vm4001, 1, 0
    %v4034 = vsel %vm4002, 1, 0
    %v4035 = vsel %vm4003, 1, 0
    %v4036 = vsel %vm4004, 1, 0
    %v4037 = vsel %vm4005, 1, 0
    %v4038 = vsel %vm4006, 1, 0
    %v4039 = vsel %vm4007, 1, 0
    %v4040 = vsel %vm4008, 1, 0
    %v4041 = vsel %vm4009, 1, 0
    %v4042 = vsel %vm4010, 1, 0
    %v4043 = vsel %vm4011, 1, 0
    %v4044 = vsel %vm4012, 1, 0
    %v4045 = vsel %vm4013, 1, 0
    %v4046 = vcvt.s32.f32 %v4014
    %v4047 = vcvt.s32.f32 %v4015
    %v4048 = vcvt.s32.f32 %v4016
    %v4049 = vcvt.s32.f32 %v4017
    %v4050 = vcvt.s32.f32 %v4018
    %v4051 = vcvt.s32.f32 %v4019
    %v4052 = vcvt.s32.f32 %v4020
    %v4053 = vcvt.s32.f32 %v4021
    %v4054 = vcvt.s32.f32 %v4022
    %v4055 = vcvt.s32.f32 %v4023
    %v4056 = vcvt.s32.f32 %v4024
    %v4057 = vcvt.s32.f32 %v4025
    %v4058 = vcvt.s32.f32 %v4026
    %v4059 = vcvt.s32.f32 %v4027
    %v4060 = vcvt.s32.f32 %v4028
    %v4061 = vcvt.s32.f32 %v4029
    %v4062 = vcvt.s32.f32 %v4030
    %v4063 = vcvt.s32.f32 %v4031
    %v4064 = vcvt.s32.f32 %v4032
    %v4065 = vcvt.s32.f32 %v4033
    %v4066 = vcvt.s32.f32 %v4034
    %v4067 = vcvt.s32.f32 %v4035
    %v4068 = vcvt.s32.f32 %v4036
    %v4069 = vcvt.s32.f32 %v4037
    %v4070 = vcvt.s32.f32 %v4038
    %v4071 = vcvt.s32.f32 %v4039
    %v4072 = vcvt.s32.f32 %v4040
    %v4073 = vcvt.s32.f32 %v4041
    %v4074 = vcvt.s32.f32 %v4042
    %v4075 = vcvt.s32.f32 %v4043
    %v4076 = vcvt.s32.f32 %v4044
    %v4077 = vcvt.s32.f32 %v4045
    %4078 = vmatprep.subr.mxu0 0.0
    %4079 = vmatpush1.msra.mxu0 %v51
    %4080 = vmatprep.subr.mxu0 0.0
    %4081 = vmatpush1.msra.mxu0 %v52
    %4082 = vmatprep.subr.mxu0 0.0
    %4083 = vmatpush1.msra.mxu0 %v53
    %4084 = vmatprep.subr.mxu0 0.0
    %4085 = vmatpush1.msra.mxu0 %v54
    %4086 = vmatprep.subr.mxu0 0.0
    %4087 = vmatpush1.msra.mxu0 %v55
    %4088 = vmatprep.subr.mxu0 0.0
    %4089 = vmatpush1.msra.mxu0 %v56
    %4090 = vmatprep.subr.mxu0 0.0
    %4091 = vmatpush1.msra.mxu0 %v57
    %4092 = vmatprep.subr.mxu0 0.0
    %4093 = vmatpush1.msra.mxu0 %v58
    %4094 = vmatprep.subr.mxu0 0.0
    %4095 = vmatpush1.msra.mxu0 %v59
    %4096 = vmatprep.subr.mxu0 0.0
    %4097 = vmatpush1.msra.mxu0 %v60
    %4098 = vmatprep.subr.mxu0 0.0
    %4099 = vmatpush1.msra.mxu0 %v61
    %4100 = vmatprep.subr.mxu0 0.0
    %4101 = vmatpush1.msra.mxu0 %v62
    %4102 = vmatprep.subr.mxu0 0.0
    %4103 = vmatpush1.msra.mxu0 %v63
    %4104 = vmatprep.subr.mxu0 0.0
    %4105 = vmatpush1.msra.mxu0 %v64
    %4106 = vmatprep.subr.mxu0 0.0
    %4107 = vmatpush1.msra.mxu0 %v65
    %4108 = vmatprep.subr.mxu0 0.0
    %4109 = vmatpush1.msra.mxu0 %v66
    %4110 = vmatprep.subr.mxu0 0.0
    %4111 = vmatpush1.msra.mxu0 0.0
    %4112 = vmatprep.subr.mxu0 0.0
    %4113 = vmatpush1.msra.mxu0 0.0
    %4114 = vmatprep.subr.mxu0 0.0
    %4115 = vmatpush1.msra.mxu0 0.0
    %4116 = vmatprep.subr.mxu0 0.0
    %4117 = vmatpush1.msra.mxu0 0.0
    %4118 = vmatprep.subr.mxu0 0.0
    %4119 = vmatpush1.msra.mxu0 0.0
    %4120 = vmatprep.subr.mxu0 0.0
    %4121 = vmatpush1.msra.mxu0 0.0
    %4122 = vmatprep.subr.mxu0 0.0
    %4123 = vmatpush1.msra.mxu0 0.0
    %4124 = vmatprep.subr.mxu0 0.0
    %4125 = vmatpush1.msra.mxu0 0.0
    %4126 = vmatprep.subr.mxu0 0.0
    %4127 = vmatpush1.msra.mxu0 0.0
    %4128 = vmatprep.subr.mxu0 0.0
    %4129 = vmatpush1.msra.mxu0 0.0
    %4130 = vmatprep.subr.mxu0 0.0
    %4131 = vmatpush1.msra.mxu0 0.0
    %4132 = vmatprep.subr.mxu0 0.0
    %4133 = vmatpush1.msra.mxu0 0.0
    %4134 = vmatprep.subr.mxu0 0.0
    %4135 = vmatpush1.msra.mxu0 0.0
    %4136 = vmatprep.subr.mxu0 0.0
    %4137 = vmatpush1.msra.mxu0 0.0
    %4138 = vmatprep.subr.mxu0 0.0
    %4139 = vmatpush1.msra.mxu0 0.0
    %4140 = vmatprep.subr.mxu0 0.0
    %4141 = vmatpush1.msra.mxu0 0.0
    %4142 = vmatprep.mubr.f32.mxu0 0.0
    %4143 = vmatmul.mubr.f32.gmra.mrb[0].mxu0 %v4046
    %v4144 = vpop.f32.mrb[0].mxu0
    %v4145 = vadd.f32 0.0, %v4144
    %v4146 = vpop.f32.mrb[0].mxu0
    %4147 = vmatprep.mubr.f32.mxu0 0.0
    %4148 = vmatmul.mubr.f32.gmra.mrb[0].mxu0 %v4047
    %v4149 = vpop.f32.mrb[0].mxu0
    %v4150 = vadd.f32 0.0, %v4149
    %v4151 = vpop.f32.mrb[0].mxu0
    %4152 = vmatprep.mubr.f32.mxu0 0.0
    %4153 = vmatmul.mubr.f32.gmra.mrb[0].mxu0 %v4048
    %v4154 = vpop.f32.mrb[0].mxu0
    %v4155 = vadd.f32 0.0, %v4154
    %v4156 = vpop.f32.mrb[0].mxu0
    %4157 = vmatprep.mubr.f32.mxu0 0.0
    %4158 = vmatmul.mubr.f32.gmra.mrb[0].mxu0 %v4049
    %v4159 = vpop.f32.mrb[0].mxu0
    %v4160 = vadd.f32 0.0, %v4159
    %v4161 = vpop.f32.mrb[0].mxu0
    %4162 = vmatprep.mubr.f32.mxu0 0.0
    %4163 = vmatmul.mubr.f32.gmra.mrb[0].mxu0 %v4050
    %v4164 = vpop.f32.mrb[0].mxu0
    %v4165 = vadd.f32 0.0, %v4164
    %v4166 = vpop.f32.mrb[0].mxu0
    %4167 = vmatprep.mubr.f32.mxu0 0.0
    %4168 = vmatmul.mubr.f32.gmra.mrb[0].mxu0 %v4051
    %v4169 = vpop.f32.mrb[0].mxu0
    %v4170 = vadd.f32 0.0, %v4169
    %v4171 = vpop.f32.mrb[0].mxu0
    %4172 = vmatprep.mubr.f32.mxu0 0.0
    %4173 = vmatmul.mubr.f32.gmra.mrb[0].mxu0 %v4052
    %v4174 = vpop.f32.mrb[0].mxu0
    %v4175 = vadd.f32 0.0, %v4174
    %v4176 = vpop.f32.mrb[0].mxu0
    %4177 = vmatprep.mubr.f32.mxu0 0.0
    %4178 = vmatmul.mubr.f32.gmra.mrb[0].mxu0 %v4053
    %v4179 = vpop.f32.mrb[0].mxu0
    %v4180 = vadd.f32 0.0, %v4179
    %v4181 = vpop.f32.mrb[0].mxu0
    %4182 = vmatprep.mubr.f32.mxu0 0.0
    %4183 = vmatmul.mubr.f32.gmra.mrb[0].mxu0 %v4054
    %v4184 = vpop.f32.mrb[0].mxu0
    %v4185 = vadd.f32 0.0, %v4184
    %v4186 = vpop.f32.mrb[0].mxu0
    %4187 = vmatprep.mubr.f32.mxu0 0.0
    %4188 = vmatmul.mubr.f32.gmra.mrb[0].mxu0 %v4055
    %v4189 = vpop.f32.mrb[0].mxu0
    %v4190 = vadd.f32 0.0, %v4189
    %v4191 = vpop.f32.mrb[0].mxu0
    %4192 = vmatprep.mubr.f32.mxu0 0.0
    %4193 = vmatmul.mubr.f32.gmra.mrb[0].mxu0 %v4056
    %v4194 = vpop.f32.mrb[0].mxu0
    %v4195 = vadd.f32 0.0, %v4194
    %v4196 = vpop.f32.mrb[0].mxu0
    %4197 = vmatprep.mubr.f32.mxu0 0.0
    %4198 = vmatmul.mubr.f32.gmra.mrb[0].mxu0 %v4057
    %v4199 = vpop.f32.mrb[0].mxu0
    %v4200 = vadd.f32 0.0, %v4199
    %v4201 = vpop.f32.mrb[0].mxu0
    %4202 = vmatprep.mubr.f32.mxu0 0.0
    %4203 = vmatmul.mubr.f32.gmra.mrb[0].mxu0 %v4058
    %v4204 = vpop.f32.mrb[0].mxu0
    %v4205 = vadd.f32 0.0, %v4204
    %v4206 = vpop.f32.mrb[0].mxu0
    %4207 = vmatprep.mubr.f32.mxu0 0.0
    %4208 = vmatmul.mubr.f32.gmra.mrb[0].mxu0 %v4059
    %v4209 = vpop.f32.mrb[0].mxu0
    %v4210 = vadd.f32 0.0, %v4209
    %v4211 = vpop.f32.mrb[0].mxu0
    %4212 = vmatprep.mubr.f32.mxu0 0.0
    %4213 = vmatmul.mubr.f32.gmra.mrb[0].mxu0 %v4060
    %v4214 = vpop.f32.mrb[0].mxu0
    %v4215 = vadd.f32 0.0, %v4214
    %v4216 = vpop.f32.mrb[0].mxu0
    %4217 = vmatprep.mubr.f32.mxu0 0.0
    %4218 = vmatmul.mubr.f32.gmra.mrb[0].mxu0 %v4061
    %v4219 = vpop.f32.mrb[0].mxu0
    %v4220 = vadd.f32 0.0, %v4219
    %v4221 = vpop.f32.mrb[0].mxu0
    %4222 = vmatprep.mubr.f32.mxu0 0.0
    %4223 = vmatmul.mubr.f32.gmra.mrb[0].mxu0 %v4062
    %v4224 = vpop.f32.mrb[0].mxu0
    %v4225 = vadd.f32 0.0, %v4224
    %v4226 = vpop.f32.mrb[0].mxu0
    %4227 = vmatprep.mubr.f32.mxu0 0.0
    %4228 = vmatmul.mubr.f32.gmra.mrb[0].mxu0 %v4063
    %v4229 = vpop.f32.mrb[0].mxu0
    %v4230 = vadd.f32 0.0, %v4229
    %v4231 = vpop.f32.mrb[0].mxu0
    %4232 = vmatprep.mubr.f32.mxu0 0.0
    %4233 = vmatmul.mubr.f32.gmra.mrb[0].mxu0 %v4064
    %v4234 = vpop.f32.mrb[0].mxu0
    %v4235 = vadd.f32 0.0, %v4234
    %v4236 = vpop.f32.mrb[0].mxu0
    %4237 = vmatprep.mubr.f32.mxu0 0.0
    %4238 = vmatmul.mubr.f32.gmra.mrb[0].mxu0 %v4065
    %v4239 = vpop.f32.mrb[0].mxu0
    %v4240 = vadd.f32 0.0, %v4239
    %v4241 = vpop.f32.mrb[0].mxu0
    %4242 = vmatprep.mubr.f32.mxu0 0.0
    %4243 = vmatmul.mubr.f32.gmra.mrb[0].mxu0 %v4066
    %v4244 = vpop.f32.mrb[0].mxu0
    %v4245 = vadd.f32 0.0, %v4244
    %v4246 = vpop.f32.mrb[0].mxu0
    %4247 = vmatprep.mubr.f32.mxu0 0.0
    %4248 = vmatmul.mubr.f32.gmra.mrb[0].mxu0 %v4067
    %v4249 = vpop.f32.mrb[0].mxu0
    %v4250 = vadd.f32 0.0, %v4249
    %v4251 = vpop.f32.mrb[0].mxu0
    %4252 = vmatprep.mubr.f32.mxu0 0.0
    %4253 = vmatmul.mubr.f32.gmra.mrb[0].mxu0 %v4068
    %v4254 = vpop.f32.mrb[0].mxu0
    %v4255 = vadd.f32 0.0, %v4254
    %v4256 = vpop.f32.mrb[0].mxu0
    %4257 = vmatprep.mubr.f32.mxu0 0.0
    %4258 = vmatmul.mubr.f32.gmra.mrb[0].mxu0 %v4069
    %v4259 = vpop.f32.mrb[0].mxu0
    %v4260 = vadd.f32 0.0, %v4259
    %v4261 = vpop.f32.mrb[0].mxu0
    %4262 = vmatprep.mubr.f32.mxu0 0.0
    %4263 = vmatmul.mubr.f32.gmra.mrb[0].mxu0 %v4070
    %v4264 = vpop.f32.mrb[0].mxu0
    %v4265 = vadd.f32 0.0, %v4264
    %v4266 = vpop.f32.mrb[0].mxu0
    %4267 = vmatprep.mubr.f32.mxu0 0.0
    %4268 = vmatmul.mubr.f32.gmra.mrb[0].mxu0 %v4071
    %v4269 = vpop.f32.mrb[0].mxu0
    %v4270 = vadd.f32 0.0, %v4269
    %v4271 = vpop.f32.mrb[0].mxu0
    %4272 = vmatprep.mubr.f32.mxu0 0.0
    %4273 = vmatmul.mubr.f32.gmra.mrb[0].mxu0 %v4072
    %v4274 = vpop.f32.mrb[0].mxu0
    %v4275 = vadd.f32 0.0, %v4274
    %v4276 = vpop.f32.mrb[0].mxu0
    %4277 = vmatprep.mubr.f32.mxu0 0.0
    %4278 = vmatmul.mubr.f32.gmra.mrb[0].mxu0 %v4073
    %v4279 = vpop.f32.mrb[0].mxu0
    %v4280 = vadd.f32 0.0, %v4279
    %v4281 = vpop.f32.mrb[0].mxu0
    %4282 = vmatprep.mubr.f32.mxu0 0.0
    %4283 = vmatmul.mubr.f32.gmra.mrb[0].mxu0 %v4074
    %v4284 = vpop.f32.mrb[0].mxu0
    %v4285 = vadd.f32 0.0, %v4284
    %v4286 = vpop.f32.mrb[0].mxu0
    %4287 = vmatprep.mubr.f32.mxu0 0.0
    %4288 = vmatmul.mubr.f32.gmra.mrb[0].mxu0 %v4075
    %v4289 = vpop.f32.mrb[0].mxu0
    %v4290 = vadd.f32 0.0, %v4289
    %v4291 = vpop.f32.mrb[0].mxu0
    %4292 = vmatprep.mubr.f32.mxu0 0.0
    %4293 = vmatmul.mubr.f32.gmra.mrb[0].mxu0 %v4076
    %v4294 = vpop.f32.mrb[0].mxu0
    %v4295 = vadd.f32 0.0, %v4294
    %v4296 = vpop.f32.mrb[0].mxu0
    %4297 = vmatprep.mubr.f32.mxu0 0.0
    %4298 = vmatmul.mubr.f32.gmra.mrb[0].mxu0 %v4077
    %v4299 = vpop.f32.mrb[0].mxu0
    %v4300 = vadd.f32 0.0, %v4299
    %v4301 = vpop.f32.mrb[0].mxu0
    %4302 = vdwg.mxu0
    %4303 = vst.msk [vmem:[%s3] sm:$0xff] %vm68, %v4145
    %4304 = vst.msk [vmem:[%s3 + $0x8] sm:$0xff] %vm68, %v4150
    %4305 = vst.msk [vmem:[%s3 + $0x10] sm:$0xff] %vm68, %v4155
    %4306 = vst.msk [vmem:[%s3 + $0x18] sm:$0xff] %vm68, %v4160
    %4307 = vst.msk [vmem:[%s3 + $0x20] sm:$0xff] %vm68, %v4165
    %4308 = vst.msk [vmem:[%s3 + $0x28] sm:$0xff] %vm68, %v4170
    %4309 = vst.msk [vmem:[%s3 + $0x30] sm:$0xff] %vm68, %v4175
    %4310 = vst.msk [vmem:[%s3 + $0x38] sm:$0xff] %vm68, %v4180
    %4311 = vst.msk [vmem:[%s3 + $0x40] sm:$0xff] %vm68, %v4185
    %4312 = vst.msk [vmem:[%s3 + $0x48] sm:$0xff] %vm68, %v4190
    %4313 = vst.msk [vmem:[%s3 + $0x50] sm:$0xff] %vm68, %v4195
    %4314 = vst.msk [vmem:[%s3 + $0x58] sm:$0xff] %vm68, %v4200
    %4315 = vst.msk [vmem:[%s3 + $0x60] sm:$0xff] %vm68, %v4205
    %4316 = vst.msk [vmem:[%s3 + $0x68] sm:$0xff] %vm68, %v4210
    %4317 = vst.msk [vmem:[%s3 + $0x70] sm:$0xff] %vm68, %v4215
    %4318 = vst.msk [vmem:[%s3 + $0x78] sm:$0xff] %vm68, %v4220
    %4319 = vst.msk [vmem:[%s3 + $0x80] sm:$0xff] %vm68, %v4225
    %4320 = vst.msk [vmem:[%s3 + $0x88] sm:$0xff] %vm68, %v4230
    %4321 = vst.msk [vmem:[%s3 + $0x90] sm:$0xff] %vm68, %v4235
    %4322 = vst.msk [vmem:[%s3 + $0x98] sm:$0xff] %vm68, %v4240
    %4323 = vst.msk [vmem:[%s3 + $0xa0] sm:$0xff] %vm68, %v4245
    %4324 = vst.msk [vmem:[%s3 + $0xa8] sm:$0xff] %vm68, %v4250
    %4325 = vst.msk [vmem:[%s3 + $0xb0] sm:$0xff] %vm68, %v4255
    %4326 = vst.msk [vmem:[%s3 + $0xb8] sm:$0xff] %vm68, %v4260
    %4327 = vst.msk [vmem:[%s3 + $0xc0] sm:$0xff] %vm68, %v4265
    %4328 = vst.msk [vmem:[%s3 + $0xc8] sm:$0xff] %vm68, %v4270
    %4329 = vst.msk [vmem:[%s3 + $0xd0] sm:$0xff] %vm68, %v4275
    %4330 = vst.msk [vmem:[%s3 + $0xd8] sm:$0xff] %vm68, %v4280
    %4331 = vst.msk [vmem:[%s3 + $0xe0] sm:$0xff] %vm68, %v4285
    %4332 = vst.msk [vmem:[%s3 + $0xe8] sm:$0xff] %vm68, %v4290
    %4333 = vst.msk [vmem:[%s3 + $0xf0] sm:$0xff] %vm68, %v4295
    %4334 = vst.msk [vmem:[%s3 + $0xf8] sm:$0xff] %vm68, %v4300
    %v4335 = vsub.f32 %v4145, %v19
    %v4336 = vsub.f32 %v4150, %v20
    %v4337 = vsub.f32 %v4155, %v21
    %v4338 = vsub.f32 %v4160, %v22
    %v4339 = vsub.f32 %v4165, %v23
    %v4340 = vsub.f32 %v4170, %v24
    %v4341 = vsub.f32 %v4175, %v25
    %v4342 = vsub.f32 %v4180, %v26
    %v4343 = vsub.f32 %v4185, %v27
    %v4344 = vsub.f32 %v4190, %v28
    %v4345 = vsub.f32 %v4195, %v29
    %v4346 = vsub.f32 %v4200, %v30
    %v4347 = vsub.f32 %v4205, %v31
    %v4348 = vsub.f32 %v4210, %v32
    %v4349 = vsub.f32 %v4215, %v33
    %v4350 = vsub.f32 %v4220, %v34
    %v4351 = vsub.f32 %v4225, %v35
    %v4352 = vsub.f32 %v4230, %v36
    %v4353 = vsub.f32 %v4235, %v37
    %v4354 = vsub.f32 %v4240, %v38
    %v4355 = vsub.f32 %v4245, %v39
    %v4356 = vsub.f32 %v4250, %v40
    %v4357 = vsub.f32 %v4255, %v41
    %v4358 = vsub.f32 %v4260, %v42
    %v4359 = vsub.f32 %v4265, %v43
    %v4360 = vsub.f32 %v4270, %v44
    %v4361 = vsub.f32 %v4275, %v45
    %v4362 = vsub.f32 %v4280, %v46
    %v4363 = vsub.f32 %v4285, %v47
    %v4364 = vsub.f32 %v4290, %v48
    %v4365 = vsub.f32 %v4295, %v49
    %v4366 = vsub.f32 %v4300, %v50
    %v4367 = vmul.f32 %v4335, %v4335
    %v4368 = vmul.f32 %v4336, %v4336
    %v4369 = vmul.f32 %v4337, %v4337
    %v4370 = vmul.f32 %v4338, %v4338
    %v4371 = vmul.f32 %v4339, %v4339
    %v4372 = vmul.f32 %v4340, %v4340
    %v4373 = vmul.f32 %v4341, %v4341
    %v4374 = vmul.f32 %v4342, %v4342
    %v4375 = vmul.f32 %v4343, %v4343
    %v4376 = vmul.f32 %v4344, %v4344
    %v4377 = vmul.f32 %v4345, %v4345
    %v4378 = vmul.f32 %v4346, %v4346
    %v4379 = vmul.f32 %v4347, %v4347
    %v4380 = vmul.f32 %v4348, %v4348
    %v4381 = vmul.f32 %v4349, %v4349
    %v4382 = vmul.f32 %v4350, %v4350
    %v4383 = vmul.f32 %v4351, %v4351
    %v4384 = vmul.f32 %v4352, %v4352
    %v4385 = vmul.f32 %v4353, %v4353
    %v4386 = vmul.f32 %v4354, %v4354
    %v4387 = vmul.f32 %v4355, %v4355
    %v4388 = vmul.f32 %v4356, %v4356
    %v4389 = vmul.f32 %v4357, %v4357
    %v4390 = vmul.f32 %v4358, %v4358
    %v4391 = vmul.f32 %v4359, %v4359
    %v4392 = vmul.f32 %v4360, %v4360
    %v4393 = vmul.f32 %v4361, %v4361
    %v4394 = vmul.f32 %v4362, %v4362
    %v4395 = vmul.f32 %v4363, %v4363
    %v4396 = vmul.f32 %v4364, %v4364
    %v4397 = vmul.f32 %v4365, %v4365
    %v4398 = vmul.f32 %v4366, %v4366
    %v4399 = vsel %vm68, %v4367, 0.0
    %v4400 = vsel %vm68, %v4368, 0.0
    %v4401 = vadd.f32 %v4399, %v4400
    %v4402 = vsel %vm68, %v4369, 0.0
    %v4403 = vadd.f32 %v4401, %v4402
    %v4404 = vsel %vm68, %v4370, 0.0
    %v4405 = vadd.f32 %v4403, %v4404
    %v4406 = vsel %vm68, %v4371, 0.0
    %v4407 = vadd.f32 %v4405, %v4406
    %v4408 = vsel %vm68, %v4372, 0.0
    %v4409 = vadd.f32 %v4407, %v4408
    %v4410 = vsel %vm68, %v4373, 0.0
    %v4411 = vadd.f32 %v4409, %v4410
    %v4412 = vsel %vm68, %v4374, 0.0
    %v4413 = vadd.f32 %v4411, %v4412
    %v4414 = vsel %vm68, %v4375, 0.0
    %v4415 = vadd.f32 %v4413, %v4414
    %v4416 = vsel %vm68, %v4376, 0.0
    %v4417 = vadd.f32 %v4415, %v4416
    %v4418 = vsel %vm68, %v4377, 0.0
    %v4419 = vadd.f32 %v4417, %v4418
    %v4420 = vsel %vm68, %v4378, 0.0
    %v4421 = vadd.f32 %v4419, %v4420
    %v4422 = vsel %vm68, %v4379, 0.0
    %v4423 = vadd.f32 %v4421, %v4422
    %v4424 = vsel %vm68, %v4380, 0.0
    %v4425 = vadd.f32 %v4423, %v4424
    %v4426 = vsel %vm68, %v4381, 0.0
    %v4427 = vadd.f32 %v4425, %v4426
    %v4428 = vsel %vm68, %v4382, 0.0
    %v4429 = vadd.f32 %v4427, %v4428
    %v4430 = vsel %vm68, %v4383, 0.0
    %v4431 = vadd.f32 %v4429, %v4430
    %v4432 = vsel %vm68, %v4384, 0.0
    %v4433 = vadd.f32 %v4431, %v4432
    %v4434 = vsel %vm68, %v4385, 0.0
    %v4435 = vadd.f32 %v4433, %v4434
    %v4436 = vsel %vm68, %v4386, 0.0
    %v4437 = vadd.f32 %v4435, %v4436
    %v4438 = vsel %vm68, %v4387, 0.0
    %v4439 = vadd.f32 %v4437, %v4438
    %v4440 = vsel %vm68, %v4388, 0.0
    %v4441 = vadd.f32 %v4439, %v4440
    %v4442 = vsel %vm68, %v4389, 0.0
    %v4443 = vadd.f32 %v4441, %v4442
    %v4444 = vsel %vm68, %v4390, 0.0
    %v4445 = vadd.f32 %v4443, %v4444
    %v4446 = vsel %vm68, %v4391, 0.0
    %v4447 = vadd.f32 %v4445, %v4446
    %v4448 = vsel %vm68, %v4392, 0.0
    %v4449 = vadd.f32 %v4447, %v4448
    %v4450 = vsel %vm68, %v4393, 0.0
    %v4451 = vadd.f32 %v4449, %v4450
    %v4452 = vsel %vm68, %v4394, 0.0
    %v4453 = vadd.f32 %v4451, %v4452
    %v4454 = vsel %vm68, %v4395, 0.0
    %v4455 = vadd.f32 %v4453, %v4454
    %v4456 = vsel %vm68, %v4396, 0.0
    %v4457 = vadd.f32 %v4455, %v4456
    %v4458 = vsel %vm68, %v4397, 0.0
    %v4459 = vadd.f32 %v4457, %v4458
    %v4460 = vsel %vm68, %v4398, 0.0
    %v4461 = vadd.f32 %v4459, %v4460
    %4462 = vadd.xlane.f32.xlu0 %v4461
    %v4463 = vpop.xlane.xlu0 %4462
    %v4464 = vrot.slane %v4463, 4
    %v4465 = vadd.f32 %v4463, %v4464
    %v4466 = vrot.slane %v4465, 2
    %v4467 = vadd.f32 %v4465, %v4466
    %v4468 = vrot.slane %v4467, 1
    %v4469 = vadd.f32 %v4467, %v4468
    %s4470 = vtos %v4469
    %v4471 = vstv %s4470
    %vm4472 = vcmask 0
    %4473 = vst.msk [vmem:[#allocation4] sm:$0x1] %vm4472, %v4471
    // Predicated region
    $region14: #{tpu_custom_call.1} parent=1 // pred_check
      _
    $region15: #{tpu_custom_call.1} parent=1 // pred_check_branch
      %4475 = sbr.rel (0) target = $region17
    $region16: #{tpu_custom_call.1} parent=1 // pred_region
      _
    $region17: #{tpu_custom_call.1} parent=1 // pred_fallthru
      _
    // Predicated region
    $region18: #{tpu_custom_call.1} parent=1 // pred_check
      _
    $region19: #{tpu_custom_call.1} parent=1 // pred_check_branch
      %4477 = sbr.rel (0) target = $region21
    $region20: #{tpu_custom_call.1} parent=1 // pred_region
      %s4479 = ssub.s32 32, 32
      %4480 = vsyncadd [#allocation3], %s4479
      %s4482 = sshll.u32 [#allocation2], 4
      %s4483 = int_to_ptr.vmem [resolvable:$true] %s4482
      %4485 = dma.vmem_to_hbm [thread:$0]  %s4483, 32, %s4, [#allocation3]
    $region21: #{tpu_custom_call.1} parent=1 // pred_fallthru
      _
    // Predicated region
    $region22: #{tpu_custom_call.1} parent=1 // pred_check
      _
    $region23: #{tpu_custom_call.1} parent=1 // pred_check_branch
      %4487 = sbr.rel (0) target = $region25
    $region24: #{tpu_custom_call.1} parent=1 // pred_region
      %s4489 = ssub.s32 16, 16
      %4490 = vsyncadd [#allocation5], %s4489
      %s4492 = sshll.u32 [#allocation4], 4
      %s4493 = int_to_ptr.vmem [resolvable:$true] %s4492
      %4495 = dma.vmem_to_hbm [thread:$0]  %s4493, 16, %s5, [#allocation5]
    $region25: #{tpu_custom_call.1} parent=1 // pred_fallthru
      _
    // Predicated region
    $region26: #{tpu_custom_call.1} parent=1 // pred_check
      _
    $region27: #{tpu_custom_call.1} parent=1 // pred_check_branch
      %4497 = sbr.rel (0) target = $region29
    $region28: #{tpu_custom_call.1} parent=1 // pred_region
      _
    $region29: #{tpu_custom_call.1} parent=1 // pred_fallthru
      _
    // Predicated region
    $region30: #{tpu_custom_call.1} parent=1 // pred_check
      _
    $region31: #{tpu_custom_call.1} parent=1 // pred_check_branch
      %4499 = sbr.rel (0) target = $region33
    $region32: #{tpu_custom_call.1} parent=1 // pred_region
      %4500 = dma.done [#allocation3], 32
    $region33: #{tpu_custom_call.1} parent=1 // pred_fallthru
      _
    // Predicated region
    $region34: #{tpu_custom_call.1} parent=1 // pred_check
      _
    $region35: #{tpu_custom_call.1} parent=1 // pred_check_branch
      %4502 = sbr.rel (0) target = $region37
    $region36: #{tpu_custom_call.1} parent=1 // pred_region
      %4503 = dma.done [#allocation5], 16
    $region37: #{tpu_custom_call.1} parent=1 // pred_fallthru
      _
    %4504 = vsyncpa [#allocation3], 1
    %4505 = vsyncpa [#allocation5], 1

</llo_original>
